<compile_context>
chip_gen: v7x
topology: tpu7x:2x2x1
jax: 0.10.0
libtpu: 0.0.40
codegen_flags: <defaults>
</compile_context>

<pallas_src>
import math
import functools
import numpy as np
import jax
import jax.numpy as jnp
from jax import lax
from jax.experimental import pallas as pl
from jax.experimental.pallas import tpu as pltpu


def _round_up(x, m):
    return (x + m - 1) // m * m


_VMEM = pl.BlockSpec(memory_space=pltpu.MemorySpace.VMEM)


# ----------------------- fused multi-layer LSTM kernel -----------------------

def fused_lstm_kernel(x_ref, wih_ref, whh_ref, b_ref, out_ref,
                      act_ref, xproj_ref, *, seq_len, batch):
    """All LSTM layers over the whole (padded) sequence, VMEM-resident.

    x_ref:     (T*Bp, INp)     time-major inputs, flattened, zero padded
    wih_ref:   (L, INp, 4*Hp)  W_ih^T per layer, gate-blocked & padded
    whh_ref:   (L, Hp, 4*Hp)   W_hh^T per layer, gate-blocked & padded
    b_ref:     (L, 1, 4*Hp)    b_ih + b_hh per layer (f32, gate-blocked)
    out_ref:   (T*Bp, Hp)      last-layer hidden states (f32)
    act_ref:   VMEM scratch (T*Bp, INp)   layer-to-layer activations
    xproj_ref: VMEM scratch (T*Bp, 4*Hp)  hoisted input projection
    PyTorch gate order i, f, g, o; one gate per Hp-lane block.
    """
    _, INp = x_ref.shape
    Hp = out_ref.shape[-1]
    L = wih_ref.shape[0]
    T, Bp = seq_len, batch
    cdt = wih_ref.dtype            # MXU operand dtype (f32 or bf16)

    if INp > Hp:
        # Lanes >= Hp of act_ref are never written by layer outputs; zero once
        # so the (zero-weighted) padded rows never see uninitialized VMEM.
        act_ref[...] = jnp.zeros_like(act_ref)

    for l in range(L):                       # static unroll over layers
        src_ref = x_ref if l == 0 else act_ref
        last = (l == L - 1)

        # (1) Hoisted input projection: ONE big MXU matmul for the whole
        #     sequence, bias folded in, f32 accumulation.
        xproj_ref[...] = (
            jnp.dot(src_ref[...].astype(cdt), wih_ref[l],
                    preferred_element_type=jnp.float32)
            + b_ref[l])

        w_hh = whh_ref[l]                    # (Hp, 4*Hp), hoisted out of loop

        # (2) Serial recurrence: only h @ W_hh^T + lane-aligned gate math.
        def step(t, carry):
            h, c = carry
            row = pl.multiple_of(t * Bp, Bp)
            gates = xproj_ref[pl.ds(row, Bp), :] + jnp.dot(
                h.astype(cdt), w_hh, preferred_element_type=jnp.float32)
            i = jax.nn.sigmoid(gates[:, 0 * Hp:1 * Hp])
            f = jax.nn.sigmoid(gates[:, 1 * Hp:2 * Hp])
            g = jnp.tanh(gates[:, 2 * Hp:3 * Hp])
            o = jax.nn.sigmoid(gates[:, 3 * Hp:4 * Hp])
            c_new = f * c + i * g
            h_new = o * jnp.tanh(c_new)
            if last:
                out_ref[pl.ds(row, Bp), :] = h_new
            elif INp == Hp:
                act_ref[pl.ds(row, Bp), :] = h_new
            else:
                act_ref[pl.ds(row, Bp), pl.ds(0, Hp)] = h_new
            return (h_new, c_new)

        carry0 = (jnp.zeros((Bp, Hp), jnp.float32),
                  jnp.zeros((Bp, Hp), jnp.float32))
        lax.fori_loop(0, T, step, carry0, unroll=True)


def fused_lstm(x2d, wih, whh, bias, Hp, seq_len, batch):
    TB, INp = x2d.shape
    kernel = functools.partial(fused_lstm_kernel, seq_len=seq_len, batch=batch)
    return pl.pallas_call(
        kernel,
        out_shape=jax.ShapeDtypeStruct((TB, Hp), jnp.float32),
        in_specs=[_VMEM, _VMEM, _VMEM, _VMEM],
        out_specs=_VMEM,
        scratch_shapes=[pltpu.VMEM((TB, INp), jnp.float32),
                        pltpu.VMEM((TB, 4 * Hp), jnp.float32)],
    )(x2d, wih, whh, bias)


# ------------------------------ tiled linear ---------------------------------

def linear_kernel(x_ref, w_ref, b_ref, o_ref):
    o_ref[...] = (jnp.dot(x_ref[...].astype(w_ref.dtype), w_ref[...],
                          preferred_element_type=jnp.float32)
                  + b_ref[...])


def linear_layer(x_pad, w_t_pad, b_pad, *, tm=128, tn=128):
    """x_pad (Np, Hp) @ w_t_pad (Hp, Vp) + b_pad (1, Vp) -> (Np, Vp), tiled."""
    Np, Hp = x_pad.shape
    Vp = w_t_pad.shape[1]
    tm = min(tm, Np)
    tn = min(tn, Vp)
    assert Np % tm == 0 and Vp % tn == 0, (Np, tm, Vp, tn)
    grid = (Np // tm, Vp // tn)
    return pl.pallas_call(
        linear_kernel,
        out_shape=jax.ShapeDtypeStruct((Np, Vp), jnp.float32),
        grid_spec=pltpu.PrefetchScalarGridSpec(
            num_scalar_prefetch=0,
            grid=grid,
            in_specs=[pl.BlockSpec((tm, Hp), lambda i, j: (i, 0)),
                      pl.BlockSpec((Hp, tn), lambda i, j: (0, j)),
                      pl.BlockSpec((1, tn), lambda i, j: (0, j))],
            out_specs=pl.BlockSpec((tm, tn), lambda i, j: (i, j))),
        compiler_params=pltpu.CompilerParams(
            dimension_semantics=("parallel", "parallel")),
    )(x_pad, w_t_pad, b_pad)


# -------------------------- parameter preparation ----------------------------

def prepare_params(params, num_layers, embed_size, hidden_size, vocab_size,
                   compute_dtype=jnp.float32):
    """Pre-transpose / pad / stack weights ONCE (gate-blocked, lane-aligned)."""
    H, E, V, L = hidden_size, embed_size, vocab_size, num_layers
    Hp = _round_up(H, 128)
    INp = max(_round_up(E, 128), Hp)
    Vp = _round_up(V, 128)

    def gate_block_T(w, in_dim, in_pad):
        # w: (4H, in_dim), PyTorch row-gate order (i, f, g, o)
        w4 = w.reshape(4, H, in_dim)                # (gate, h_out, in)
        w4 = jnp.transpose(w4, (2, 0, 1))           # (in, gate, h_out)
        w4 = jnp.pad(w4, ((0, in_pad - in_dim), (0, 0), (0, Hp - H)))
        return w4.reshape(in_pad, 4 * Hp)

    def gate_block_bias(b):
        b4 = jnp.pad(b.reshape(4, H), ((0, 0), (0, Hp - H)))
        return b4.reshape(1, 4 * Hp)

    wih = jnp.stack([gate_block_T(params[f"w_ih_{l}"],
                                  E if l == 0 else H, INp)
                     for l in range(L)]).astype(compute_dtype)
    whh = jnp.stack([gate_block_T(params[f"w_hh_{l}"], H, Hp)
                     for l in range(L)]).astype(compute_dtype)
    bias = jnp.stack([gate_block_bias(params[f"b_ih_{l}"] + params[f"b_hh_{l}"])
                      for l in range(L)]).astype(jnp.float32)

    lin_w_t = jnp.pad(params["linear_w"].T, ((0, Hp - H), (0, Vp - V)))
    lin_b = jnp.pad(params["linear_b"], (0, Vp - V))[None, :]

    return dict(embed=params["embed"], wih=wih, whh=whh, bias=bias,
                lin_w_t=lin_w_t.astype(compute_dtype),
                lin_b=lin_b.astype(jnp.float32),
                E=E, H=H, V=V, Hp=Hp, INp=INp, Vp=Vp, L=L)


# ------------------------------ decoder forward -------------------------------

def packed_indices(lengths):
    """PyTorch pack_padded_sequence (enforce_sorted=True) data ordering."""
    t_idx, b_idx = [], []
    for t in range(max(lengths)):
        for b in range(len(lengths)):
            if lengths[b] > t:
                t_idx.append(t)
                b_idx.append(b)
    return np.asarray(t_idx, np.int32), np.asarray(b_idx, np.int32)


def decoder_rnn_forward(prep, features, captions, lengths):
    """Semantics of DecoderRNN.forward: returns (sum(lengths), vocab_size)."""
    B, T_cap = captions.shape
    E, Hp, INp, V = prep["E"], prep["Hp"], prep["INp"], prep["V"]
    T = T_cap + 1
    Bp = _round_up(max(B, 8), 8)

    # Embedding lookup + feature concat at t=0 (glue), pad batch/lanes.
    emb = jnp.take(prep["embed"], captions, axis=0)                 # (B, T_cap, E)
    x = jnp.concatenate([features[:, None, :], emb], axis=1)        # (B, T, E)
    x = jnp.transpose(x, (1, 0, 2)).astype(jnp.float32)             # (T, B, E)
    x = jnp.pad(x, ((0, 0), (0, Bp - B), (0, INp - E)))             # (T, Bp, INp)
    x2d = x.reshape(T * Bp, INp)

    # Fused multi-layer LSTM (single Pallas kernel, VMEM-resident activations)
    h2d = fused_lstm(x2d, prep["wih"], prep["whh"], prep["bias"],
                     Hp, T, Bp)                                     # (T*Bp, Hp)
    h_seq = h2d.reshape(T, Bp, Hp)

    # Packed-sequence gather (glue), then tiled linear projection.
    t_idx, b_idx = packed_indices(lengths)
    packed_h = h_seq[t_idx, b_idx, :]                               # (N, Hp)
    N = packed_h.shape[0]
    Np = _round_up(max(N, 8), 8)
    if Np > 128:
        Np = _round_up(Np, 128)
    packed_h = jnp.pad(packed_h, ((0, Np - N), (0, 0)))

    logits = linear_layer(packed_h, prep["lin_w_t"], prep["lin_b"])  # (Np, Vp)
    return logits[:N, :V]


# ------------------------------ reference (JAX) -------------------------------

def decoder_rnn_reference(params, features, captions, lengths, num_layers):
    emb = jnp.take(params["embed"], captions, axis=0)
    emb = jnp.concatenate([features[:, None, :], emb], axis=1)
    x = jnp.transpose(emb, (1, 0, 2)).astype(jnp.float32)            # (T+1, B, E)
    B = x.shape[1]
    for l in range(num_layers):
        H = params[f"w_hh_{l}"].shape[1]
        wih_t = params[f"w_ih_{l}"].T
        whh_t = params[f"w_hh_{l}"].T
        bias = params[f"b_ih_{l}"] + params[f"b_hh_{l}"]

        def step(carry, x_t):
            h, c = carry
            gates = x_t @ wih_t + h @ whh_t + bias
            i, f, g, o = jnp.split(gates, 4, axis=-1)
            i, f, o = jax.nn.sigmoid(i), jax.nn.sigmoid(f), jax.nn.sigmoid(o)
            g = jnp.tanh(g)
            c_new = f * c + i * g
            h_new = o * jnp.tanh(c_new)
            return (h_new, c_new), h_new

        init = (jnp.zeros((B, H), jnp.float32), jnp.zeros((B, H), jnp.float32))
        _, x = lax.scan(step, init, x)
    t_idx, b_idx = packed_indices(lengths)
    packed_h = x[t_idx, b_idx, :]
    return packed_h @ params["linear_w"].T + params["linear_b"]


# ---------------------------------- params ------------------------------------

def init_params(key, embed_size, hidden_size, vocab_size, num_layers):
    params = {}
    keys = jax.random.split(key, 3 + 4 * num_layers)
    params["embed"] = jax.random.normal(keys[0], (vocab_size, embed_size), jnp.float32)
    k = 1.0 / math.sqrt(hidden_size)
    ki = 1
    for l in range(num_layers):
        in_size = embed_size if l == 0 else hidden_size
        params[f"w_ih_{l}"] = jax.random.uniform(keys[ki + 0], (4 * hidden_size, in_size),
                                                 jnp.float32, -k, k)
        params[f"w_hh_{l}"] = jax.random.uniform(keys[ki + 1], (4 * hidden_size, hidden_size),
                                                 jnp.float32, -k, k)
        params[f"b_ih_{l}"] = jax.random.uniform(keys[ki + 2], (4 * hidden_size,),
                                                 jnp.float32, -k, k)
        params[f"b_hh_{l}"] = jax.random.uniform(keys[ki + 3], (4 * hidden_size,),
                                                 jnp.float32, -k, k)
        ki += 4
    params["linear_w"] = jax.random.uniform(keys[ki + 0], (vocab_size, hidden_size),
                                            jnp.float32, -k, k)
    params["linear_b"] = jax.random.uniform(keys[ki + 1], (vocab_size,),
                                            jnp.float32, -k, k)
    return params


# ----------------------------------- main --------------------------------------

if __name__ == "__main__":
    embed_size = 32
    hidden_size = 32
    vocab_size = 48
    num_layers = 2
    B, T_cap = 2, 8                  # captions are (B, T); sequence is T+1 after concat
    lengths = [9, 7]                 # descending, each <= T+1 (pack_padded_sequence contract)

    key = jax.random.PRNGKey(0)
    pkey, fkey, ckey = jax.random.split(key, 3)
    params = init_params(pkey, embed_size, hidden_size, vocab_size, num_layers)

    features = jax.random.normal(fkey, (B, embed_size), jnp.float32)
    captions = jax.random.randint(ckey, (B, T_cap), 0, vocab_size, jnp.int32)

    ref = decoder_rnn_reference(params, features, captions, lengths, num_layers)

    # --- f32 MXU operands: strict correctness check --------------------------
    prep32 = prepare_params(params, num_layers, embed_size, hidden_size,
                            vocab_size, compute_dtype=jnp.float32)
    out32 = jax.block_until_ready(
        decoder_rnn_forward(prep32, features, captions, lengths))
    assert out32.shape == (sum(lengths), vocab_size), out32.shape
    np.testing.assert_allclose(np.asarray(out32), np.asarray(ref),
                               atol=2e-4, rtol=2e-4)

    # --- bf16 MXU operands (v6e/v7x fast path), f32 accum + f32 gate math ----
    prep16 = prepare_params(params, num_layers, embed_size, hidden_size,
                            vocab_size, compute_dtype=jnp.bfloat16)
    out16 = jax.block_until_ready(
        decoder_rnn_forward(prep16, features, captions, lengths))
    np.testing.assert_allclose(np.asarray(out16), np.asarray(ref),
                               atol=1e-1, rtol=1e-1)

    # TODO(synk): add a batch-tile grid axis on the fused LSTM (parallel over
    # Bp tiles) to use both v7x TensorCores once batch exceeds one tile.
    print("KERNEL_OK")
</pallas_src>

<mosaic_0001>
module attributes {stable_mosaic.version = 11 : i64} {
  func.func @fused_lstm_kernel(%arg0: memref<72x128xf32, #tpu.memory_space<vmem>>, %arg1: memref<2x128x512xf32, #tpu.memory_space<vmem>>, %arg2: memref<2x128x512xf32, #tpu.memory_space<vmem>>, %arg3: memref<2x1x512xf32, #tpu.memory_space<vmem>>, %arg4: memref<72x128xf32, #tpu.memory_space<vmem>>, %arg5: memref<72x128xf32, #tpu.memory_space<vmem>>, %arg6: memref<72x512xf32, #tpu.memory_space<vmem>>) attributes {dimension_semantics = [], scalar_prefetch = 0 : i64, scratch_operands = 2 : i64, tpu.core_type = #tpu.core_type<tc>} {
    %c0 = arith.constant 0 : index
    %c0_0 = arith.constant 0 : index
    %0 = vector.load %arg0[%c0, %c0_0] : memref<72x128xf32, #tpu.memory_space<vmem>>, vector<72x128xf32>
    %c0_1 = arith.constant 0 : index
    %c0_2 = arith.constant 0 : index
    %c0_3 = arith.constant 0 : index
    %1 = vector.load %arg1[%c0_1, %c0_2, %c0_3] : memref<2x128x512xf32, #tpu.memory_space<vmem>>, vector<1x128x512xf32>
    %2 = vector.shape_cast %1 : vector<1x128x512xf32> to vector<128x512xf32>
    %cst = arith.constant dense<0.000000e+00> : vector<72x512xf32>
    %3 = tpu.matmul %0, %2, %cst {dimension_numbers = #tpu.dot_dimension_numbers<[1], [0], [0], [1], [0, 0, 1, 1], [], []>} : vector<72x128xf32>, vector<128x512xf32>, vector<72x512xf32> -> vector<72x512xf32>
    %c0_4 = arith.constant 0 : index
    %c0_5 = arith.constant 0 : index
    %c0_6 = arith.constant 0 : index
    %4 = vector.load %arg3[%c0_4, %c0_5, %c0_6] : memref<2x1x512xf32, #tpu.memory_space<vmem>>, vector<1x1x512xf32>
    %5 = vector.shape_cast %4 : vector<1x1x512xf32> to vector<1x512xf32>
    %6 = vector.broadcast %5 : vector<1x512xf32> to vector<72x512xf32>
    %7 = arith.addf %3, %6 : vector<72x512xf32>
    %c0_7 = arith.constant 0 : index
    %c0_8 = arith.constant 0 : index
    %8 = vector.load %arg6[%c0_7, %c0_8] : memref<72x512xf32, #tpu.memory_space<vmem>>, vector<72x512xf32>
    tpu.vector_store %arg6[%c0_7, %c0_8], %7 {strides = array<i32>} : memref<72x512xf32, #tpu.memory_space<vmem>>, vector<72x512xf32>,
    %c0_9 = arith.constant 0 : index
    %c0_10 = arith.constant 0 : index
    %c0_11 = arith.constant 0 : index
    %9 = vector.load %arg2[%c0_9, %c0_10, %c0_11] : memref<2x128x512xf32, #tpu.memory_space<vmem>>, vector<1x128x512xf32>
    %10 = vector.shape_cast %9 : vector<1x128x512xf32> to vector<128x512xf32>
    %cst_12 = arith.constant 0.000000e+00 : f32
    %11 = vector.broadcast %cst_12 : f32 to vector<8x128xf32>
    %cst_13 = arith.constant 0.000000e+00 : f32
    %12 = vector.broadcast %cst_13 : f32 to vector<8x128xf32>
    %c0_i32 = arith.constant 0 : i32
    %c8_i32 = arith.constant 8 : i32
    %13 = arith.muli %c0_i32, %c8_i32 : i32
    %14 = tpu.assume_multiple %13, 8 : i32
    %15 = arith.index_cast %14 : i32 to index
    %c0_14 = arith.constant 0 : index
    %16 = vector.load %arg6[%15, %c0_14] : memref<72x512xf32, #tpu.memory_space<vmem>>, vector<8x512xf32>
    %cst_15 = arith.constant dense<0.000000e+00> : vector<8x512xf32>
    %17 = tpu.matmul %11, %10, %cst_15 {dimension_numbers = #tpu.dot_dimension_numbers<[1], [0], [0], [1], [0, 0, 1, 1], [], []>} : vector<8x128xf32>, vector<128x512xf32>, vector<8x512xf32> -> vector<8x512xf32>
    %18 = arith.addf %16, %17 : vector<8x512xf32>
    %19 = vector.extract_strided_slice %18 {offsets = [0, 0], sizes = [8, 128], strides = [1, 1]} : vector<8x512xf32> to vector<8x128xf32>
    %20 = arith.negf %19 : vector<8x128xf32>
    %21 = math.exp %20 : vector<8x128xf32>
    %cst_16 = arith.constant 1.000000e+00 : f32
    %22 = vector.broadcast %cst_16 : f32 to vector<8x128xf32>
    %23 = arith.addf %22, %21 : vector<8x128xf32>
    %24 = arith.divf %22, %23 : vector<8x128xf32>
    %25 = vector.extract_strided_slice %18 {offsets = [0, 128], sizes = [8, 128], strides = [1, 1]} : vector<8x512xf32> to vector<8x128xf32>
    %26 = arith.negf %25 : vector<8x128xf32>
    %27 = math.exp %26 : vector<8x128xf32>
    %cst_17 = arith.constant 1.000000e+00 : f32
    %28 = vector.broadcast %cst_17 : f32 to vector<8x128xf32>
    %29 = arith.addf %28, %27 : vector<8x128xf32>
    %30 = arith.divf %28, %29 : vector<8x128xf32>
    %31 = vector.extract_strided_slice %18 {offsets = [0, 256], sizes = [8, 128], strides = [1, 1]} : vector<8x512xf32> to vector<8x128xf32>
    %32 = math.tanh %31 : vector<8x128xf32>
    %33 = vector.extract_strided_slice %18 {offsets = [0, 384], sizes = [8, 128], strides = [1, 1]} : vector<8x512xf32> to vector<8x128xf32>
    %34 = arith.negf %33 : vector<8x128xf32>
    %35 = math.exp %34 : vector<8x128xf32>
    %cst_18 = arith.constant 1.000000e+00 : f32
    %36 = vector.broadcast %cst_18 : f32 to vector<8x128xf32>
    %37 = arith.addf %36, %35 : vector<8x128xf32>
    %38 = arith.divf %36, %37 : vector<8x128xf32>
    %39 = arith.mulf %30, %12 : vector<8x128xf32>
    %40 = arith.mulf %24, %32 : vector<8x128xf32>
    %41 = arith.addf %39, %40 : vector<8x128xf32>
    %42 = math.tanh %41 : vector<8x128xf32>
    %43 = arith.mulf %38, %42 : vector<8x128xf32>
    %44 = arith.index_cast %14 : i32 to index
    %c0_19 = arith.constant 0 : index
    %45 = vector.load %arg5[%44, %c0_19] : memref<72x128xf32, #tpu.memory_space<vmem>>, vector<8x128xf32>
    tpu.vector_store %arg5[%44, %c0_19], %43 {strides = array<i32>} : memref<72x128xf32, #tpu.memory_space<vmem>>, vector<8x128xf32>,
    %c1_i32 = arith.constant 1 : i32
    %c8_i32_20 = arith.constant 8 : i32
    %46 = arith.muli %c1_i32, %c8_i32_20 : i32
    %47 = tpu.assume_multiple %46, 8 : i32
    %48 = arith.index_cast %47 : i32 to index
    %c0_21 = arith.constant 0 : index
    %49 = vector.load %arg6[%48, %c0_21] : memref<72x512xf32, #tpu.memory_space<vmem>>, vector<8x512xf32>
    %cst_22 = arith.constant dense<0.000000e+00> : vector<8x512xf32>
    %50 = tpu.matmul %43, %10, %cst_22 {dimension_numbers = #tpu.dot_dimension_numbers<[1], [0], [0], [1], [0, 0, 1, 1], [], []>} : vector<8x128xf32>, vector<128x512xf32>, vector<8x512xf32> -> vector<8x512xf32>
    %51 = arith.addf %49, %50 : vector<8x512xf32>
    %52 = vector.extract_strided_slice %51 {offsets = [0, 0], sizes = [8, 128], strides = [1, 1]} : vector<8x512xf32> to vector<8x128xf32>
    %53 = arith.negf %52 : vector<8x128xf32>
    %54 = math.exp %53 : vector<8x128xf32>
    %cst_23 = arith.constant 1.000000e+00 : f32
    %55 = vector.broadcast %cst_23 : f32 to vector<8x128xf32>
    %56 = arith.addf %55, %54 : vector<8x128xf32>
    %57 = arith.divf %55, %56 : vector<8x128xf32>
    %58 = vector.extract_strided_slice %51 {offsets = [0, 128], sizes = [8, 128], strides = [1, 1]} : vector<8x512xf32> to vector<8x128xf32>
    %59 = arith.negf %58 : vector<8x128xf32>
    %60 = math.exp %59 : vector<8x128xf32>
    %cst_24 = arith.constant 1.000000e+00 : f32
    %61 = vector.broadcast %cst_24 : f32 to vector<8x128xf32>
    %62 = arith.addf %61, %60 : vector<8x128xf32>
    %63 = arith.divf %61, %62 : vector<8x128xf32>
    %64 = vector.extract_strided_slice %51 {offsets = [0, 256], sizes = [8, 128], strides = [1, 1]} : vector<8x512xf32> to vector<8x128xf32>
    %65 = math.tanh %64 : vector<8x128xf32>
    %66 = vector.extract_strided_slice %51 {offsets = [0, 384], sizes = [8, 128], strides = [1, 1]} : vector<8x512xf32> to vector<8x128xf32>
    %67 = arith.negf %66 : vector<8x128xf32>
    %68 = math.exp %67 : vector<8x128xf32>
    %cst_25 = arith.constant 1.000000e+00 : f32
    %69 = vector.broadcast %cst_25 : f32 to vector<8x128xf32>
    %70 = arith.addf %69, %68 : vector<8x128xf32>
    %71 = arith.divf %69, %70 : vector<8x128xf32>
    %72 = arith.mulf %63, %41 : vector<8x128xf32>
    %73 = arith.mulf %57, %65 : vector<8x128xf32>
    %74 = arith.addf %72, %73 : vector<8x128xf32>
    %75 = math.tanh %74 : vector<8x128xf32>
    %76 = arith.mulf %71, %75 : vector<8x128xf32>
    %77 = arith.index_cast %47 : i32 to index
    %c0_26 = arith.constant 0 : index
    %78 = vector.load %arg5[%77, %c0_26] : memref<72x128xf32, #tpu.memory_space<vmem>>, vector<8x128xf32>
    tpu.vector_store %arg5[%77, %c0_26], %76 {strides = array<i32>} : memref<72x128xf32, #tpu.memory_space<vmem>>, vector<8x128xf32>,
    %c2_i32 = arith.constant 2 : i32
    %c8_i32_27 = arith.constant 8 : i32
    %79 = arith.muli %c2_i32, %c8_i32_27 : i32
    %80 = tpu.assume_multiple %79, 8 : i32
    %81 = arith.index_cast %80 : i32 to index
    %c0_28 = arith.constant 0 : index
    %82 = vector.load %arg6[%81, %c0_28] : memref<72x512xf32, #tpu.memory_space<vmem>>, vector<8x512xf32>
    %cst_29 = arith.constant dense<0.000000e+00> : vector<8x512xf32>
    %83 = tpu.matmul %76, %10, %cst_29 {dimension_numbers = #tpu.dot_dimension_numbers<[1], [0], [0], [1], [0, 0, 1, 1], [], []>} : vector<8x128xf32>, vector<128x512xf32>, vector<8x512xf32> -> vector<8x512xf32>
    %84 = arith.addf %82, %83 : vector<8x512xf32>
    %85 = vector.extract_strided_slice %84 {offsets = [0, 0], sizes = [8, 128], strides = [1, 1]} : vector<8x512xf32> to vector<8x128xf32>
    %86 = arith.negf %85 : vector<8x128xf32>
    %87 = math.exp %86 : vector<8x128xf32>
    %cst_30 = arith.constant 1.000000e+00 : f32
    %88 = vector.broadcast %cst_30 : f32 to vector<8x128xf32>
    %89 = arith.addf %88, %87 : vector<8x128xf32>
    %90 = arith.divf %88, %89 : vector<8x128xf32>
    %91 = vector.extract_strided_slice %84 {offsets = [0, 128], sizes = [8, 128], strides = [1, 1]} : vector<8x512xf32> to vector<8x128xf32>
    %92 = arith.negf %91 : vector<8x128xf32>
    %93 = math.exp %92 : vector<8x128xf32>
    %cst_31 = arith.constant 1.000000e+00 : f32
    %94 = vector.broadcast %cst_31 : f32 to vector<8x128xf32>
    %95 = arith.addf %94, %93 : vector<8x128xf32>
    %96 = arith.divf %94, %95 : vector<8x128xf32>
    %97 = vector.extract_strided_slice %84 {offsets = [0, 256], sizes = [8, 128], strides = [1, 1]} : vector<8x512xf32> to vector<8x128xf32>
    %98 = math.tanh %97 : vector<8x128xf32>
    %99 = vector.extract_strided_slice %84 {offsets = [0, 384], sizes = [8, 128], strides = [1, 1]} : vector<8x512xf32> to vector<8x128xf32>
    %100 = arith.negf %99 : vector<8x128xf32>
    %101 = math.exp %100 : vector<8x128xf32>
    %cst_32 = arith.constant 1.000000e+00 : f32
    %102 = vector.broadcast %cst_32 : f32 to vector<8x128xf32>
    %103 = arith.addf %102, %101 : vector<8x128xf32>
    %104 = arith.divf %102, %103 : vector<8x128xf32>
    %105 = arith.mulf %96, %74 : vector<8x128xf32>
    %106 = arith.mulf %90, %98 : vector<8x128xf32>
    %107 = arith.addf %105, %106 : vector<8x128xf32>
    %108 = math.tanh %107 : vector<8x128xf32>
    %109 = arith.mulf %104, %108 : vector<8x128xf32>
    %110 = arith.index_cast %80 : i32 to index
    %c0_33 = arith.constant 0 : index
    %111 = vector.load %arg5[%110, %c0_33] : memref<72x128xf32, #tpu.memory_space<vmem>>, vector<8x128xf32>
    tpu.vector_store %arg5[%110, %c0_33], %109 {strides = array<i32>} : memref<72x128xf32, #tpu.memory_space<vmem>>, vector<8x128xf32>,
    %c3_i32 = arith.constant 3 : i32
    %c8_i32_34 = arith.constant 8 : i32
    %112 = arith.muli %c3_i32, %c8_i32_34 : i32
    %113 = tpu.assume_multiple %112, 8 : i32
    %114 = arith.index_cast %113 : i32 to index
    %c0_35 = arith.constant 0 : index
    %115 = vector.load %arg6[%114, %c0_35] : memref<72x512xf32, #tpu.memory_space<vmem>>, vector<8x512xf32>
    %cst_36 = arith.constant dense<0.000000e+00> : vector<8x512xf32>
    %116 = tpu.matmul %109, %10, %cst_36 {dimension_numbers = #tpu.dot_dimension_numbers<[1], [0], [0], [1], [0, 0, 1, 1], [], []>} : vector<8x128xf32>, vector<128x512xf32>, vector<8x512xf32> -> vector<8x512xf32>
    %117 = arith.addf %115, %116 : vector<8x512xf32>
    %118 = vector.extract_strided_slice %117 {offsets = [0, 0], sizes = [8, 128], strides = [1, 1]} : vector<8x512xf32> to vector<8x128xf32>
    %119 = arith.negf %118 : vector<8x128xf32>
    %120 = math.exp %119 : vector<8x128xf32>
    %cst_37 = arith.constant 1.000000e+00 : f32
    %121 = vector.broadcast %cst_37 : f32 to vector<8x128xf32>
    %122 = arith.addf %121, %120 : vector<8x128xf32>
    %123 = arith.divf %121, %122 : vector<8x128xf32>
    %124 = vector.extract_strided_slice %117 {offsets = [0, 128], sizes = [8, 128], strides = [1, 1]} : vector<8x512xf32> to vector<8x128xf32>
    %125 = arith.negf %124 : vector<8x128xf32>
    %126 = math.exp %125 : vector<8x128xf32>
    %cst_38 = arith.constant 1.000000e+00 : f32
    %127 = vector.broadcast %cst_38 : f32 to vector<8x128xf32>
    %128 = arith.addf %127, %126 : vector<8x128xf32>
    %129 = arith.divf %127, %128 : vector<8x128xf32>
    %130 = vector.extract_strided_slice %117 {offsets = [0, 256], sizes = [8, 128], strides = [1, 1]} : vector<8x512xf32> to vector<8x128xf32>
    %131 = math.tanh %130 : vector<8x128xf32>
    %132 = vector.extract_strided_slice %117 {offsets = [0, 384], sizes = [8, 128], strides = [1, 1]} : vector<8x512xf32> to vector<8x128xf32>
    %133 = arith.negf %132 : vector<8x128xf32>
    %134 = math.exp %133 : vector<8x128xf32>
    %cst_39 = arith.constant 1.000000e+00 : f32
    %135 = vector.broadcast %cst_39 : f32 to vector<8x128xf32>
    %136 = arith.addf %135, %134 : vector<8x128xf32>
    %137 = arith.divf %135, %136 : vector<8x128xf32>
    %138 = arith.mulf %129, %107 : vector<8x128xf32>
    %139 = arith.mulf %123, %131 : vector<8x128xf32>
    %140 = arith.addf %138, %139 : vector<8x128xf32>
    %141 = math.tanh %140 : vector<8x128xf32>
    %142 = arith.mulf %137, %141 : vector<8x128xf32>
    %143 = arith.index_cast %113 : i32 to index
    %c0_40 = arith.constant 0 : index
    %144 = vector.load %arg5[%143, %c0_40] : memref<72x128xf32, #tpu.memory_space<vmem>>, vector<8x128xf32>
    tpu.vector_store %arg5[%143, %c0_40], %142 {strides = array<i32>} : memref<72x128xf32, #tpu.memory_space<vmem>>, vector<8x128xf32>,
    %c4_i32 = arith.constant 4 : i32
    %c8_i32_41 = arith.constant 8 : i32
    %145 = arith.muli %c4_i32, %c8_i32_41 : i32
    %146 = tpu.assume_multiple %145, 8 : i32
    %147 = arith.index_cast %146 : i32 to index
    %c0_42 = arith.constant 0 : index
    %148 = vector.load %arg6[%147, %c0_42] : memref<72x512xf32, #tpu.memory_space<vmem>>, vector<8x512xf32>
    %cst_43 = arith.constant dense<0.000000e+00> : vector<8x512xf32>
    %149 = tpu.matmul %142, %10, %cst_43 {dimension_numbers = #tpu.dot_dimension_numbers<[1], [0], [0], [1], [0, 0, 1, 1], [], []>} : vector<8x128xf32>, vector<128x512xf32>, vector<8x512xf32> -> vector<8x512xf32>
    %150 = arith.addf %148, %149 : vector<8x512xf32>
    %151 = vector.extract_strided_slice %150 {offsets = [0, 0], sizes = [8, 128], strides = [1, 1]} : vector<8x512xf32> to vector<8x128xf32>
    %152 = arith.negf %151 : vector<8x128xf32>
    %153 = math.exp %152 : vector<8x128xf32>
    %cst_44 = arith.constant 1.000000e+00 : f32
    %154 = vector.broadcast %cst_44 : f32 to vector<8x128xf32>
    %155 = arith.addf %154, %153 : vector<8x128xf32>
    %156 = arith.divf %154, %155 : vector<8x128xf32>
    %157 = vector.extract_strided_slice %150 {offsets = [0, 128], sizes = [8, 128], strides = [1, 1]} : vector<8x512xf32> to vector<8x128xf32>
    %158 = arith.negf %157 : vector<8x128xf32>
    %159 = math.exp %158 : vector<8x128xf32>
    %cst_45 = arith.constant 1.000000e+00 : f32
    %160 = vector.broadcast %cst_45 : f32 to vector<8x128xf32>
    %161 = arith.addf %160, %159 : vector<8x128xf32>
    %162 = arith.divf %160, %161 : vector<8x128xf32>
    %163 = vector.extract_strided_slice %150 {offsets = [0, 256], sizes = [8, 128], strides = [1, 1]} : vector<8x512xf32> to vector<8x128xf32>
    %164 = math.tanh %163 : vector<8x128xf32>
    %165 = vector.extract_strided_slice %150 {offsets = [0, 384], sizes = [8, 128], strides = [1, 1]} : vector<8x512xf32> to vector<8x128xf32>
    %166 = arith.negf %165 : vector<8x128xf32>
    %167 = math.exp %166 : vector<8x128xf32>
    %cst_46 = arith.constant 1.000000e+00 : f32
    %168 = vector.broadcast %cst_46 : f32 to vector<8x128xf32>
    %169 = arith.addf %168, %167 : vector<8x128xf32>
    %170 = arith.divf %168, %169 : vector<8x128xf32>
    %171 = arith.mulf %162, %140 : vector<8x128xf32>
    %172 = arith.mulf %156, %164 : vector<8x128xf32>
    %173 = arith.addf %171, %172 : vector<8x128xf32>
    %174 = math.tanh %173 : vector<8x128xf32>
    %175 = arith.mulf %170, %174 : vector<8x128xf32>
    %176 = arith.index_cast %146 : i32 to index
    %c0_47 = arith.constant 0 : index
    %177 = vector.load %arg5[%176, %c0_47] : memref<72x128xf32, #tpu.memory_space<vmem>>, vector<8x128xf32>
    tpu.vector_store %arg5[%176, %c0_47], %175 {strides = array<i32>} : memref<72x128xf32, #tpu.memory_space<vmem>>, vector<8x128xf32>,
    %c5_i32 = arith.constant 5 : i32
    %c8_i32_48 = arith.constant 8 : i32
    %178 = arith.muli %c5_i32, %c8_i32_48 : i32
    %179 = tpu.assume_multiple %178, 8 : i32
    %180 = arith.index_cast %179 : i32 to index
    %c0_49 = arith.constant 0 : index
    %181 = vector.load %arg6[%180, %c0_49] : memref<72x512xf32, #tpu.memory_space<vmem>>, vector<8x512xf32>
    %cst_50 = arith.constant dense<0.000000e+00> : vector<8x512xf32>
    %182 = tpu.matmul %175, %10, %cst_50 {dimension_numbers = #tpu.dot_dimension_numbers<[1], [0], [0], [1], [0, 0, 1, 1], [], []>} : vector<8x128xf32>, vector<128x512xf32>, vector<8x512xf32> -> vector<8x512xf32>
    %183 = arith.addf %181, %182 : vector<8x512xf32>
    %184 = vector.extract_strided_slice %183 {offsets = [0, 0], sizes = [8, 128], strides = [1, 1]} : vector<8x512xf32> to vector<8x128xf32>
    %185 = arith.negf %184 : vector<8x128xf32>
    %186 = math.exp %185 : vector<8x128xf32>
    %cst_51 = arith.constant 1.000000e+00 : f32
    %187 = vector.broadcast %cst_51 : f32 to vector<8x128xf32>
    %188 = arith.addf %187, %186 : vector<8x128xf32>
    %189 = arith.divf %187, %188 : vector<8x128xf32>
    %190 = vector.extract_strided_slice %183 {offsets = [0, 128], sizes = [8, 128], strides = [1, 1]} : vector<8x512xf32> to vector<8x128xf32>
    %191 = arith.negf %190 : vector<8x128xf32>
    %192 = math.exp %191 : vector<8x128xf32>
    %cst_52 = arith.constant 1.000000e+00 : f32
    %193 = vector.broadcast %cst_52 : f32 to vector<8x128xf32>
    %194 = arith.addf %193, %192 : vector<8x128xf32>
    %195 = arith.divf %193, %194 : vector<8x128xf32>
    %196 = vector.extract_strided_slice %183 {offsets = [0, 256], sizes = [8, 128], strides = [1, 1]} : vector<8x512xf32> to vector<8x128xf32>
    %197 = math.tanh %196 : vector<8x128xf32>
    %198 = vector.extract_strided_slice %183 {offsets = [0, 384], sizes = [8, 128], strides = [1, 1]} : vector<8x512xf32> to vector<8x128xf32>
    %199 = arith.negf %198 : vector<8x128xf32>
    %200 = math.exp %199 : vector<8x128xf32>
    %cst_53 = arith.constant 1.000000e+00 : f32
    %201 = vector.broadcast %cst_53 : f32 to vector<8x128xf32>
    %202 = arith.addf %201, %200 : vector<8x128xf32>
    %203 = arith.divf %201, %202 : vector<8x128xf32>
    %204 = arith.mulf %195, %173 : vector<8x128xf32>
    %205 = arith.mulf %189, %197 : vector<8x128xf32>
    %206 = arith.addf %204, %205 : vector<8x128xf32>
    %207 = math.tanh %206 : vector<8x128xf32>
    %208 = arith.mulf %203, %207 : vector<8x128xf32>
    %209 = arith.index_cast %179 : i32 to index
    %c0_54 = arith.constant 0 : index
    %210 = vector.load %arg5[%209, %c0_54] : memref<72x128xf32, #tpu.memory_space<vmem>>, vector<8x128xf32>
    tpu.vector_store %arg5[%209, %c0_54], %208 {strides = array<i32>} : memref<72x128xf32, #tpu.memory_space<vmem>>, vector<8x128xf32>,
    %c6_i32 = arith.constant 6 : i32
    %c8_i32_55 = arith.constant 8 : i32
    %211 = arith.muli %c6_i32, %c8_i32_55 : i32
    %212 = tpu.assume_multiple %211, 8 : i32
    %213 = arith.index_cast %212 : i32 to index
    %c0_56 = arith.constant 0 : index
    %214 = vector.load %arg6[%213, %c0_56] : memref<72x512xf32, #tpu.memory_space<vmem>>, vector<8x512xf32>
    %cst_57 = arith.constant dense<0.000000e+00> : vector<8x512xf32>
    %215 = tpu.matmul %208, %10, %cst_57 {dimension_numbers = #tpu.dot_dimension_numbers<[1], [0], [0], [1], [0, 0, 1, 1], [], []>} : vector<8x128xf32>, vector<128x512xf32>, vector<8x512xf32> -> vector<8x512xf32>
    %216 = arith.addf %214, %215 : vector<8x512xf32>
    %217 = vector.extract_strided_slice %216 {offsets = [0, 0], sizes = [8, 128], strides = [1, 1]} : vector<8x512xf32> to vector<8x128xf32>
    %218 = arith.negf %217 : vector<8x128xf32>
    %219 = math.exp %218 : vector<8x128xf32>
    %cst_58 = arith.constant 1.000000e+00 : f32
    %220 = vector.broadcast %cst_58 : f32 to vector<8x128xf32>
    %221 = arith.addf %220, %219 : vector<8x128xf32>
    %222 = arith.divf %220, %221 : vector<8x128xf32>
    %223 = vector.extract_strided_slice %216 {offsets = [0, 128], sizes = [8, 128], strides = [1, 1]} : vector<8x512xf32> to vector<8x128xf32>
    %224 = arith.negf %223 : vector<8x128xf32>
    %225 = math.exp %224 : vector<8x128xf32>
    %cst_59 = arith.constant 1.000000e+00 : f32
    %226 = vector.broadcast %cst_59 : f32 to vector<8x128xf32>
    %227 = arith.addf %226, %225 : vector<8x128xf32>
    %228 = arith.divf %226, %227 : vector<8x128xf32>
    %229 = vector.extract_strided_slice %216 {offsets = [0, 256], sizes = [8, 128], strides = [1, 1]} : vector<8x512xf32> to vector<8x128xf32>
    %230 = math.tanh %229 : vector<8x128xf32>
    %231 = vector.extract_strided_slice %216 {offsets = [0, 384], sizes = [8, 128], strides = [1, 1]} : vector<8x512xf32> to vector<8x128xf32>
    %232 = arith.negf %231 : vector<8x128xf32>
    %233 = math.exp %232 : vector<8x128xf32>
    %cst_60 = arith.constant 1.000000e+00 : f32
    %234 = vector.broadcast %cst_60 : f32 to vector<8x128xf32>
    %235 = arith.addf %234, %233 : vector<8x128xf32>
    %236 = arith.divf %234, %235 : vector<8x128xf32>
    %237 = arith.mulf %228, %206 : vector<8x128xf32>
    %238 = arith.mulf %222, %230 : vector<8x128xf32>
    %239 = arith.addf %237, %238 : vector<8x128xf32>
    %240 = math.tanh %239 : vector<8x128xf32>
    %241 = arith.mulf %236, %240 : vector<8x128xf32>
    %242 = arith.index_cast %212 : i32 to index
    %c0_61 = arith.constant 0 : index
    %243 = vector.load %arg5[%242, %c0_61] : memref<72x128xf32, #tpu.memory_space<vmem>>, vector<8x128xf32>
    tpu.vector_store %arg5[%242, %c0_61], %241 {strides = array<i32>} : memref<72x128xf32, #tpu.memory_space<vmem>>, vector<8x128xf32>,
    %c7_i32 = arith.constant 7 : i32
    %c8_i32_62 = arith.constant 8 : i32
    %244 = arith.muli %c7_i32, %c8_i32_62 : i32
    %245 = tpu.assume_multiple %244, 8 : i32
    %246 = arith.index_cast %245 : i32 to index
    %c0_63 = arith.constant 0 : index
    %247 = vector.load %arg6[%246, %c0_63] : memref<72x512xf32, #tpu.memory_space<vmem>>, vector<8x512xf32>
    %cst_64 = arith.constant dense<0.000000e+00> : vector<8x512xf32>
    %248 = tpu.matmul %241, %10, %cst_64 {dimension_numbers = #tpu.dot_dimension_numbers<[1], [0], [0], [1], [0, 0, 1, 1], [], []>} : vector<8x128xf32>, vector<128x512xf32>, vector<8x512xf32> -> vector<8x512xf32>
    %249 = arith.addf %247, %248 : vector<8x512xf32>
    %250 = vector.extract_strided_slice %249 {offsets = [0, 0], sizes = [8, 128], strides = [1, 1]} : vector<8x512xf32> to vector<8x128xf32>
    %251 = arith.negf %250 : vector<8x128xf32>
    %252 = math.exp %251 : vector<8x128xf32>
    %cst_65 = arith.constant 1.000000e+00 : f32
    %253 = vector.broadcast %cst_65 : f32 to vector<8x128xf32>
    %254 = arith.addf %253, %252 : vector<8x128xf32>
    %255 = arith.divf %253, %254 : vector<8x128xf32>
    %256 = vector.extract_strided_slice %249 {offsets = [0, 128], sizes = [8, 128], strides = [1, 1]} : vector<8x512xf32> to vector<8x128xf32>
    %257 = arith.negf %256 : vector<8x128xf32>
    %258 = math.exp %257 : vector<8x128xf32>
    %cst_66 = arith.constant 1.000000e+00 : f32
    %259 = vector.broadcast %cst_66 : f32 to vector<8x128xf32>
    %260 = arith.addf %259, %258 : vector<8x128xf32>
    %261 = arith.divf %259, %260 : vector<8x128xf32>
    %262 = vector.extract_strided_slice %249 {offsets = [0, 256], sizes = [8, 128], strides = [1, 1]} : vector<8x512xf32> to vector<8x128xf32>
    %263 = math.tanh %262 : vector<8x128xf32>
    %264 = vector.extract_strided_slice %249 {offsets = [0, 384], sizes = [8, 128], strides = [1, 1]} : vector<8x512xf32> to vector<8x128xf32>
    %265 = arith.negf %264 : vector<8x128xf32>
    %266 = math.exp %265 : vector<8x128xf32>
    %cst_67 = arith.constant 1.000000e+00 : f32
    %267 = vector.broadcast %cst_67 : f32 to vector<8x128xf32>
    %268 = arith.addf %267, %266 : vector<8x128xf32>
    %269 = arith.divf %267, %268 : vector<8x128xf32>
    %270 = arith.mulf %261, %239 : vector<8x128xf32>
    %271 = arith.mulf %255, %263 : vector<8x128xf32>
    %272 = arith.addf %270, %271 : vector<8x128xf32>
    %273 = math.tanh %272 : vector<8x128xf32>
    %274 = arith.mulf %269, %273 : vector<8x128xf32>
    %275 = arith.index_cast %245 : i32 to index
    %c0_68 = arith.constant 0 : index
    %276 = vector.load %arg5[%275, %c0_68] : memref<72x128xf32, #tpu.memory_space<vmem>>, vector<8x128xf32>
    tpu.vector_store %arg5[%275, %c0_68], %274 {strides = array<i32>} : memref<72x128xf32, #tpu.memory_space<vmem>>, vector<8x128xf32>,
    %c8_i32_69 = arith.constant 8 : i32
    %c8_i32_70 = arith.constant 8 : i32
    %277 = arith.muli %c8_i32_69, %c8_i32_70 : i32
    %278 = tpu.assume_multiple %277, 8 : i32
    %279 = arith.index_cast %278 : i32 to index
    %c0_71 = arith.constant 0 : index
    %280 = vector.load %arg6[%279, %c0_71] : memref<72x512xf32, #tpu.memory_space<vmem>>, vector<8x512xf32>
    %cst_72 = arith.constant dense<0.000000e+00> : vector<8x512xf32>
    %281 = tpu.matmul %274, %10, %cst_72 {dimension_numbers = #tpu.dot_dimension_numbers<[1], [0], [0], [1], [0, 0, 1, 1], [], []>} : vector<8x128xf32>, vector<128x512xf32>, vector<8x512xf32> -> vector<8x512xf32>
    %282 = arith.addf %280, %281 : vector<8x512xf32>
    %283 = vector.extract_strided_slice %282 {offsets = [0, 0], sizes = [8, 128], strides = [1, 1]} : vector<8x512xf32> to vector<8x128xf32>
    %284 = arith.negf %283 : vector<8x128xf32>
    %285 = math.exp %284 : vector<8x128xf32>
    %cst_73 = arith.constant 1.000000e+00 : f32
    %286 = vector.broadcast %cst_73 : f32 to vector<8x128xf32>
    %287 = arith.addf %286, %285 : vector<8x128xf32>
    %288 = arith.divf %286, %287 : vector<8x128xf32>
    %289 = vector.extract_strided_slice %282 {offsets = [0, 128], sizes = [8, 128], strides = [1, 1]} : vector<8x512xf32> to vector<8x128xf32>
    %290 = arith.negf %289 : vector<8x128xf32>
    %291 = math.exp %290 : vector<8x128xf32>
    %cst_74 = arith.constant 1.000000e+00 : f32
    %292 = vector.broadcast %cst_74 : f32 to vector<8x128xf32>
    %293 = arith.addf %292, %291 : vector<8x128xf32>
    %294 = arith.divf %292, %293 : vector<8x128xf32>
    %295 = vector.extract_strided_slice %282 {offsets = [0, 256], sizes = [8, 128], strides = [1, 1]} : vector<8x512xf32> to vector<8x128xf32>
    %296 = math.tanh %295 : vector<8x128xf32>
    %297 = vector.extract_strided_slice %282 {offsets = [0, 384], sizes = [8, 128], strides = [1, 1]} : vector<8x512xf32> to vector<8x128xf32>
    %298 = arith.negf %297 : vector<8x128xf32>
    %299 = math.exp %298 : vector<8x128xf32>
    %cst_75 = arith.constant 1.000000e+00 : f32
    %300 = vector.broadcast %cst_75 : f32 to vector<8x128xf32>
    %301 = arith.addf %300, %299 : vector<8x128xf32>
    %302 = arith.divf %300, %301 : vector<8x128xf32>
    %303 = arith.mulf %294, %272 : vector<8x128xf32>
    %304 = arith.mulf %288, %296 : vector<8x128xf32>
    %305 = arith.addf %303, %304 : vector<8x128xf32>
    %306 = math.tanh %305 : vector<8x128xf32>
    %307 = arith.mulf %302, %306 : vector<8x128xf32>
    %308 = arith.index_cast %278 : i32 to index
    %c0_76 = arith.constant 0 : index
    %309 = vector.load %arg5[%308, %c0_76] : memref<72x128xf32, #tpu.memory_space<vmem>>, vector<8x128xf32>
    tpu.vector_store %arg5[%308, %c0_76], %307 {strides = array<i32>} : memref<72x128xf32, #tpu.memory_space<vmem>>, vector<8x128xf32>,
    %c9_i32 = arith.constant 9 : i32
    %c0_77 = arith.constant 0 : index
    %c0_78 = arith.constant 0 : index
    %310 = vector.load %arg5[%c0_77, %c0_78] : memref<72x128xf32, #tpu.memory_space<vmem>>, vector<72x128xf32>
    %c1 = arith.constant 1 : index
    %c0_79 = arith.constant 0 : index
    %c0_80 = arith.constant 0 : index
    %311 = vector.load %arg1[%c1, %c0_79, %c0_80] : memref<2x128x512xf32, #tpu.memory_space<vmem>>, vector<1x128x512xf32>
    %312 = vector.shape_cast %311 : vector<1x128x512xf32> to vector<128x512xf32>
    %cst_81 = arith.constant dense<0.000000e+00> : vector<72x512xf32>
    %313 = tpu.matmul %310, %312, %cst_81 {dimension_numbers = #tpu.dot_dimension_numbers<[1], [0], [0], [1], [0, 0, 1, 1], [], []>} : vector<72x128xf32>, vector<128x512xf32>, vector<72x512xf32> -> vector<72x512xf32>
    %c1_82 = arith.constant 1 : index
    %c0_83 = arith.constant 0 : index
    %c0_84 = arith.constant 0 : index
    %314 = vector.load %arg3[%c1_82, %c0_83, %c0_84] : memref<2x1x512xf32, #tpu.memory_space<vmem>>, vector<1x1x512xf32>
    %315 = vector.shape_cast %314 : vector<1x1x512xf32> to vector<1x512xf32>
    %316 = vector.broadcast %315 : vector<1x512xf32> to vector<72x512xf32>
    %317 = arith.addf %313, %316 : vector<72x512xf32>
    %c0_85 = arith.constant 0 : index
    %c0_86 = arith.constant 0 : index
    %318 = vector.load %arg6[%c0_85, %c0_86] : memref<72x512xf32, #tpu.memory_space<vmem>>, vector<72x512xf32>
    tpu.vector_store %arg6[%c0_85, %c0_86], %317 {strides = array<i32>} : memref<72x512xf32, #tpu.memory_space<vmem>>, vector<72x512xf32>,
    %c1_87 = arith.constant 1 : index
    %c0_88 = arith.constant 0 : index
    %c0_89 = arith.constant 0 : index
    %319 = vector.load %arg2[%c1_87, %c0_88, %c0_89] : memref<2x128x512xf32, #tpu.memory_space<vmem>>, vector<1x128x512xf32>
    %320 = vector.shape_cast %319 : vector<1x128x512xf32> to vector<128x512xf32>
    %cst_90 = arith.constant 0.000000e+00 : f32
    %321 = vector.broadcast %cst_90 : f32 to vector<8x128xf32>
    %cst_91 = arith.constant 0.000000e+00 : f32
    %322 = vector.broadcast %cst_91 : f32 to vector<8x128xf32>
    %c0_i32_92 = arith.constant 0 : i32
    %c8_i32_93 = arith.constant 8 : i32
    %323 = arith.muli %c0_i32_92, %c8_i32_93 : i32
    %324 = tpu.assume_multiple %323, 8 : i32
    %325 = arith.index_cast %324 : i32 to index
    %c0_94 = arith.constant 0 : index
    %326 = vector.load %arg6[%325, %c0_94] : memref<72x512xf32, #tpu.memory_space<vmem>>, vector<8x512xf32>
    %cst_95 = arith.constant dense<0.000000e+00> : vector<8x512xf32>
    %327 = tpu.matmul %321, %320, %cst_95 {dimension_numbers = #tpu.dot_dimension_numbers<[1], [0], [0], [1], [0, 0, 1, 1], [], []>} : vector<8x128xf32>, vector<128x512xf32>, vector<8x512xf32> -> vector<8x512xf32>
    %328 = arith.addf %326, %327 : vector<8x512xf32>
    %329 = vector.extract_strided_slice %328 {offsets = [0, 0], sizes = [8, 128], strides = [1, 1]} : vector<8x512xf32> to vector<8x128xf32>
    %330 = arith.negf %329 : vector<8x128xf32>
    %331 = math.exp %330 : vector<8x128xf32>
    %cst_96 = arith.constant 1.000000e+00 : f32
    %332 = vector.broadcast %cst_96 : f32 to vector<8x128xf32>
    %333 = arith.addf %332, %331 : vector<8x128xf32>
    %334 = arith.divf %332, %333 : vector<8x128xf32>
    %335 = vector.extract_strided_slice %328 {offsets = [0, 128], sizes = [8, 128], strides = [1, 1]} : vector<8x512xf32> to vector<8x128xf32>
    %336 = arith.negf %335 : vector<8x128xf32>
    %337 = math.exp %336 : vector<8x128xf32>
    %cst_97 = arith.constant 1.000000e+00 : f32
    %338 = vector.broadcast %cst_97 : f32 to vector<8x128xf32>
    %339 = arith.addf %338, %337 : vector<8x128xf32>
    %340 = arith.divf %338, %339 : vector<8x128xf32>
    %341 = vector.extract_strided_slice %328 {offsets = [0, 256], sizes = [8, 128], strides = [1, 1]} : vector<8x512xf32> to vector<8x128xf32>
    %342 = math.tanh %341 : vector<8x128xf32>
    %343 = vector.extract_strided_slice %328 {offsets = [0, 384], sizes = [8, 128], strides = [1, 1]} : vector<8x512xf32> to vector<8x128xf32>
    %344 = arith.negf %343 : vector<8x128xf32>
    %345 = math.exp %344 : vector<8x128xf32>
    %cst_98 = arith.constant 1.000000e+00 : f32
    %346 = vector.broadcast %cst_98 : f32 to vector<8x128xf32>
    %347 = arith.addf %346, %345 : vector<8x128xf32>
    %348 = arith.divf %346, %347 : vector<8x128xf32>
    %349 = arith.mulf %340, %322 : vector<8x128xf32>
    %350 = arith.mulf %334, %342 : vector<8x128xf32>
    %351 = arith.addf %349, %350 : vector<8x128xf32>
    %352 = math.tanh %351 : vector<8x128xf32>
    %353 = arith.mulf %348, %352 : vector<8x128xf32>
    %354 = arith.index_cast %324 : i32 to index
    %c0_99 = arith.constant 0 : index
    %355 = vector.load %arg4[%354, %c0_99] : memref<72x128xf32, #tpu.memory_space<vmem>>, vector<8x128xf32>
    tpu.vector_store %arg4[%354, %c0_99], %353 {strides = array<i32>} : memref<72x128xf32, #tpu.memory_space<vmem>>, vector<8x128xf32>,
    %c1_i32_100 = arith.constant 1 : i32
    %c8_i32_101 = arith.constant 8 : i32
    %356 = arith.muli %c1_i32_100, %c8_i32_101 : i32
    %357 = tpu.assume_multiple %356, 8 : i32
    %358 = arith.index_cast %357 : i32 to index
    %c0_102 = arith.constant 0 : index
    %359 = vector.load %arg6[%358, %c0_102] : memref<72x512xf32, #tpu.memory_space<vmem>>, vector<8x512xf32>
    %cst_103 = arith.constant dense<0.000000e+00> : vector<8x512xf32>
    %360 = tpu.matmul %353, %320, %cst_103 {dimension_numbers = #tpu.dot_dimension_numbers<[1], [0], [0], [1], [0, 0, 1, 1], [], []>} : vector<8x128xf32>, vector<128x512xf32>, vector<8x512xf32> -> vector<8x512xf32>
    %361 = arith.addf %359, %360 : vector<8x512xf32>
    %362 = vector.extract_strided_slice %361 {offsets = [0, 0], sizes = [8, 128], strides = [1, 1]} : vector<8x512xf32> to vector<8x128xf32>
    %363 = arith.negf %362 : vector<8x128xf32>
    %364 = math.exp %363 : vector<8x128xf32>
    %cst_104 = arith.constant 1.000000e+00 : f32
    %365 = vector.broadcast %cst_104 : f32 to vector<8x128xf32>
    %366 = arith.addf %365, %364 : vector<8x128xf32>
    %367 = arith.divf %365, %366 : vector<8x128xf32>
    %368 = vector.extract_strided_slice %361 {offsets = [0, 128], sizes = [8, 128], strides = [1, 1]} : vector<8x512xf32> to vector<8x128xf32>
    %369 = arith.negf %368 : vector<8x128xf32>
    %370 = math.exp %369 : vector<8x128xf32>
    %cst_105 = arith.constant 1.000000e+00 : f32
    %371 = vector.broadcast %cst_105 : f32 to vector<8x128xf32>
    %372 = arith.addf %371, %370 : vector<8x128xf32>
    %373 = arith.divf %371, %372 : vector<8x128xf32>
    %374 = vector.extract_strided_slice %361 {offsets = [0, 256], sizes = [8, 128], strides = [1, 1]} : vector<8x512xf32> to vector<8x128xf32>
    %375 = math.tanh %374 : vector<8x128xf32>
    %376 = vector.extract_strided_slice %361 {offsets = [0, 384], sizes = [8, 128], strides = [1, 1]} : vector<8x512xf32> to vector<8x128xf32>
    %377 = arith.negf %376 : vector<8x128xf32>
    %378 = math.exp %377 : vector<8x128xf32>
    %cst_106 = arith.constant 1.000000e+00 : f32
    %379 = vector.broadcast %cst_106 : f32 to vector<8x128xf32>
    %380 = arith.addf %379, %378 : vector<8x128xf32>
    %381 = arith.divf %379, %380 : vector<8x128xf32>
    %382 = arith.mulf %373, %351 : vector<8x128xf32>
    %383 = arith.mulf %367, %375 : vector<8x128xf32>
    %384 = arith.addf %382, %383 : vector<8x128xf32>
    %385 = math.tanh %384 : vector<8x128xf32>
    %386 = arith.mulf %381, %385 : vector<8x128xf32>
    %387 = arith.index_cast %357 : i32 to index
    %c0_107 = arith.constant 0 : index
    %388 = vector.load %arg4[%387, %c0_107] : memref<72x128xf32, #tpu.memory_space<vmem>>, vector<8x128xf32>
    tpu.vector_store %arg4[%387, %c0_107], %386 {strides = array<i32>} : memref<72x128xf32, #tpu.memory_space<vmem>>, vector<8x128xf32>,
    %c2_i32_108 = arith.constant 2 : i32
    %c8_i32_109 = arith.constant 8 : i32
    %389 = arith.muli %c2_i32_108, %c8_i32_109 : i32
    %390 = tpu.assume_multiple %389, 8 : i32
    %391 = arith.index_cast %390 : i32 to index
    %c0_110 = arith.constant 0 : index
    %392 = vector.load %arg6[%391, %c0_110] : memref<72x512xf32, #tpu.memory_space<vmem>>, vector<8x512xf32>
    %cst_111 = arith.constant dense<0.000000e+00> : vector<8x512xf32>
    %393 = tpu.matmul %386, %320, %cst_111 {dimension_numbers = #tpu.dot_dimension_numbers<[1], [0], [0], [1], [0, 0, 1, 1], [], []>} : vector<8x128xf32>, vector<128x512xf32>, vector<8x512xf32> -> vector<8x512xf32>
    %394 = arith.addf %392, %393 : vector<8x512xf32>
    %395 = vector.extract_strided_slice %394 {offsets = [0, 0], sizes = [8, 128], strides = [1, 1]} : vector<8x512xf32> to vector<8x128xf32>
    %396 = arith.negf %395 : vector<8x128xf32>
    %397 = math.exp %396 : vector<8x128xf32>
    %cst_112 = arith.constant 1.000000e+00 : f32
    %398 = vector.broadcast %cst_112 : f32 to vector<8x128xf32>
    %399 = arith.addf %398, %397 : vector<8x128xf32>
    %400 = arith.divf %398, %399 : vector<8x128xf32>
    %401 = vector.extract_strided_slice %394 {offsets = [0, 128], sizes = [8, 128], strides = [1, 1]} : vector<8x512xf32> to vector<8x128xf32>
    %402 = arith.negf %401 : vector<8x128xf32>
    %403 = math.exp %402 : vector<8x128xf32>
    %cst_113 = arith.constant 1.000000e+00 : f32
    %404 = vector.broadcast %cst_113 : f32 to vector<8x128xf32>
    %405 = arith.addf %404, %403 : vector<8x128xf32>
    %406 = arith.divf %404, %405 : vector<8x128xf32>
    %407 = vector.extract_strided_slice %394 {offsets = [0, 256], sizes = [8, 128], strides = [1, 1]} : vector<8x512xf32> to vector<8x128xf32>
    %408 = math.tanh %407 : vector<8x128xf32>
    %409 = vector.extract_strided_slice %394 {offsets = [0, 384], sizes = [8, 128], strides = [1, 1]} : vector<8x512xf32> to vector<8x128xf32>
    %410 = arith.negf %409 : vector<8x128xf32>
    %411 = math.exp %410 : vector<8x128xf32>
    %cst_114 = arith.constant 1.000000e+00 : f32
    %412 = vector.broadcast %cst_114 : f32 to vector<8x128xf32>
    %413 = arith.addf %412, %411 : vector<8x128xf32>
    %414 = arith.divf %412, %413 : vector<8x128xf32>
    %415 = arith.mulf %406, %384 : vector<8x128xf32>
    %416 = arith.mulf %400, %408 : vector<8x128xf32>
    %417 = arith.addf %415, %416 : vector<8x128xf32>
    %418 = math.tanh %417 : vector<8x128xf32>
    %419 = arith.mulf %414, %418 : vector<8x128xf32>
    %420 = arith.index_cast %390 : i32 to index
    %c0_115 = arith.constant 0 : index
    %421 = vector.load %arg4[%420, %c0_115] : memref<72x128xf32, #tpu.memory_space<vmem>>, vector<8x128xf32>
    tpu.vector_store %arg4[%420, %c0_115], %419 {strides = array<i32>} : memref<72x128xf32, #tpu.memory_space<vmem>>, vector<8x128xf32>,
    %c3_i32_116 = arith.constant 3 : i32
    %c8_i32_117 = arith.constant 8 : i32
    %422 = arith.muli %c3_i32_116, %c8_i32_117 : i32
    %423 = tpu.assume_multiple %422, 8 : i32
    %424 = arith.index_cast %423 : i32 to index
    %c0_118 = arith.constant 0 : index
    %425 = vector.load %arg6[%424, %c0_118] : memref<72x512xf32, #tpu.memory_space<vmem>>, vector<8x512xf32>
    %cst_119 = arith.constant dense<0.000000e+00> : vector<8x512xf32>
    %426 = tpu.matmul %419, %320, %cst_119 {dimension_numbers = #tpu.dot_dimension_numbers<[1], [0], [0], [1], [0, 0, 1, 1], [], []>} : vector<8x128xf32>, vector<128x512xf32>, vector<8x512xf32> -> vector<8x512xf32>
    %427 = arith.addf %425, %426 : vector<8x512xf32>
    %428 = vector.extract_strided_slice %427 {offsets = [0, 0], sizes = [8, 128], strides = [1, 1]} : vector<8x512xf32> to vector<8x128xf32>
    %429 = arith.negf %428 : vector<8x128xf32>
    %430 = math.exp %429 : vector<8x128xf32>
    %cst_120 = arith.constant 1.000000e+00 : f32
    %431 = vector.broadcast %cst_120 : f32 to vector<8x128xf32>
    %432 = arith.addf %431, %430 : vector<8x128xf32>
    %433 = arith.divf %431, %432 : vector<8x128xf32>
    %434 = vector.extract_strided_slice %427 {offsets = [0, 128], sizes = [8, 128], strides = [1, 1]} : vector<8x512xf32> to vector<8x128xf32>
    %435 = arith.negf %434 : vector<8x128xf32>
    %436 = math.exp %435 : vector<8x128xf32>
    %cst_121 = arith.constant 1.000000e+00 : f32
    %437 = vector.broadcast %cst_121 : f32 to vector<8x128xf32>
    %438 = arith.addf %437, %436 : vector<8x128xf32>
    %439 = arith.divf %437, %438 : vector<8x128xf32>
    %440 = vector.extract_strided_slice %427 {offsets = [0, 256], sizes = [8, 128], strides = [1, 1]} : vector<8x512xf32> to vector<8x128xf32>
    %441 = math.tanh %440 : vector<8x128xf32>
    %442 = vector.extract_strided_slice %427 {offsets = [0, 384], sizes = [8, 128], strides = [1, 1]} : vector<8x512xf32> to vector<8x128xf32>
    %443 = arith.negf %442 : vector<8x128xf32>
    %444 = math.exp %443 : vector<8x128xf32>
    %cst_122 = arith.constant 1.000000e+00 : f32
    %445 = vector.broadcast %cst_122 : f32 to vector<8x128xf32>
    %446 = arith.addf %445, %444 : vector<8x128xf32>
    %447 = arith.divf %445, %446 : vector<8x128xf32>
    %448 = arith.mulf %439, %417 : vector<8x128xf32>
    %449 = arith.mulf %433, %441 : vector<8x128xf32>
    %450 = arith.addf %448, %449 : vector<8x128xf32>
    %451 = math.tanh %450 : vector<8x128xf32>
    %452 = arith.mulf %447, %451 : vector<8x128xf32>
    %453 = arith.index_cast %423 : i32 to index
    %c0_123 = arith.constant 0 : index
    %454 = vector.load %arg4[%453, %c0_123] : memref<72x128xf32, #tpu.memory_space<vmem>>, vector<8x128xf32>
    tpu.vector_store %arg4[%453, %c0_123], %452 {strides = array<i32>} : memref<72x128xf32, #tpu.memory_space<vmem>>, vector<8x128xf32>,
    %c4_i32_124 = arith.constant 4 : i32
    %c8_i32_125 = arith.constant 8 : i32
    %455 = arith.muli %c4_i32_124, %c8_i32_125 : i32
    %456 = tpu.assume_multiple %455, 8 : i32
    %457 = arith.index_cast %456 : i32 to index
    %c0_126 = arith.constant 0 : index
    %458 = vector.load %arg6[%457, %c0_126] : memref<72x512xf32, #tpu.memory_space<vmem>>, vector<8x512xf32>
    %cst_127 = arith.constant dense<0.000000e+00> : vector<8x512xf32>
    %459 = tpu.matmul %452, %320, %cst_127 {dimension_numbers = #tpu.dot_dimension_numbers<[1], [0], [0], [1], [0, 0, 1, 1], [], []>} : vector<8x128xf32>, vector<128x512xf32>, vector<8x512xf32> -> vector<8x512xf32>
    %460 = arith.addf %458, %459 : vector<8x512xf32>
    %461 = vector.extract_strided_slice %460 {offsets = [0, 0], sizes = [8, 128], strides = [1, 1]} : vector<8x512xf32> to vector<8x128xf32>
    %462 = arith.negf %461 : vector<8x128xf32>
    %463 = math.exp %462 : vector<8x128xf32>
    %cst_128 = arith.constant 1.000000e+00 : f32
    %464 = vector.broadcast %cst_128 : f32 to vector<8x128xf32>
    %465 = arith.addf %464, %463 : vector<8x128xf32>
    %466 = arith.divf %464, %465 : vector<8x128xf32>
    %467 = vector.extract_strided_slice %460 {offsets = [0, 128], sizes = [8, 128], strides = [1, 1]} : vector<8x512xf32> to vector<8x128xf32>
    %468 = arith.negf %467 : vector<8x128xf32>
    %469 = math.exp %468 : vector<8x128xf32>
    %cst_129 = arith.constant 1.000000e+00 : f32
    %470 = vector.broadcast %cst_129 : f32 to vector<8x128xf32>
    %471 = arith.addf %470, %469 : vector<8x128xf32>
    %472 = arith.divf %470, %471 : vector<8x128xf32>
    %473 = vector.extract_strided_slice %460 {offsets = [0, 256], sizes = [8, 128], strides = [1, 1]} : vector<8x512xf32> to vector<8x128xf32>
    %474 = math.tanh %473 : vector<8x128xf32>
    %475 = vector.extract_strided_slice %460 {offsets = [0, 384], sizes = [8, 128], strides = [1, 1]} : vector<8x512xf32> to vector<8x128xf32>
    %476 = arith.negf %475 : vector<8x128xf32>
    %477 = math.exp %476 : vector<8x128xf32>
    %cst_130 = arith.constant 1.000000e+00 : f32
    %478 = vector.broadcast %cst_130 : f32 to vector<8x128xf32>
    %479 = arith.addf %478, %477 : vector<8x128xf32>
    %480 = arith.divf %478, %479 : vector<8x128xf32>
    %481 = arith.mulf %472, %450 : vector<8x128xf32>
    %482 = arith.mulf %466, %474 : vector<8x128xf32>
    %483 = arith.addf %481, %482 : vector<8x128xf32>
    %484 = math.tanh %483 : vector<8x128xf32>
    %485 = arith.mulf %480, %484 : vector<8x128xf32>
    %486 = arith.index_cast %456 : i32 to index
    %c0_131 = arith.constant 0 : index
    %487 = vector.load %arg4[%486, %c0_131] : memref<72x128xf32, #tpu.memory_space<vmem>>, vector<8x128xf32>
    tpu.vector_store %arg4[%486, %c0_131], %485 {strides = array<i32>} : memref<72x128xf32, #tpu.memory_space<vmem>>, vector<8x128xf32>,
    %c5_i32_132 = arith.constant 5 : i32
    %c8_i32_133 = arith.constant 8 : i32
    %488 = arith.muli %c5_i32_132, %c8_i32_133 : i32
    %489 = tpu.assume_multiple %488, 8 : i32
    %490 = arith.index_cast %489 : i32 to index
    %c0_134 = arith.constant 0 : index
    %491 = vector.load %arg6[%490, %c0_134] : memref<72x512xf32, #tpu.memory_space<vmem>>, vector<8x512xf32>
    %cst_135 = arith.constant dense<0.000000e+00> : vector<8x512xf32>
    %492 = tpu.matmul %485, %320, %cst_135 {dimension_numbers = #tpu.dot_dimension_numbers<[1], [0], [0], [1], [0, 0, 1, 1], [], []>} : vector<8x128xf32>, vector<128x512xf32>, vector<8x512xf32> -> vector<8x512xf32>
    %493 = arith.addf %491, %492 : vector<8x512xf32>
    %494 = vector.extract_strided_slice %493 {offsets = [0, 0], sizes = [8, 128], strides = [1, 1]} : vector<8x512xf32> to vector<8x128xf32>
    %495 = arith.negf %494 : vector<8x128xf32>
    %496 = math.exp %495 : vector<8x128xf32>
    %cst_136 = arith.constant 1.000000e+00 : f32
    %497 = vector.broadcast %cst_136 : f32 to vector<8x128xf32>
    %498 = arith.addf %497, %496 : vector<8x128xf32>
    %499 = arith.divf %497, %498 : vector<8x128xf32>
    %500 = vector.extract_strided_slice %493 {offsets = [0, 128], sizes = [8, 128], strides = [1, 1]} : vector<8x512xf32> to vector<8x128xf32>
    %501 = arith.negf %500 : vector<8x128xf32>
    %502 = math.exp %501 : vector<8x128xf32>
    %cst_137 = arith.constant 1.000000e+00 : f32
    %503 = vector.broadcast %cst_137 : f32 to vector<8x128xf32>
    %504 = arith.addf %503, %502 : vector<8x128xf32>
    %505 = arith.divf %503, %504 : vector<8x128xf32>
    %506 = vector.extract_strided_slice %493 {offsets = [0, 256], sizes = [8, 128], strides = [1, 1]} : vector<8x512xf32> to vector<8x128xf32>
    %507 = math.tanh %506 : vector<8x128xf32>
    %508 = vector.extract_strided_slice %493 {offsets = [0, 384], sizes = [8, 128], strides = [1, 1]} : vector<8x512xf32> to vector<8x128xf32>
    %509 = arith.negf %508 : vector<8x128xf32>
    %510 = math.exp %509 : vector<8x128xf32>
    %cst_138 = arith.constant 1.000000e+00 : f32
    %511 = vector.broadcast %cst_138 : f32 to vector<8x128xf32>
    %512 = arith.addf %511, %510 : vector<8x128xf32>
    %513 = arith.divf %511, %512 : vector<8x128xf32>
    %514 = arith.mulf %505, %483 : vector<8x128xf32>
    %515 = arith.mulf %499, %507 : vector<8x128xf32>
    %516 = arith.addf %514, %515 : vector<8x128xf32>
    %517 = math.tanh %516 : vector<8x128xf32>
    %518 = arith.mulf %513, %517 : vector<8x128xf32>
    %519 = arith.index_cast %489 : i32 to index
    %c0_139 = arith.constant 0 : index
    %520 = vector.load %arg4[%519, %c0_139] : memref<72x128xf32, #tpu.memory_space<vmem>>, vector<8x128xf32>
    tpu.vector_store %arg4[%519, %c0_139], %518 {strides = array<i32>} : memref<72x128xf32, #tpu.memory_space<vmem>>, vector<8x128xf32>,
    %c6_i32_140 = arith.constant 6 : i32
    %c8_i32_141 = arith.constant 8 : i32
    %521 = arith.muli %c6_i32_140, %c8_i32_141 : i32
    %522 = tpu.assume_multiple %521, 8 : i32
    %523 = arith.index_cast %522 : i32 to index
    %c0_142 = arith.constant 0 : index
    %524 = vector.load %arg6[%523, %c0_142] : memref<72x512xf32, #tpu.memory_space<vmem>>, vector<8x512xf32>
    %cst_143 = arith.constant dense<0.000000e+00> : vector<8x512xf32>
    %525 = tpu.matmul %518, %320, %cst_143 {dimension_numbers = #tpu.dot_dimension_numbers<[1], [0], [0], [1], [0, 0, 1, 1], [], []>} : vector<8x128xf32>, vector<128x512xf32>, vector<8x512xf32> -> vector<8x512xf32>
    %526 = arith.addf %524, %525 : vector<8x512xf32>
    %527 = vector.extract_strided_slice %526 {offsets = [0, 0], sizes = [8, 128], strides = [1, 1]} : vector<8x512xf32> to vector<8x128xf32>
    %528 = arith.negf %527 : vector<8x128xf32>
    %529 = math.exp %528 : vector<8x128xf32>
    %cst_144 = arith.constant 1.000000e+00 : f32
    %530 = vector.broadcast %cst_144 : f32 to vector<8x128xf32>
    %531 = arith.addf %530, %529 : vector<8x128xf32>
    %532 = arith.divf %530, %531 : vector<8x128xf32>
    %533 = vector.extract_strided_slice %526 {offsets = [0, 128], sizes = [8, 128], strides = [1, 1]} : vector<8x512xf32> to vector<8x128xf32>
    %534 = arith.negf %533 : vector<8x128xf32>
    %535 = math.exp %534 : vector<8x128xf32>
    %cst_145 = arith.constant 1.000000e+00 : f32
    %536 = vector.broadcast %cst_145 : f32 to vector<8x128xf32>
    %537 = arith.addf %536, %535 : vector<8x128xf32>
    %538 = arith.divf %536, %537 : vector<8x128xf32>
    %539 = vector.extract_strided_slice %526 {offsets = [0, 256], sizes = [8, 128], strides = [1, 1]} : vector<8x512xf32> to vector<8x128xf32>
    %540 = math.tanh %539 : vector<8x128xf32>
    %541 = vector.extract_strided_slice %526 {offsets = [0, 384], sizes = [8, 128], strides = [1, 1]} : vector<8x512xf32> to vector<8x128xf32>
    %542 = arith.negf %541 : vector<8x128xf32>
    %543 = math.exp %542 : vector<8x128xf32>
    %cst_146 = arith.constant 1.000000e+00 : f32
    %544 = vector.broadcast %cst_146 : f32 to vector<8x128xf32>
    %545 = arith.addf %544, %543 : vector<8x128xf32>
    %546 = arith.divf %544, %545 : vector<8x128xf32>
    %547 = arith.mulf %538, %516 : vector<8x128xf32>
    %548 = arith.mulf %532, %540 : vector<8x128xf32>
    %549 = arith.addf %547, %548 : vector<8x128xf32>
    %550 = math.tanh %549 : vector<8x128xf32>
    %551 = arith.mulf %546, %550 : vector<8x128xf32>
    %552 = arith.index_cast %522 : i32 to index
    %c0_147 = arith.constant 0 : index
    %553 = vector.load %arg4[%552, %c0_147] : memref<72x128xf32, #tpu.memory_space<vmem>>, vector<8x128xf32>
    tpu.vector_store %arg4[%552, %c0_147], %551 {strides = array<i32>} : memref<72x128xf32, #tpu.memory_space<vmem>>, vector<8x128xf32>,
    %c7_i32_148 = arith.constant 7 : i32
    %c8_i32_149 = arith.constant 8 : i32
    %554 = arith.muli %c7_i32_148, %c8_i32_149 : i32
    %555 = tpu.assume_multiple %554, 8 : i32
    %556 = arith.index_cast %555 : i32 to index
    %c0_150 = arith.constant 0 : index
    %557 = vector.load %arg6[%556, %c0_150] : memref<72x512xf32, #tpu.memory_space<vmem>>, vector<8x512xf32>
    %cst_151 = arith.constant dense<0.000000e+00> : vector<8x512xf32>
    %558 = tpu.matmul %551, %320, %cst_151 {dimension_numbers = #tpu.dot_dimension_numbers<[1], [0], [0], [1], [0, 0, 1, 1], [], []>} : vector<8x128xf32>, vector<128x512xf32>, vector<8x512xf32> -> vector<8x512xf32>
    %559 = arith.addf %557, %558 : vector<8x512xf32>
    %560 = vector.extract_strided_slice %559 {offsets = [0, 0], sizes = [8, 128], strides = [1, 1]} : vector<8x512xf32> to vector<8x128xf32>
    %561 = arith.negf %560 : vector<8x128xf32>
    %562 = math.exp %561 : vector<8x128xf32>
    %cst_152 = arith.constant 1.000000e+00 : f32
    %563 = vector.broadcast %cst_152 : f32 to vector<8x128xf32>
    %564 = arith.addf %563, %562 : vector<8x128xf32>
    %565 = arith.divf %563, %564 : vector<8x128xf32>
    %566 = vector.extract_strided_slice %559 {offsets = [0, 128], sizes = [8, 128], strides = [1, 1]} : vector<8x512xf32> to vector<8x128xf32>
    %567 = arith.negf %566 : vector<8x128xf32>
    %568 = math.exp %567 : vector<8x128xf32>
    %cst_153 = arith.constant 1.000000e+00 : f32
    %569 = vector.broadcast %cst_153 : f32 to vector<8x128xf32>
    %570 = arith.addf %569, %568 : vector<8x128xf32>
    %571 = arith.divf %569, %570 : vector<8x128xf32>
    %572 = vector.extract_strided_slice %559 {offsets = [0, 256], sizes = [8, 128], strides = [1, 1]} : vector<8x512xf32> to vector<8x128xf32>
    %573 = math.tanh %572 : vector<8x128xf32>
    %574 = vector.extract_strided_slice %559 {offsets = [0, 384], sizes = [8, 128], strides = [1, 1]} : vector<8x512xf32> to vector<8x128xf32>
    %575 = arith.negf %574 : vector<8x128xf32>
    %576 = math.exp %575 : vector<8x128xf32>
    %cst_154 = arith.constant 1.000000e+00 : f32
    %577 = vector.broadcast %cst_154 : f32 to vector<8x128xf32>
    %578 = arith.addf %577, %576 : vector<8x128xf32>
    %579 = arith.divf %577, %578 : vector<8x128xf32>
    %580 = arith.mulf %571, %549 : vector<8x128xf32>
    %581 = arith.mulf %565, %573 : vector<8x128xf32>
    %582 = arith.addf %580, %581 : vector<8x128xf32>
    %583 = math.tanh %582 : vector<8x128xf32>
    %584 = arith.mulf %579, %583 : vector<8x128xf32>
    %585 = arith.index_cast %555 : i32 to index
    %c0_155 = arith.constant 0 : index
    %586 = vector.load %arg4[%585, %c0_155] : memref<72x128xf32, #tpu.memory_space<vmem>>, vector<8x128xf32>
    tpu.vector_store %arg4[%585, %c0_155], %584 {strides = array<i32>} : memref<72x128xf32, #tpu.memory_space<vmem>>, vector<8x128xf32>,
    %c8_i32_156 = arith.constant 8 : i32
    %c8_i32_157 = arith.constant 8 : i32
    %587 = arith.muli %c8_i32_156, %c8_i32_157 : i32
    %588 = tpu.assume_multiple %587, 8 : i32
    %589 = arith.index_cast %588 : i32 to index
    %c0_158 = arith.constant 0 : index
    %590 = vector.load %arg6[%589, %c0_158] : memref<72x512xf32, #tpu.memory_space<vmem>>, vector<8x512xf32>
    %cst_159 = arith.constant dense<0.000000e+00> : vector<8x512xf32>
    %591 = tpu.matmul %584, %320, %cst_159 {dimension_numbers = #tpu.dot_dimension_numbers<[1], [0], [0], [1], [0, 0, 1, 1], [], []>} : vector<8x128xf32>, vector<128x512xf32>, vector<8x512xf32> -> vector<8x512xf32>
    %592 = arith.addf %590, %591 : vector<8x512xf32>
    %593 = vector.extract_strided_slice %592 {offsets = [0, 0], sizes = [8, 128], strides = [1, 1]} : vector<8x512xf32> to vector<8x128xf32>
    %594 = arith.negf %593 : vector<8x128xf32>
    %595 = math.exp %594 : vector<8x128xf32>
    %cst_160 = arith.constant 1.000000e+00 : f32
    %596 = vector.broadcast %cst_160 : f32 to vector<8x128xf32>
    %597 = arith.addf %596, %595 : vector<8x128xf32>
    %598 = arith.divf %596, %597 : vector<8x128xf32>
    %599 = vector.extract_strided_slice %592 {offsets = [0, 128], sizes = [8, 128], strides = [1, 1]} : vector<8x512xf32> to vector<8x128xf32>
    %600 = arith.negf %599 : vector<8x128xf32>
    %601 = math.exp %600 : vector<8x128xf32>
    %cst_161 = arith.constant 1.000000e+00 : f32
    %602 = vector.broadcast %cst_161 : f32 to vector<8x128xf32>
    %603 = arith.addf %602, %601 : vector<8x128xf32>
    %604 = arith.divf %602, %603 : vector<8x128xf32>
    %605 = vector.extract_strided_slice %592 {offsets = [0, 256], sizes = [8, 128], strides = [1, 1]} : vector<8x512xf32> to vector<8x128xf32>
    %606 = math.tanh %605 : vector<8x128xf32>
    %607 = vector.extract_strided_slice %592 {offsets = [0, 384], sizes = [8, 128], strides = [1, 1]} : vector<8x512xf32> to vector<8x128xf32>
    %608 = arith.negf %607 : vector<8x128xf32>
    %609 = math.exp %608 : vector<8x128xf32>
    %cst_162 = arith.constant 1.000000e+00 : f32
    %610 = vector.broadcast %cst_162 : f32 to vector<8x128xf32>
    %611 = arith.addf %610, %609 : vector<8x128xf32>
    %612 = arith.divf %610, %611 : vector<8x128xf32>
    %613 = arith.mulf %604, %582 : vector<8x128xf32>
    %614 = arith.mulf %598, %606 : vector<8x128xf32>
    %615 = arith.addf %613, %614 : vector<8x128xf32>
    %616 = math.tanh %615 : vector<8x128xf32>
    %617 = arith.mulf %612, %616 : vector<8x128xf32>
    %618 = arith.index_cast %588 : i32 to index
    %c0_163 = arith.constant 0 : index
    %619 = vector.load %arg4[%618, %c0_163] : memref<72x128xf32, #tpu.memory_space<vmem>>, vector<8x128xf32>
    tpu.vector_store %arg4[%618, %c0_163], %617 {strides = array<i32>} : memref<72x128xf32, #tpu.memory_space<vmem>>, vector<8x128xf32>,
    %c9_i32_164 = arith.constant 9 : i32
    return
  }
}

</mosaic_0001>

<llo_original>
// kernel: tpu_custom_call.1
$region0: #{tpu_custom_call.1}
  #allocation0 [shape = 'u32[]', space=smem, size = 0x4, offset = 0x4, fixed_abs, tag = 'smem constant byte address 0x4 - core index']
  #allocation1 [shape = 'u32[144,128]{1,0:T(1,128)}', space=vmem, size = 0x12000, scoped, tag = 'internal scratch']
  #allocation2 [shape = 'f32[72,128]{1,0:T(8,128)}', space=vmem, size = 0x9000, scoped, tag = 'scratch operand']
  #allocation3 [shape = 'f32[72,512]{1,0:T(8,128)}', space=vmem, size = 0x24000, scoped, tag = 'scratch operand']
  %s0 = inlined_call_operand.hbm [shape: f32[72,128], index: 0, kind: input, shape index: {}]
  %s1 = inlined_call_operand.hbm [shape: f32[2,128,512], index: 1, kind: input, shape index: {}]
  %s2 = inlined_call_operand.hbm [shape: f32[2,128,512], index: 2, kind: input, shape index: {}]
  %s3 = inlined_call_operand.vmem [shape: f32[2,1,512], index: 3, kind: input, shape index: {}]
  %s4 = inlined_call_operand.hbm [shape: f32[72,128], index: 4, kind: output, shape index: {}]
  %s5 = sld [smem:[#allocation0]]
  $region38: #{tpu_custom_call.1} parent=0
    _
  %s7 = ssub.s32 1, %s5
  %s8 = scalar_select 0, %s7, %s5
  $region1: #{tpu_custom_call.1} parent=0
    #allocation4 [shape = 'u8[36864]{0}', space=vmem, size = 0x9000, scoped, tag = 'input window, operand 0, single buffered']
    #allocation5 [shape = 's32[1]{0}', space=sflag, size = 0x4, scoped, tag = 'scoped memory for tpu_custom_call.1']
    #allocation6 [shape = 's32[1]{0}', space=sflag, size = 0x4, scoped, tag = 'scoped memory for tpu_custom_call.1']
    #allocation7 [shape = 'u8[524288]{0}', space=vmem, size = 0x80000, scoped, tag = 'input window, operand 1, single buffered']
    #allocation8 [shape = 's32[1]{0}', space=sflag, size = 0x4, scoped, tag = 'scoped memory for tpu_custom_call.1']
    #allocation9 [shape = 'u8[524288]{0}', space=vmem, size = 0x80000, scoped, tag = 'input window, operand 2, single buffered']
    #allocation10 [shape = 'u8[36864]{0}', space=vmem, size = 0x9000, scoped, tag = 'output window, operand 0, single buffered']
    %9 = vsyncpa [#allocation5], 0
    %10 = vsyncpa [#allocation8], 0
    %11 = vsyncpa [#allocation6], 0
    // Predicated region
    $region2: #{tpu_custom_call.1} parent=1 // pred_check
      _
    $region3: #{tpu_custom_call.1} parent=1 // pred_check_branch
      %13 = sbr.rel (0) target = $region5
    $region4: #{tpu_custom_call.1} parent=1 // pred_region
      %s15 = ssub.s32 1152, 1152
      %16 = vsyncadd [#allocation5], %s15
      %s17 = sshll.u32 [#allocation4], 4
      %s18 = int_to_ptr.vmem [resolvable:$true] %s17
      %23 = dma.hbm_to_vmem [thread:$0]  %s0, 1152, %s18, [#allocation5], 128, 128, 8
    $region5: #{tpu_custom_call.1} parent=1 // pred_fallthru
      _
    // Predicated region
    $region6: #{tpu_custom_call.1} parent=1 // pred_check
      _
    $region7: #{tpu_custom_call.1} parent=1 // pred_check_branch
      %25 = sbr.rel (0) target = $region9
    $region8: #{tpu_custom_call.1} parent=1 // pred_region
      %s27 = ssub.s32 16384, 16384
      %28 = vsyncadd [#allocation8], %s27
      %s29 = sshll.u32 [#allocation7], 4
      %s30 = int_to_ptr.vmem [resolvable:$true] %s29
      %35 = dma.hbm_to_vmem [thread:$0]  %s1, 16384, %s30, [#allocation8], 512, 512, 32
    $region9: #{tpu_custom_call.1} parent=1 // pred_fallthru
      _
    // Predicated region
    $region10: #{tpu_custom_call.1} parent=1 // pred_check
      _
    $region11: #{tpu_custom_call.1} parent=1 // pred_check_branch
      %37 = sbr.rel (0) target = $region13
    $region12: #{tpu_custom_call.1} parent=1 // pred_region
      %s39 = ssub.s32 16384, 16384
      %40 = vsyncadd [#allocation8], %s39
      %s41 = sshll.u32 [#allocation9], 4
      %s42 = int_to_ptr.vmem [resolvable:$true] %s41
      %47 = dma.hbm_to_vmem [thread:$0]  %s2, 16384, %s42, [#allocation8], 512, 512, 32
    $region13: #{tpu_custom_call.1} parent=1 // pred_fallthru
      _
    // Predicated region
    $region14: #{tpu_custom_call.1} parent=1 // pred_check
      _
    $region15: #{tpu_custom_call.1} parent=1 // pred_check_branch
      %49 = sbr.rel (0) target = $region17
    $region16: #{tpu_custom_call.1} parent=1 // pred_region
      _
    $region17: #{tpu_custom_call.1} parent=1 // pred_fallthru
      _
    // Predicated region
    $region18: #{tpu_custom_call.1} parent=1 // pred_check
      _
    $region19: #{tpu_custom_call.1} parent=1 // pred_check_branch
      %51 = sbr.rel (0) target = $region21
    $region20: #{tpu_custom_call.1} parent=1 // pred_region
      %52 = dma.done [#allocation5], 1152
    $region21: #{tpu_custom_call.1} parent=1 // pred_fallthru
      _
    // Predicated region
    $region22: #{tpu_custom_call.1} parent=1 // pred_check
      _
    $region23: #{tpu_custom_call.1} parent=1 // pred_check_branch
      %54 = sbr.rel (0) target = $region25
    $region24: #{tpu_custom_call.1} parent=1 // pred_region
      %55 = dma.done [#allocation8], 16384
    $region25: #{tpu_custom_call.1} parent=1 // pred_fallthru
      _
    // Predicated region
    $region26: #{tpu_custom_call.1} parent=1 // pred_check
      _
    $region27: #{tpu_custom_call.1} parent=1 // pred_check_branch
      %57 = sbr.rel (0) target = $region29
    $region28: #{tpu_custom_call.1} parent=1 // pred_region
      %58 = dma.done [#allocation8], 16384
    $region29: #{tpu_custom_call.1} parent=1 // pred_fallthru
      _
    %v59 = vld [vmem:[#allocation4] sm:$0xff]
    %v60 = vld [vmem:[#allocation4 + $0x8] sm:$0xff]
    %v61 = vld [vmem:[#allocation4 + $0x10] sm:$0xff]
    %v62 = vld [vmem:[#allocation4 + $0x18] sm:$0xff]
    %v63 = vld [vmem:[#allocation4 + $0x20] sm:$0xff]
    %v64 = vld [vmem:[#allocation4 + $0x28] sm:$0xff]
    %v65 = vld [vmem:[#allocation4 + $0x30] sm:$0xff]
    %v66 = vld [vmem:[#allocation4 + $0x38] sm:$0xff]
    %v67 = vld [vmem:[#allocation4 + $0x40] sm:$0xff]
    %v68 = vld [vmem:[#allocation7] sm:$0xff]
    %v69 = vld [vmem:[#allocation7 + $0x8] sm:$0xff]
    %v70 = vld [vmem:[#allocation7 + $0x10] sm:$0xff]
    %v71 = vld [vmem:[#allocation7 + $0x18] sm:$0xff]
    %v72 = vld [vmem:[#allocation7 + $0x20] sm:$0xff]
    %v73 = vld [vmem:[#allocation7 + $0x28] sm:$0xff]
    %v74 = vld [vmem:[#allocation7 + $0x30] sm:$0xff]
    %v75 = vld [vmem:[#allocation7 + $0x38] sm:$0xff]
    %v76 = vld [vmem:[#allocation7 + $0x40] sm:$0xff]
    %v77 = vld [vmem:[#allocation7 + $0x48] sm:$0xff]
    %v78 = vld [vmem:[#allocation7 + $0x50] sm:$0xff]
    %v79 = vld [vmem:[#allocation7 + $0x58] sm:$0xff]
    %v80 = vld [vmem:[#allocation7 + $0x60] sm:$0xff]
    %v81 = vld [vmem:[#allocation7 + $0x68] sm:$0xff]
    %v82 = vld [vmem:[#allocation7 + $0x70] sm:$0xff]
    %v83 = vld [vmem:[#allocation7 + $0x78] sm:$0xff]
    %v84 = vld [vmem:[#allocation7 + $0x80] sm:$0xff]
    %v85 = vld [vmem:[#allocation7 + $0x88] sm:$0xff]
    %v86 = vld [vmem:[#allocation7 + $0x90] sm:$0xff]
    %v87 = vld [vmem:[#allocation7 + $0x98] sm:$0xff]
    %v88 = vld [vmem:[#allocation7 + $0xa0] sm:$0xff]
    %v89 = vld [vmem:[#allocation7 + $0xa8] sm:$0xff]
    %v90 = vld [vmem:[#allocation7 + $0xb0] sm:$0xff]
    %v91 = vld [vmem:[#allocation7 + $0xb8] sm:$0xff]
    %v92 = vld [vmem:[#allocation7 + $0xc0] sm:$0xff]
    %v93 = vld [vmem:[#allocation7 + $0xc8] sm:$0xff]
    %v94 = vld [vmem:[#allocation7 + $0xd0] sm:$0xff]
    %v95 = vld [vmem:[#allocation7 + $0xd8] sm:$0xff]
    %v96 = vld [vmem:[#allocation7 + $0xe0] sm:$0xff]
    %v97 = vld [vmem:[#allocation7 + $0xe8] sm:$0xff]
    %v98 = vld [vmem:[#allocation7 + $0xf0] sm:$0xff]
    %v99 = vld [vmem:[#allocation7 + $0xf8] sm:$0xff]
    %v100 = vld [vmem:[#allocation7 + $0x100] sm:$0xff]
    %v101 = vld [vmem:[#allocation7 + $0x108] sm:$0xff]
    %v102 = vld [vmem:[#allocation7 + $0x110] sm:$0xff]
    %v103 = vld [vmem:[#allocation7 + $0x118] sm:$0xff]
    %v104 = vld [vmem:[#allocation7 + $0x120] sm:$0xff]
    %v105 = vld [vmem:[#allocation7 + $0x128] sm:$0xff]
    %v106 = vld [vmem:[#allocation7 + $0x130] sm:$0xff]
    %v107 = vld [vmem:[#allocation7 + $0x138] sm:$0xff]
    %v108 = vld [vmem:[#allocation7 + $0x140] sm:$0xff]
    %v109 = vld [vmem:[#allocation7 + $0x148] sm:$0xff]
    %v110 = vld [vmem:[#allocation7 + $0x150] sm:$0xff]
    %v111 = vld [vmem:[#allocation7 + $0x158] sm:$0xff]
    %v112 = vld [vmem:[#allocation7 + $0x160] sm:$0xff]
    %v113 = vld [vmem:[#allocation7 + $0x168] sm:$0xff]
    %v114 = vld [vmem:[#allocation7 + $0x170] sm:$0xff]
    %v115 = vld [vmem:[#allocation7 + $0x178] sm:$0xff]
    %v116 = vld [vmem:[#allocation7 + $0x180] sm:$0xff]
    %v117 = vld [vmem:[#allocation7 + $0x188] sm:$0xff]
    %v118 = vld [vmem:[#allocation7 + $0x190] sm:$0xff]
    %v119 = vld [vmem:[#allocation7 + $0x198] sm:$0xff]
    %v120 = vld [vmem:[#allocation7 + $0x1a0] sm:$0xff]
    %v121 = vld [vmem:[#allocation7 + $0x1a8] sm:$0xff]
    %v122 = vld [vmem:[#allocation7 + $0x1b0] sm:$0xff]
    %v123 = vld [vmem:[#allocation7 + $0x1b8] sm:$0xff]
    %v124 = vld [vmem:[#allocation7 + $0x1c0] sm:$0xff]
    %v125 = vld [vmem:[#allocation7 + $0x1c8] sm:$0xff]
    %v126 = vld [vmem:[#allocation7 + $0x1d0] sm:$0xff]
    %v127 = vld [vmem:[#allocation7 + $0x1d8] sm:$0xff]
    %v128 = vld [vmem:[#allocation7 + $0x1e0] sm:$0xff]
    %v129 = vld [vmem:[#allocation7 + $0x1e8] sm:$0xff]
    %v130 = vld [vmem:[#allocation7 + $0x1f0] sm:$0xff]
    %v131 = vld [vmem:[#allocation7 + $0x1f8] sm:$0xff]
    %v132 = vld [vmem:[%s3] sm:$0xf]
    %v134 = vlaneseq
    %v135 = vshrl.u32 %v134, 7
    %v136 = vsub.s32 0, %v135
    %v137 = vrot.slane %v132, %v136
    %v138 = vlaneseq
    %v139 = vshrl.u32 %v138, 7
    %v140 = vsub.s32 1, %v139
    %v141 = vrot.slane %v132, %v140
    %v142 = vlaneseq
    %v143 = vshrl.u32 %v142, 7
    %v144 = vsub.s32 2, %v143
    %v145 = vrot.slane %v132, %v144
    %v146 = vlaneseq
    %v147 = vshrl.u32 %v146, 7
    %v148 = vsub.s32 3, %v147
    %v149 = vrot.slane %v132, %v148
    %154 = vmatprep.subr.mxu0 %v69
    %155 = vmatpush1.msra.mxu0 %v68
    %156 = vmatprep.subr.mxu0 %v73
    %157 = vmatpush1.msra.mxu0 %v72
    %158 = vmatprep.subr.mxu0 %v77
    %159 = vmatpush1.msra.mxu0 %v76
    %160 = vmatprep.subr.mxu0 %v81
    %161 = vmatpush1.msra.mxu0 %v80
    %162 = vmatprep.subr.mxu0 %v85
    %163 = vmatpush1.msra.mxu0 %v84
    %164 = vmatprep.subr.mxu0 %v89
    %165 = vmatpush1.msra.mxu0 %v88
    %166 = vmatprep.subr.mxu0 %v93
    %167 = vmatpush1.msra.mxu0 %v92
    %168 = vmatprep.subr.mxu0 %v97
    %169 = vmatpush1.msra.mxu0 %v96
    %170 = vmatprep.subr.mxu0 %v101
    %171 = vmatpush1.msra.mxu0 %v100
    %172 = vmatprep.subr.mxu0 %v105
    %173 = vmatpush1.msra.mxu0 %v104
    %174 = vmatprep.subr.mxu0 %v109
    %175 = vmatpush1.msra.mxu0 %v108
    %176 = vmatprep.subr.mxu0 %v113
    %177 = vmatpush1.msra.mxu0 %v112
    %178 = vmatprep.subr.mxu0 %v117
    %179 = vmatpush1.msra.mxu0 %v116
    %180 = vmatprep.subr.mxu0 %v121
    %181 = vmatpush1.msra.mxu0 %v120
    %182 = vmatprep.subr.mxu0 %v125
    %183 = vmatpush1.msra.mxu0 %v124
    %184 = vmatprep.subr.mxu0 %v129
    %185 = vmatpush1.msra.mxu0 %v128
    %186 = vmatprep.subr.mxu0 0.0
    %187 = vmatpush1.msra.mxu0 0.0
    %188 = vmatprep.subr.mxu0 0.0
    %189 = vmatpush1.msra.mxu0 0.0
    %190 = vmatprep.subr.mxu0 0.0
    %191 = vmatpush1.msra.mxu0 0.0
    %192 = vmatprep.subr.mxu0 0.0
    %193 = vmatpush1.msra.mxu0 0.0
    %194 = vmatprep.subr.mxu0 0.0
    %195 = vmatpush1.msra.mxu0 0.0
    %196 = vmatprep.subr.mxu0 0.0
    %197 = vmatpush1.msra.mxu0 0.0
    %198 = vmatprep.subr.mxu0 0.0
    %199 = vmatpush1.msra.mxu0 0.0
    %200 = vmatprep.subr.mxu0 0.0
    %201 = vmatpush1.msra.mxu0 0.0
    %202 = vmatprep.subr.mxu0 0.0
    %203 = vmatpush1.msra.mxu0 0.0
    %204 = vmatprep.subr.mxu0 0.0
    %205 = vmatpush1.msra.mxu0 0.0
    %206 = vmatprep.subr.mxu0 0.0
    %207 = vmatpush1.msra.mxu0 0.0
    %208 = vmatprep.subr.mxu0 0.0
    %209 = vmatpush1.msra.mxu0 0.0
    %210 = vmatprep.subr.mxu0 0.0
    %211 = vmatpush1.msra.mxu0 0.0
    %212 = vmatprep.subr.mxu0 0.0
    %213 = vmatpush1.msra.mxu0 0.0
    %214 = vmatprep.subr.mxu0 0.0
    %215 = vmatpush1.msra.mxu0 0.0
    %216 = vmatprep.subr.mxu0 0.0
    %217 = vmatpush1.msra.mxu0 0.0
    %218 = vmatprep.mubr.f32.mxu0 0.0
    %219 = vmatmul.mubr.f32.gmra.mrb[0].mxu0 %v59
    %v220 = vpop.f32.mrb[0].mxu0
    %v221 = vadd.f32 %v137, %v220
    %v222 = vpop.f32.mrb[0].mxu0
    %v223 = vadd.f32 %v141, %v222
    %224 = vmatprep.mubr.f32.mxu0 0.0
    %225 = vmatmul.mubr.f32.gmra.mrb[0].mxu0 %v60
    %v226 = vpop.f32.mrb[0].mxu0
    %v227 = vadd.f32 %v137, %v226
    %v228 = vpop.f32.mrb[0].mxu0
    %v229 = vadd.f32 %v141, %v228
    %230 = vmatprep.mubr.f32.mxu0 0.0
    %231 = vmatmul.mubr.f32.gmra.mrb[0].mxu0 %v61
    %v232 = vpop.f32.mrb[0].mxu0
    %v233 = vadd.f32 %v137, %v232
    %v234 = vpop.f32.mrb[0].mxu0
    %v235 = vadd.f32 %v141, %v234
    %236 = vmatprep.mubr.f32.mxu0 0.0
    %237 = vmatmul.mubr.f32.gmra.mrb[0].mxu0 %v62
    %v238 = vpop.f32.mrb[0].mxu0
    %v239 = vadd.f32 %v137, %v238
    %v240 = vpop.f32.mrb[0].mxu0
    %v241 = vadd.f32 %v141, %v240
    %242 = vmatprep.mubr.f32.mxu0 0.0
    %243 = vmatmul.mubr.f32.gmra.mrb[0].mxu0 %v63
    %v244 = vpop.f32.mrb[0].mxu0
    %v245 = vadd.f32 %v137, %v244
    %v246 = vpop.f32.mrb[0].mxu0
    %v247 = vadd.f32 %v141, %v246
    %248 = vmatprep.mubr.f32.mxu0 0.0
    %249 = vmatmul.mubr.f32.gmra.mrb[0].mxu0 %v64
    %v250 = vpop.f32.mrb[0].mxu0
    %v251 = vadd.f32 %v137, %v250
    %v252 = vpop.f32.mrb[0].mxu0
    %v253 = vadd.f32 %v141, %v252
    %254 = vmatprep.mubr.f32.mxu0 0.0
    %255 = vmatmul.mubr.f32.gmra.mrb[0].mxu0 %v65
    %v256 = vpop.f32.mrb[0].mxu0
    %v257 = vadd.f32 %v137, %v256
    %v258 = vpop.f32.mrb[0].mxu0
    %v259 = vadd.f32 %v141, %v258
    %260 = vmatprep.mubr.f32.mxu0 0.0
    %261 = vmatmul.mubr.f32.gmra.mrb[0].mxu0 %v66
    %v262 = vpop.f32.mrb[0].mxu0
    %v263 = vadd.f32 %v137, %v262
    %v264 = vpop.f32.mrb[0].mxu0
    %v265 = vadd.f32 %v141, %v264
    %266 = vmatprep.mubr.f32.mxu0 0.0
    %267 = vmatmul.mubr.f32.gmra.mrb[0].mxu0 %v67
    %v268 = vpop.f32.mrb[0].mxu0
    %v269 = vadd.f32 %v137, %v268
    %v270 = vpop.f32.mrb[0].mxu0
    %v271 = vadd.f32 %v141, %v270
    %272 = vdwg.mxu0
    %273 = vmatprep.subr.mxu0 %v71
    %274 = vmatpush1.msra.mxu0 %v70
    %275 = vmatprep.subr.mxu0 %v75
    %276 = vmatpush1.msra.mxu0 %v74
    %277 = vmatprep.subr.mxu0 %v79
    %278 = vmatpush1.msra.mxu0 %v78
    %279 = vmatprep.subr.mxu0 %v83
    %280 = vmatpush1.msra.mxu0 %v82
    %281 = vmatprep.subr.mxu0 %v87
    %282 = vmatpush1.msra.mxu0 %v86
    %283 = vmatprep.subr.mxu0 %v91
    %284 = vmatpush1.msra.mxu0 %v90
    %285 = vmatprep.subr.mxu0 %v95
    %286 = vmatpush1.msra.mxu0 %v94
    %287 = vmatprep.subr.mxu0 %v99
    %288 = vmatpush1.msra.mxu0 %v98
    %289 = vmatprep.subr.mxu0 %v103
    %290 = vmatpush1.msra.mxu0 %v102
    %291 = vmatprep.subr.mxu0 %v107
    %292 = vmatpush1.msra.mxu0 %v106
    %293 = vmatprep.subr.mxu0 %v111
    %294 = vmatpush1.msra.mxu0 %v110
    %295 = vmatprep.subr.mxu0 %v115
    %296 = vmatpush1.msra.mxu0 %v114
    %297 = vmatprep.subr.mxu0 %v119
    %298 = vmatpush1.msra.mxu0 %v118
    %299 = vmatprep.subr.mxu0 %v123
    %300 = vmatpush1.msra.mxu0 %v122
    %301 = vmatprep.subr.mxu0 %v127
    %302 = vmatpush1.msra.mxu0 %v126
    %303 = vmatprep.subr.mxu0 %v131
    %304 = vmatpush1.msra.mxu0 %v130
    %305 = vmatprep.subr.mxu0 0.0
    %306 = vmatpush1.msra.mxu0 0.0
    %307 = vmatprep.subr.mxu0 0.0
    %308 = vmatpush1.msra.mxu0 0.0
    %309 = vmatprep.subr.mxu0 0.0
    %310 = vmatpush1.msra.mxu0 0.0
    %311 = vmatprep.subr.mxu0 0.0
    %312 = vmatpush1.msra.mxu0 0.0
    %313 = vmatprep.subr.mxu0 0.0
    %314 = vmatpush1.msra.mxu0 0.0
    %315 = vmatprep.subr.mxu0 0.0
    %316 = vmatpush1.msra.mxu0 0.0
    %317 = vmatprep.subr.mxu0 0.0
    %318 = vmatpush1.msra.mxu0 0.0
    %319 = vmatprep.subr.mxu0 0.0
    %320 = vmatpush1.msra.mxu0 0.0
    %321 = vmatprep.subr.mxu0 0.0
    %322 = vmatpush1.msra.mxu0 0.0
    %323 = vmatprep.subr.mxu0 0.0
    %324 = vmatpush1.msra.mxu0 0.0
    %325 = vmatprep.subr.mxu0 0.0
    %326 = vmatpush1.msra.mxu0 0.0
    %327 = vmatprep.subr.mxu0 0.0
    %328 = vmatpush1.msra.mxu0 0.0
    %329 = vmatprep.subr.mxu0 0.0
    %330 = vmatpush1.msra.mxu0 0.0
    %331 = vmatprep.subr.mxu0 0.0
    %332 = vmatpush1.msra.mxu0 0.0
    %333 = vmatprep.subr.mxu0 0.0
    %334 = vmatpush1.msra.mxu0 0.0
    %335 = vmatprep.subr.mxu0 0.0
    %336 = vmatpush1.msra.mxu0 0.0
    %337 = vmatprep.mubr.f32.mxu0 0.0
    %338 = vmatmul.mubr.f32.gmra.mrb[0].mxu0 %v59
    %v339 = vpop.f32.mrb[0].mxu0
    %v340 = vadd.f32 %v145, %v339
    %v341 = vpop.f32.mrb[0].mxu0
    %v342 = vadd.f32 %v149, %v341
    %343 = vmatprep.mubr.f32.mxu0 0.0
    %344 = vmatmul.mubr.f32.gmra.mrb[0].mxu0 %v60
    %v345 = vpop.f32.mrb[0].mxu0
    %v346 = vadd.f32 %v145, %v345
    %v347 = vpop.f32.mrb[0].mxu0
    %v348 = vadd.f32 %v149, %v347
    %349 = vmatprep.mubr.f32.mxu0 0.0
    %350 = vmatmul.mubr.f32.gmra.mrb[0].mxu0 %v61
    %v351 = vpop.f32.mrb[0].mxu0
    %v352 = vadd.f32 %v145, %v351
    %v353 = vpop.f32.mrb[0].mxu0
    %v354 = vadd.f32 %v149, %v353
    %355 = vmatprep.mubr.f32.mxu0 0.0
    %356 = vmatmul.mubr.f32.gmra.mrb[0].mxu0 %v62
    %v357 = vpop.f32.mrb[0].mxu0
    %v358 = vadd.f32 %v145, %v357
    %v359 = vpop.f32.mrb[0].mxu0
    %v360 = vadd.f32 %v149, %v359
    %361 = vmatprep.mubr.f32.mxu0 0.0
    %362 = vmatmul.mubr.f32.gmra.mrb[0].mxu0 %v63
    %v363 = vpop.f32.mrb[0].mxu0
    %v364 = vadd.f32 %v145, %v363
    %v365 = vpop.f32.mrb[0].mxu0
    %v366 = vadd.f32 %v149, %v365
    %367 = vmatprep.mubr.f32.mxu0 0.0
    %368 = vmatmul.mubr.f32.gmra.mrb[0].mxu0 %v64
    %v369 = vpop.f32.mrb[0].mxu0
    %v370 = vadd.f32 %v145, %v369
    %v371 = vpop.f32.mrb[0].mxu0
    %v372 = vadd.f32 %v149, %v371
    %373 = vmatprep.mubr.f32.mxu0 0.0
    %374 = vmatmul.mubr.f32.gmra.mrb[0].mxu0 %v65
    %v375 = vpop.f32.mrb[0].mxu0
    %v376 = vadd.f32 %v145, %v375
    %v377 = vpop.f32.mrb[0].mxu0
    %v378 = vadd.f32 %v149, %v377
    %379 = vmatprep.mubr.f32.mxu0 0.0
    %380 = vmatmul.mubr.f32.gmra.mrb[0].mxu0 %v66
    %v381 = vpop.f32.mrb[0].mxu0
    %v382 = vadd.f32 %v145, %v381
    %v383 = vpop.f32.mrb[0].mxu0
    %v384 = vadd.f32 %v149, %v383
    %385 = vmatprep.mubr.f32.mxu0 0.0
    %386 = vmatmul.mubr.f32.gmra.mrb[0].mxu0 %v67
    %v387 = vpop.f32.mrb[0].mxu0
    %v388 = vadd.f32 %v145, %v387
    %v389 = vpop.f32.mrb[0].mxu0
    %v390 = vadd.f32 %v149, %v389
    %391 = vdwg.mxu0
    %392 = vst [vmem:[#allocation3] sm:$0xff] %v221
    %393 = vst [vmem:[#allocation3 + $0x8] sm:$0xff] %v223
    %394 = vst [vmem:[#allocation3 + $0x10] sm:$0xff] %v340
    %395 = vst [vmem:[#allocation3 + $0x18] sm:$0xff] %v342
    %396 = vst [vmem:[#allocation3 + $0x20] sm:$0xff] %v227
    %397 = vst [vmem:[#allocation3 + $0x28] sm:$0xff] %v229
    %398 = vst [vmem:[#allocation3 + $0x30] sm:$0xff] %v346
    %399 = vst [vmem:[#allocation3 + $0x38] sm:$0xff] %v348
    %400 = vst [vmem:[#allocation3 + $0x40] sm:$0xff] %v233
    %401 = vst [vmem:[#allocation3 + $0x48] sm:$0xff] %v235
    %402 = vst [vmem:[#allocation3 + $0x50] sm:$0xff] %v352
    %403 = vst [vmem:[#allocation3 + $0x58] sm:$0xff] %v354
    %404 = vst [vmem:[#allocation3 + $0x60] sm:$0xff] %v239
    %405 = vst [vmem:[#allocation3 + $0x68] sm:$0xff] %v241
    %406 = vst [vmem:[#allocation3 + $0x70] sm:$0xff] %v358
    %407 = vst [vmem:[#allocation3 + $0x78] sm:$0xff] %v360
    %408 = vst [vmem:[#allocation3 + $0x80] sm:$0xff] %v245
    %409 = vst [vmem:[#allocation3 + $0x88] sm:$0xff] %v247
    %410 = vst [vmem:[#allocation3 + $0x90] sm:$0xff] %v364
    %411 = vst [vmem:[#allocation3 + $0x98] sm:$0xff] %v366
    %412 = vst [vmem:[#allocation3 + $0xa0] sm:$0xff] %v251
    %413 = vst [vmem:[#allocation3 + $0xa8] sm:$0xff] %v253
    %414 = vst [vmem:[#allocation3 + $0xb0] sm:$0xff] %v370
    %415 = vst [vmem:[#allocation3 + $0xb8] sm:$0xff] %v372
    %416 = vst [vmem:[#allocation3 + $0xc0] sm:$0xff] %v257
    %417 = vst [vmem:[#allocation3 + $0xc8] sm:$0xff] %v259
    %418 = vst [vmem:[#allocation3 + $0xd0] sm:$0xff] %v376
    %419 = vst [vmem:[#allocation3 + $0xd8] sm:$0xff] %v378
    %420 = vst [vmem:[#allocation3 + $0xe0] sm:$0xff] %v263
    %421 = vst [vmem:[#allocation3 + $0xe8] sm:$0xff] %v265
    %422 = vst [vmem:[#allocation3 + $0xf0] sm:$0xff] %v382
    %423 = vst [vmem:[#allocation3 + $0xf8] sm:$0xff] %v384
    %424 = vst [vmem:[#allocation3 + $0x100] sm:$0xff] %v269
    %425 = vst [vmem:[#allocation3 + $0x108] sm:$0xff] %v271
    %426 = vst [vmem:[#allocation3 + $0x110] sm:$0xff] %v388
    %427 = vst [vmem:[#allocation3 + $0x118] sm:$0xff] %v390
    %v428 = vld [vmem:[#allocation9] sm:$0xff]
    %v429 = vld [vmem:[#allocation9 + $0x8] sm:$0xff]
    %v430 = vld [vmem:[#allocation9 + $0x10] sm:$0xff]
    %v431 = vld [vmem:[#allocation9 + $0x18] sm:$0xff]
    %v432 = vld [vmem:[#allocation9 + $0x20] sm:$0xff]
    %v433 = vld [vmem:[#allocation9 + $0x28] sm:$0xff]
    %v434 = vld [vmem:[#allocation9 + $0x30] sm:$0xff]
    %v435 = vld [vmem:[#allocation9 + $0x38] sm:$0xff]
    %v436 = vld [vmem:[#allocation9 + $0x40] sm:$0xff]
    %v437 = vld [vmem:[#allocation9 + $0x48] sm:$0xff]
    %v438 = vld [vmem:[#allocation9 + $0x50] sm:$0xff]
    %v439 = vld [vmem:[#allocation9 + $0x58] sm:$0xff]
    %v440 = vld [vmem:[#allocation9 + $0x60] sm:$0xff]
    %v441 = vld [vmem:[#allocation9 + $0x68] sm:$0xff]
    %v442 = vld [vmem:[#allocation9 + $0x70] sm:$0xff]
    %v443 = vld [vmem:[#allocation9 + $0x78] sm:$0xff]
    %v444 = vld [vmem:[#allocation9 + $0x80] sm:$0xff]
    %v445 = vld [vmem:[#allocation9 + $0x88] sm:$0xff]
    %v446 = vld [vmem:[#allocation9 + $0x90] sm:$0xff]
    %v447 = vld [vmem:[#allocation9 + $0x98] sm:$0xff]
    %v448 = vld [vmem:[#allocation9 + $0xa0] sm:$0xff]
    %v449 = vld [vmem:[#allocation9 + $0xa8] sm:$0xff]
    %v450 = vld [vmem:[#allocation9 + $0xb0] sm:$0xff]
    %v451 = vld [vmem:[#allocation9 + $0xb8] sm:$0xff]
    %v452 = vld [vmem:[#allocation9 + $0xc0] sm:$0xff]
    %v453 = vld [vmem:[#allocation9 + $0xc8] sm:$0xff]
    %v454 = vld [vmem:[#allocation9 + $0xd0] sm:$0xff]
    %v455 = vld [vmem:[#allocation9 + $0xd8] sm:$0xff]
    %v456 = vld [vmem:[#allocation9 + $0xe0] sm:$0xff]
    %v457 = vld [vmem:[#allocation9 + $0xe8] sm:$0xff]
    %v458 = vld [vmem:[#allocation9 + $0xf0] sm:$0xff]
    %v459 = vld [vmem:[#allocation9 + $0xf8] sm:$0xff]
    %v460 = vld [vmem:[#allocation9 + $0x100] sm:$0xff]
    %v461 = vld [vmem:[#allocation9 + $0x108] sm:$0xff]
    %v462 = vld [vmem:[#allocation9 + $0x110] sm:$0xff]
    %v463 = vld [vmem:[#allocation9 + $0x118] sm:$0xff]
    %v464 = vld [vmem:[#allocation9 + $0x120] sm:$0xff]
    %v465 = vld [vmem:[#allocation9 + $0x128] sm:$0xff]
    %v466 = vld [vmem:[#allocation9 + $0x130] sm:$0xff]
    %v467 = vld [vmem:[#allocation9 + $0x138] sm:$0xff]
    %v468 = vld [vmem:[#allocation9 + $0x140] sm:$0xff]
    %v469 = vld [vmem:[#allocation9 + $0x148] sm:$0xff]
    %v470 = vld [vmem:[#allocation9 + $0x150] sm:$0xff]
    %v471 = vld [vmem:[#allocation9 + $0x158] sm:$0xff]
    %v472 = vld [vmem:[#allocation9 + $0x160] sm:$0xff]
    %v473 = vld [vmem:[#allocation9 + $0x168] sm:$0xff]
    %v474 = vld [vmem:[#allocation9 + $0x170] sm:$0xff]
    %v475 = vld [vmem:[#allocation9 + $0x178] sm:$0xff]
    %v476 = vld [vmem:[#allocation9 + $0x180] sm:$0xff]
    %v477 = vld [vmem:[#allocation9 + $0x188] sm:$0xff]
    %v478 = vld [vmem:[#allocation9 + $0x190] sm:$0xff]
    %v479 = vld [vmem:[#allocation9 + $0x198] sm:$0xff]
    %v480 = vld [vmem:[#allocation9 + $0x1a0] sm:$0xff]
    %v481 = vld [vmem:[#allocation9 + $0x1a8] sm:$0xff]
    %v482 = vld [vmem:[#allocation9 + $0x1b0] sm:$0xff]
    %v483 = vld [vmem:[#allocation9 + $0x1b8] sm:$0xff]
    %v484 = vld [vmem:[#allocation9 + $0x1c0] sm:$0xff]
    %v485 = vld [vmem:[#allocation9 + $0x1c8] sm:$0xff]
    %v486 = vld [vmem:[#allocation9 + $0x1d0] sm:$0xff]
    %v487 = vld [vmem:[#allocation9 + $0x1d8] sm:$0xff]
    %v488 = vld [vmem:[#allocation9 + $0x1e0] sm:$0xff]
    %v489 = vld [vmem:[#allocation9 + $0x1e8] sm:$0xff]
    %v490 = vld [vmem:[#allocation9 + $0x1f0] sm:$0xff]
    %v491 = vld [vmem:[#allocation9 + $0x1f8] sm:$0xff]
    %s492 = smul.u32 0, 4
    %s493 = smul.addr %s492, 8
    %s494 = scalar_lea.vmem [#allocation3], %s493
    %v495 = vld [vmem:[%s494] sm:$0xff]
    %v496 = vld [vmem:[%s494 + $0x8] sm:$0xff]
    %v497 = vld [vmem:[%s494 + $0x10] sm:$0xff]
    %v498 = vld [vmem:[%s494 + $0x18] sm:$0xff]
    %499 = vmatprep.subr.mxu0 %v429
    %500 = vmatpush1.msra.mxu0 %v428
    %501 = vmatprep.subr.mxu0 %v433
    %502 = vmatpush1.msra.mxu0 %v432
    %503 = vmatprep.subr.mxu0 %v437
    %504 = vmatpush1.msra.mxu0 %v436
    %505 = vmatprep.subr.mxu0 %v441
    %506 = vmatpush1.msra.mxu0 %v440
    %507 = vmatprep.subr.mxu0 %v445
    %508 = vmatpush1.msra.mxu0 %v444
    %509 = vmatprep.subr.mxu0 %v449
    %510 = vmatpush1.msra.mxu0 %v448
    %511 = vmatprep.subr.mxu0 %v453
    %512 = vmatpush1.msra.mxu0 %v452
    %513 = vmatprep.subr.mxu0 %v457
    %514 = vmatpush1.msra.mxu0 %v456
    %515 = vmatprep.subr.mxu0 %v461
    %516 = vmatpush1.msra.mxu0 %v460
    %517 = vmatprep.subr.mxu0 %v465
    %518 = vmatpush1.msra.mxu0 %v464
    %519 = vmatprep.subr.mxu0 %v469
    %520 = vmatpush1.msra.mxu0 %v468
    %521 = vmatprep.subr.mxu0 %v473
    %522 = vmatpush1.msra.mxu0 %v472
    %523 = vmatprep.subr.mxu0 %v477
    %524 = vmatpush1.msra.mxu0 %v476
    %525 = vmatprep.subr.mxu0 %v481
    %526 = vmatpush1.msra.mxu0 %v480
    %527 = vmatprep.subr.mxu0 %v485
    %528 = vmatpush1.msra.mxu0 %v484
    %529 = vmatprep.subr.mxu0 %v489
    %530 = vmatpush1.msra.mxu0 %v488
    %531 = vmatprep.subr.mxu0 0.0
    %532 = vmatpush1.msra.mxu0 0.0
    %533 = vmatprep.subr.mxu0 0.0
    %534 = vmatpush1.msra.mxu0 0.0
    %535 = vmatprep.subr.mxu0 0.0
    %536 = vmatpush1.msra.mxu0 0.0
    %537 = vmatprep.subr.mxu0 0.0
    %538 = vmatpush1.msra.mxu0 0.0
    %539 = vmatprep.subr.mxu0 0.0
    %540 = vmatpush1.msra.mxu0 0.0
    %541 = vmatprep.subr.mxu0 0.0
    %542 = vmatpush1.msra.mxu0 0.0
    %543 = vmatprep.subr.mxu0 0.0
    %544 = vmatpush1.msra.mxu0 0.0
    %545 = vmatprep.subr.mxu0 0.0
    %546 = vmatpush1.msra.mxu0 0.0
    %547 = vmatprep.subr.mxu0 0.0
    %548 = vmatpush1.msra.mxu0 0.0
    %549 = vmatprep.subr.mxu0 0.0
    %550 = vmatpush1.msra.mxu0 0.0
    %551 = vmatprep.subr.mxu0 0.0
    %552 = vmatpush1.msra.mxu0 0.0
    %553 = vmatprep.subr.mxu0 0.0
    %554 = vmatpush1.msra.mxu0 0.0
    %555 = vmatprep.subr.mxu0 0.0
    %556 = vmatpush1.msra.mxu0 0.0
    %557 = vmatprep.subr.mxu0 0.0
    %558 = vmatpush1.msra.mxu0 0.0
    %559 = vmatprep.subr.mxu0 0.0
    %560 = vmatpush1.msra.mxu0 0.0
    %561 = vmatprep.subr.mxu0 0.0
    %562 = vmatpush1.msra.mxu0 0.0
    %563 = vmatprep.mubr.f32.mxu0 0.0
    %564 = vmatmul.mubr.f32.gmra.mrb[0].mxu0 0.0
    %v565 = vpop.f32.mrb[0].mxu0
    %v566 = vadd.f32 0.0, %v565
    %v567 = vpop.f32.mrb[0].mxu0
    %v568 = vadd.f32 0.0, %v567
    %569 = vdwg.mxu0
    %570 = vmatprep.subr.mxu0 %v431
    %571 = vmatpush1.msra.mxu0 %v430
    %572 = vmatprep.subr.mxu0 %v435
    %573 = vmatpush1.msra.mxu0 %v434
    %574 = vmatprep.subr.mxu0 %v439
    %575 = vmatpush1.msra.mxu0 %v438
    %576 = vmatprep.subr.mxu0 %v443
    %577 = vmatpush1.msra.mxu0 %v442
    %578 = vmatprep.subr.mxu0 %v447
    %579 = vmatpush1.msra.mxu0 %v446
    %580 = vmatprep.subr.mxu0 %v451
    %581 = vmatpush1.msra.mxu0 %v450
    %582 = vmatprep.subr.mxu0 %v455
    %583 = vmatpush1.msra.mxu0 %v454
    %584 = vmatprep.subr.mxu0 %v459
    %585 = vmatpush1.msra.mxu0 %v458
    %586 = vmatprep.subr.mxu0 %v463
    %587 = vmatpush1.msra.mxu0 %v462
    %588 = vmatprep.subr.mxu0 %v467
    %589 = vmatpush1.msra.mxu0 %v466
    %590 = vmatprep.subr.mxu0 %v471
    %591 = vmatpush1.msra.mxu0 %v470
    %592 = vmatprep.subr.mxu0 %v475
    %593 = vmatpush1.msra.mxu0 %v474
    %594 = vmatprep.subr.mxu0 %v479
    %595 = vmatpush1.msra.mxu0 %v478
    %596 = vmatprep.subr.mxu0 %v483
    %597 = vmatpush1.msra.mxu0 %v482
    %598 = vmatprep.subr.mxu0 %v487
    %599 = vmatpush1.msra.mxu0 %v486
    %600 = vmatprep.subr.mxu0 %v491
    %601 = vmatpush1.msra.mxu0 %v490
    %602 = vmatprep.subr.mxu0 0.0
    %603 = vmatpush1.msra.mxu0 0.0
    %604 = vmatprep.subr.mxu0 0.0
    %605 = vmatpush1.msra.mxu0 0.0
    %606 = vmatprep.subr.mxu0 0.0
    %607 = vmatpush1.msra.mxu0 0.0
    %608 = vmatprep.subr.mxu0 0.0
    %609 = vmatpush1.msra.mxu0 0.0
    %610 = vmatprep.subr.mxu0 0.0
    %611 = vmatpush1.msra.mxu0 0.0
    %612 = vmatprep.subr.mxu0 0.0
    %613 = vmatpush1.msra.mxu0 0.0
    %614 = vmatprep.subr.mxu0 0.0
    %615 = vmatpush1.msra.mxu0 0.0
    %616 = vmatprep.subr.mxu0 0.0
    %617 = vmatpush1.msra.mxu0 0.0
    %618 = vmatprep.subr.mxu0 0.0
    %619 = vmatpush1.msra.mxu0 0.0
    %620 = vmatprep.subr.mxu0 0.0
    %621 = vmatpush1.msra.mxu0 0.0
    %622 = vmatprep.subr.mxu0 0.0
    %623 = vmatpush1.msra.mxu0 0.0
    %624 = vmatprep.subr.mxu0 0.0
    %625 = vmatpush1.msra.mxu0 0.0
    %626 = vmatprep.subr.mxu0 0.0
    %627 = vmatpush1.msra.mxu0 0.0
    %628 = vmatprep.subr.mxu0 0.0
    %629 = vmatpush1.msra.mxu0 0.0
    %630 = vmatprep.subr.mxu0 0.0
    %631 = vmatpush1.msra.mxu0 0.0
    %632 = vmatprep.subr.mxu0 0.0
    %633 = vmatpush1.msra.mxu0 0.0
    %634 = vmatprep.mubr.f32.mxu0 0.0
    %635 = vmatmul.mubr.f32.gmra.mrb[0].mxu0 0.0
    %v636 = vpop.f32.mrb[0].mxu0
    %v637 = vadd.f32 0.0, %v636
    %v638 = vpop.f32.mrb[0].mxu0
    %v639 = vadd.f32 0.0, %v638
    %640 = vdwg.mxu0
    %v641 = vadd.f32 %v495, %v566
    %v642 = vadd.f32 %v496, %v568
    %v643 = vadd.f32 %v497, %v637
    %v644 = vadd.f32 %v498, %v639
    %v645 = vxor.u32 %v641, 2147483648
    %v646 = vmul.f32 %v645, 1.442695
    %v647 = vpow.pop %v646
    %v648 = vadd.f32 %v647, 1.0
    %v649 = vrcp.pop %v648
    %v650 = vmul.f32 1.0, %v649
    %v651 = vxor.u32 %v642, 2147483648
    %v652 = vmul.f32 %v651, 1.442695
    %v653 = vpow.pop %v652
    %v654 = vadd.f32 %v653, 1.0
    %v655 = vrcp.pop %v654
    %v656 = vmul.f32 1.0, %v655
    %v657 = vtanh.pop %v643
    %v658 = vxor.u32 %v644, 2147483648
    %v659 = vmul.f32 %v658, 1.442695
    %v660 = vpow.pop %v659
    %v661 = vadd.f32 %v660, 1.0
    %v662 = vrcp.pop %v661
    %v663 = vmul.f32 1.0, %v662
    %v664 = vmul.f32 %v656, 0.0
    %v665 = vmul.f32 %v650, %v657
    %v666 = vadd.f32 %v664, %v665
    %v667 = vtanh.pop %v666
    %v668 = vmul.f32 %v663, %v667
    %669 = vst [vmem:[#allocation2] sm:$0xff] %v668
    %s670 = smul.u32 1, 4
    %s671 = smul.addr %s670, 8
    %s672 = scalar_lea.vmem [#allocation3], %s671
    %v673 = vld [vmem:[%s672] sm:$0xff]
    %v674 = vld [vmem:[%s672 + $0x8] sm:$0xff]
    %v675 = vld [vmem:[%s672 + $0x10] sm:$0xff]
    %v676 = vld [vmem:[%s672 + $0x18] sm:$0xff]
    %677 = vmatprep.subr.mxu0 %v429
    %678 = vmatpush1.msra.mxu0 %v428
    %679 = vmatprep.subr.mxu0 %v433
    %680 = vmatpush1.msra.mxu0 %v432
    %681 = vmatprep.subr.mxu0 %v437
    %682 = vmatpush1.msra.mxu0 %v436
    %683 = vmatprep.subr.mxu0 %v441
    %684 = vmatpush1.msra.mxu0 %v440
    %685 = vmatprep.subr.mxu0 %v445
    %686 = vmatpush1.msra.mxu0 %v444
    %687 = vmatprep.subr.mxu0 %v449
    %688 = vmatpush1.msra.mxu0 %v448
    %689 = vmatprep.subr.mxu0 %v453
    %690 = vmatpush1.msra.mxu0 %v452
    %691 = vmatprep.subr.mxu0 %v457
    %692 = vmatpush1.msra.mxu0 %v456
    %693 = vmatprep.subr.mxu0 %v461
    %694 = vmatpush1.msra.mxu0 %v460
    %695 = vmatprep.subr.mxu0 %v465
    %696 = vmatpush1.msra.mxu0 %v464
    %697 = vmatprep.subr.mxu0 %v469
    %698 = vmatpush1.msra.mxu0 %v468
    %699 = vmatprep.subr.mxu0 %v473
    %700 = vmatpush1.msra.mxu0 %v472
    %701 = vmatprep.subr.mxu0 %v477
    %702 = vmatpush1.msra.mxu0 %v476
    %703 = vmatprep.subr.mxu0 %v481
    %704 = vmatpush1.msra.mxu0 %v480
    %705 = vmatprep.subr.mxu0 %v485
    %706 = vmatpush1.msra.mxu0 %v484
    %707 = vmatprep.subr.mxu0 %v489
    %708 = vmatpush1.msra.mxu0 %v488
    %709 = vmatprep.subr.mxu0 0.0
    %710 = vmatpush1.msra.mxu0 0.0
    %711 = vmatprep.subr.mxu0 0.0
    %712 = vmatpush1.msra.mxu0 0.0
    %713 = vmatprep.subr.mxu0 0.0
    %714 = vmatpush1.msra.mxu0 0.0
    %715 = vmatprep.subr.mxu0 0.0
    %716 = vmatpush1.msra.mxu0 0.0
    %717 = vmatprep.subr.mxu0 0.0
    %718 = vmatpush1.msra.mxu0 0.0
    %719 = vmatprep.subr.mxu0 0.0
    %720 = vmatpush1.msra.mxu0 0.0
    %721 = vmatprep.subr.mxu0 0.0
    %722 = vmatpush1.msra.mxu0 0.0
    %723 = vmatprep.subr.mxu0 0.0
    %724 = vmatpush1.msra.mxu0 0.0
    %725 = vmatprep.subr.mxu0 0.0
    %726 = vmatpush1.msra.mxu0 0.0
    %727 = vmatprep.subr.mxu0 0.0
    %728 = vmatpush1.msra.mxu0 0.0
    %729 = vmatprep.subr.mxu0 0.0
    %730 = vmatpush1.msra.mxu0 0.0
    %731 = vmatprep.subr.mxu0 0.0
    %732 = vmatpush1.msra.mxu0 0.0
    %733 = vmatprep.subr.mxu0 0.0
    %734 = vmatpush1.msra.mxu0 0.0
    %735 = vmatprep.subr.mxu0 0.0
    %736 = vmatpush1.msra.mxu0 0.0
    %737 = vmatprep.subr.mxu0 0.0
    %738 = vmatpush1.msra.mxu0 0.0
    %739 = vmatprep.subr.mxu0 0.0
    %740 = vmatpush1.msra.mxu0 0.0
    %741 = vmatprep.mubr.f32.mxu0 0.0
    %742 = vmatmul.mubr.f32.gmra.mrb[0].mxu0 %v668
    %v743 = vpop.f32.mrb[0].mxu0
    %v744 = vadd.f32 0.0, %v743
    %v745 = vpop.f32.mrb[0].mxu0
    %v746 = vadd.f32 0.0, %v745
    %747 = vdwg.mxu0
    %748 = vmatprep.subr.mxu0 %v431
    %749 = vmatpush1.msra.mxu0 %v430
    %750 = vmatprep.subr.mxu0 %v435
    %751 = vmatpush1.msra.mxu0 %v434
    %752 = vmatprep.subr.mxu0 %v439
    %753 = vmatpush1.msra.mxu0 %v438
    %754 = vmatprep.subr.mxu0 %v443
    %755 = vmatpush1.msra.mxu0 %v442
    %756 = vmatprep.subr.mxu0 %v447
    %757 = vmatpush1.msra.mxu0 %v446
    %758 = vmatprep.subr.mxu0 %v451
    %759 = vmatpush1.msra.mxu0 %v450
    %760 = vmatprep.subr.mxu0 %v455
    %761 = vmatpush1.msra.mxu0 %v454
    %762 = vmatprep.subr.mxu0 %v459
    %763 = vmatpush1.msra.mxu0 %v458
    %764 = vmatprep.subr.mxu0 %v463
    %765 = vmatpush1.msra.mxu0 %v462
    %766 = vmatprep.subr.mxu0 %v467
    %767 = vmatpush1.msra.mxu0 %v466
    %768 = vmatprep.subr.mxu0 %v471
    %769 = vmatpush1.msra.mxu0 %v470
    %770 = vmatprep.subr.mxu0 %v475
    %771 = vmatpush1.msra.mxu0 %v474
    %772 = vmatprep.subr.mxu0 %v479
    %773 = vmatpush1.msra.mxu0 %v478
    %774 = vmatprep.subr.mxu0 %v483
    %775 = vmatpush1.msra.mxu0 %v482
    %776 = vmatprep.subr.mxu0 %v487
    %777 = vmatpush1.msra.mxu0 %v486
    %778 = vmatprep.subr.mxu0 %v491
    %779 = vmatpush1.msra.mxu0 %v490
    %780 = vmatprep.subr.mxu0 0.0
    %781 = vmatpush1.msra.mxu0 0.0
    %782 = vmatprep.subr.mxu0 0.0
    %783 = vmatpush1.msra.mxu0 0.0
    %784 = vmatprep.subr.mxu0 0.0
    %785 = vmatpush1.msra.mxu0 0.0
    %786 = vmatprep.subr.mxu0 0.0
    %787 = vmatpush1.msra.mxu0 0.0
    %788 = vmatprep.subr.mxu0 0.0
    %789 = vmatpush1.msra.mxu0 0.0
    %790 = vmatprep.subr.mxu0 0.0
    %791 = vmatpush1.msra.mxu0 0.0
    %792 = vmatprep.subr.mxu0 0.0
    %793 = vmatpush1.msra.mxu0 0.0
    %794 = vmatprep.subr.mxu0 0.0
    %795 = vmatpush1.msra.mxu0 0.0
    %796 = vmatprep.subr.mxu0 0.0
    %797 = vmatpush1.msra.mxu0 0.0
    %798 = vmatprep.subr.mxu0 0.0
    %799 = vmatpush1.msra.mxu0 0.0
    %800 = vmatprep.subr.mxu0 0.0
    %801 = vmatpush1.msra.mxu0 0.0
    %802 = vmatprep.subr.mxu0 0.0
    %803 = vmatpush1.msra.mxu0 0.0
    %804 = vmatprep.subr.mxu0 0.0
    %805 = vmatpush1.msra.mxu0 0.0
    %806 = vmatprep.subr.mxu0 0.0
    %807 = vmatpush1.msra.mxu0 0.0
    %808 = vmatprep.subr.mxu0 0.0
    %809 = vmatpush1.msra.mxu0 0.0
    %810 = vmatprep.subr.mxu0 0.0
    %811 = vmatpush1.msra.mxu0 0.0
    %812 = vmatprep.mubr.f32.mxu0 0.0
    %813 = vmatmul.mubr.f32.gmra.mrb[0].mxu0 %v668
    %v814 = vpop.f32.mrb[0].mxu0
    %v815 = vadd.f32 0.0, %v814
    %v816 = vpop.f32.mrb[0].mxu0
    %v817 = vadd.f32 0.0, %v816
    %818 = vdwg.mxu0
    %v819 = vadd.f32 %v673, %v744
    %v820 = vadd.f32 %v674, %v746
    %v821 = vadd.f32 %v675, %v815
    %v822 = vadd.f32 %v676, %v817
    %v823 = vxor.u32 %v819, 2147483648
    %v824 = vmul.f32 %v823, 1.442695
    %v825 = vpow.pop %v824
    %v826 = vadd.f32 %v825, 1.0
    %v827 = vrcp.pop %v826
    %v828 = vmul.f32 1.0, %v827
    %v829 = vxor.u32 %v820, 2147483648
    %v830 = vmul.f32 %v829, 1.442695
    %v831 = vpow.pop %v830
    %v832 = vadd.f32 %v831, 1.0
    %v833 = vrcp.pop %v832
    %v834 = vmul.f32 1.0, %v833
    %v835 = vtanh.pop %v821
    %v836 = vxor.u32 %v822, 2147483648
    %v837 = vmul.f32 %v836, 1.442695
    %v838 = vpow.pop %v837
    %v839 = vadd.f32 %v838, 1.0
    %v840 = vrcp.pop %v839
    %v841 = vmul.f32 1.0, %v840
    %v842 = vmul.f32 %v834, %v666
    %v843 = vmul.f32 %v828, %v835
    %v844 = vadd.f32 %v842, %v843
    %v845 = vtanh.pop %v844
    %v846 = vmul.f32 %v841, %v845
    %s847 = scalar_lea.vmem [#allocation2], 8
    %848 = vst [vmem:[%s847] sm:$0xff] %v846
    %s849 = smul.u32 2, 4
    %s850 = smul.addr %s849, 8
    %s851 = scalar_lea.vmem [#allocation3], %s850
    %v852 = vld [vmem:[%s851] sm:$0xff]
    %v853 = vld [vmem:[%s851 + $0x8] sm:$0xff]
    %v854 = vld [vmem:[%s851 + $0x10] sm:$0xff]
    %v855 = vld [vmem:[%s851 + $0x18] sm:$0xff]
    %856 = vmatprep.subr.mxu0 %v429
    %857 = vmatpush1.msra.mxu0 %v428
    %858 = vmatprep.subr.mxu0 %v433
    %859 = vmatpush1.msra.mxu0 %v432
    %860 = vmatprep.subr.mxu0 %v437
    %861 = vmatpush1.msra.mxu0 %v436
    %862 = vmatprep.subr.mxu0 %v441
    %863 = vmatpush1.msra.mxu0 %v440
    %864 = vmatprep.subr.mxu0 %v445
    %865 = vmatpush1.msra.mxu0 %v444
    %866 = vmatprep.subr.mxu0 %v449
    %867 = vmatpush1.msra.mxu0 %v448
    %868 = vmatprep.subr.mxu0 %v453
    %869 = vmatpush1.msra.mxu0 %v452
    %870 = vmatprep.subr.mxu0 %v457
    %871 = vmatpush1.msra.mxu0 %v456
    %872 = vmatprep.subr.mxu0 %v461
    %873 = vmatpush1.msra.mxu0 %v460
    %874 = vmatprep.subr.mxu0 %v465
    %875 = vmatpush1.msra.mxu0 %v464
    %876 = vmatprep.subr.mxu0 %v469
    %877 = vmatpush1.msra.mxu0 %v468
    %878 = vmatprep.subr.mxu0 %v473
    %879 = vmatpush1.msra.mxu0 %v472
    %880 = vmatprep.subr.mxu0 %v477
    %881 = vmatpush1.msra.mxu0 %v476
    %882 = vmatprep.subr.mxu0 %v481
    %883 = vmatpush1.msra.mxu0 %v480
    %884 = vmatprep.subr.mxu0 %v485
    %885 = vmatpush1.msra.mxu0 %v484
    %886 = vmatprep.subr.mxu0 %v489
    %887 = vmatpush1.msra.mxu0 %v488
    %888 = vmatprep.subr.mxu0 0.0
    %889 = vmatpush1.msra.mxu0 0.0
    %890 = vmatprep.subr.mxu0 0.0
    %891 = vmatpush1.msra.mxu0 0.0
    %892 = vmatprep.subr.mxu0 0.0
    %893 = vmatpush1.msra.mxu0 0.0
    %894 = vmatprep.subr.mxu0 0.0
    %895 = vmatpush1.msra.mxu0 0.0
    %896 = vmatprep.subr.mxu0 0.0
    %897 = vmatpush1.msra.mxu0 0.0
    %898 = vmatprep.subr.mxu0 0.0
    %899 = vmatpush1.msra.mxu0 0.0
    %900 = vmatprep.subr.mxu0 0.0
    %901 = vmatpush1.msra.mxu0 0.0
    %902 = vmatprep.subr.mxu0 0.0
    %903 = vmatpush1.msra.mxu0 0.0
    %904 = vmatprep.subr.mxu0 0.0
    %905 = vmatpush1.msra.mxu0 0.0
    %906 = vmatprep.subr.mxu0 0.0
    %907 = vmatpush1.msra.mxu0 0.0
    %908 = vmatprep.subr.mxu0 0.0
    %909 = vmatpush1.msra.mxu0 0.0
    %910 = vmatprep.subr.mxu0 0.0
    %911 = vmatpush1.msra.mxu0 0.0
    %912 = vmatprep.subr.mxu0 0.0
    %913 = vmatpush1.msra.mxu0 0.0
    %914 = vmatprep.subr.mxu0 0.0
    %915 = vmatpush1.msra.mxu0 0.0
    %916 = vmatprep.subr.mxu0 0.0
    %917 = vmatpush1.msra.mxu0 0.0
    %918 = vmatprep.subr.mxu0 0.0
    %919 = vmatpush1.msra.mxu0 0.0
    %920 = vmatprep.mubr.f32.mxu0 0.0
    %921 = vmatmul.mubr.f32.gmra.mrb[0].mxu0 %v846
    %v922 = vpop.f32.mrb[0].mxu0
    %v923 = vadd.f32 0.0, %v922
    %v924 = vpop.f32.mrb[0].mxu0
    %v925 = vadd.f32 0.0, %v924
    %926 = vdwg.mxu0
    %927 = vmatprep.subr.mxu0 %v431
    %928 = vmatpush1.msra.mxu0 %v430
    %929 = vmatprep.subr.mxu0 %v435
    %930 = vmatpush1.msra.mxu0 %v434
    %931 = vmatprep.subr.mxu0 %v439
    %932 = vmatpush1.msra.mxu0 %v438
    %933 = vmatprep.subr.mxu0 %v443
    %934 = vmatpush1.msra.mxu0 %v442
    %935 = vmatprep.subr.mxu0 %v447
    %936 = vmatpush1.msra.mxu0 %v446
    %937 = vmatprep.subr.mxu0 %v451
    %938 = vmatpush1.msra.mxu0 %v450
    %939 = vmatprep.subr.mxu0 %v455
    %940 = vmatpush1.msra.mxu0 %v454
    %941 = vmatprep.subr.mxu0 %v459
    %942 = vmatpush1.msra.mxu0 %v458
    %943 = vmatprep.subr.mxu0 %v463
    %944 = vmatpush1.msra.mxu0 %v462
    %945 = vmatprep.subr.mxu0 %v467
    %946 = vmatpush1.msra.mxu0 %v466
    %947 = vmatprep.subr.mxu0 %v471
    %948 = vmatpush1.msra.mxu0 %v470
    %949 = vmatprep.subr.mxu0 %v475
    %950 = vmatpush1.msra.mxu0 %v474
    %951 = vmatprep.subr.mxu0 %v479
    %952 = vmatpush1.msra.mxu0 %v478
    %953 = vmatprep.subr.mxu0 %v483
    %954 = vmatpush1.msra.mxu0 %v482
    %955 = vmatprep.subr.mxu0 %v487
    %956 = vmatpush1.msra.mxu0 %v486
    %957 = vmatprep.subr.mxu0 %v491
    %958 = vmatpush1.msra.mxu0 %v490
    %959 = vmatprep.subr.mxu0 0.0
    %960 = vmatpush1.msra.mxu0 0.0
    %961 = vmatprep.subr.mxu0 0.0
    %962 = vmatpush1.msra.mxu0 0.0
    %963 = vmatprep.subr.mxu0 0.0
    %964 = vmatpush1.msra.mxu0 0.0
    %965 = vmatprep.subr.mxu0 0.0
    %966 = vmatpush1.msra.mxu0 0.0
    %967 = vmatprep.subr.mxu0 0.0
    %968 = vmatpush1.msra.mxu0 0.0
    %969 = vmatprep.subr.mxu0 0.0
    %970 = vmatpush1.msra.mxu0 0.0
    %971 = vmatprep.subr.mxu0 0.0
    %972 = vmatpush1.msra.mxu0 0.0
    %973 = vmatprep.subr.mxu0 0.0
    %974 = vmatpush1.msra.mxu0 0.0
    %975 = vmatprep.subr.mxu0 0.0
    %976 = vmatpush1.msra.mxu0 0.0
    %977 = vmatprep.subr.mxu0 0.0
    %978 = vmatpush1.msra.mxu0 0.0
    %979 = vmatprep.subr.mxu0 0.0
    %980 = vmatpush1.msra.mxu0 0.0
    %981 = vmatprep.subr.mxu0 0.0
    %982 = vmatpush1.msra.mxu0 0.0
    %983 = vmatprep.subr.mxu0 0.0
    %984 = vmatpush1.msra.mxu0 0.0
    %985 = vmatprep.subr.mxu0 0.0
    %986 = vmatpush1.msra.mxu0 0.0
    %987 = vmatprep.subr.mxu0 0.0
    %988 = vmatpush1.msra.mxu0 0.0
    %989 = vmatprep.subr.mxu0 0.0
    %990 = vmatpush1.msra.mxu0 0.0
    %991 = vmatprep.mubr.f32.mxu0 0.0
    %992 = vmatmul.mubr.f32.gmra.mrb[0].mxu0 %v846
    %v993 = vpop.f32.mrb[0].mxu0
    %v994 = vadd.f32 0.0, %v993
    %v995 = vpop.f32.mrb[0].mxu0
    %v996 = vadd.f32 0.0, %v995
    %997 = vdwg.mxu0
    %v998 = vadd.f32 %v852, %v923
    %v999 = vadd.f32 %v853, %v925
    %v1000 = vadd.f32 %v854, %v994
    %v1001 = vadd.f32 %v855, %v996
    %v1002 = vxor.u32 %v998, 2147483648
    %v1003 = vmul.f32 %v1002, 1.442695
    %v1004 = vpow.pop %v1003
    %v1005 = vadd.f32 %v1004, 1.0
    %v1006 = vrcp.pop %v1005
    %v1007 = vmul.f32 1.0, %v1006
    %v1008 = vxor.u32 %v999, 2147483648
    %v1009 = vmul.f32 %v1008, 1.442695
    %v1010 = vpow.pop %v1009
    %v1011 = vadd.f32 %v1010, 1.0
    %v1012 = vrcp.pop %v1011
    %v1013 = vmul.f32 1.0, %v1012
    %v1014 = vtanh.pop %v1000
    %v1015 = vxor.u32 %v1001, 2147483648
    %v1016 = vmul.f32 %v1015, 1.442695
    %v1017 = vpow.pop %v1016
    %v1018 = vadd.f32 %v1017, 1.0
    %v1019 = vrcp.pop %v1018
    %v1020 = vmul.f32 1.0, %v1019
    %v1021 = vmul.f32 %v1013, %v844
    %v1022 = vmul.f32 %v1007, %v1014
    %v1023 = vadd.f32 %v1021, %v1022
    %v1024 = vtanh.pop %v1023
    %v1025 = vmul.f32 %v1020, %v1024
    %s1026 = scalar_lea.vmem [#allocation2], 16
    %1027 = vst [vmem:[%s1026] sm:$0xff] %v1025
    %s1028 = smul.u32 3, 4
    %s1029 = smul.addr %s1028, 8
    %s1030 = scalar_lea.vmem [#allocation3], %s1029
    %v1031 = vld [vmem:[%s1030] sm:$0xff]
    %v1032 = vld [vmem:[%s1030 + $0x8] sm:$0xff]
    %v1033 = vld [vmem:[%s1030 + $0x10] sm:$0xff]
    %v1034 = vld [vmem:[%s1030 + $0x18] sm:$0xff]
    %1035 = vmatprep.subr.mxu0 %v429
    %1036 = vmatpush1.msra.mxu0 %v428
    %1037 = vmatprep.subr.mxu0 %v433
    %1038 = vmatpush1.msra.mxu0 %v432
    %1039 = vmatprep.subr.mxu0 %v437
    %1040 = vmatpush1.msra.mxu0 %v436
    %1041 = vmatprep.subr.mxu0 %v441
    %1042 = vmatpush1.msra.mxu0 %v440
    %1043 = vmatprep.subr.mxu0 %v445
    %1044 = vmatpush1.msra.mxu0 %v444
    %1045 = vmatprep.subr.mxu0 %v449
    %1046 = vmatpush1.msra.mxu0 %v448
    %1047 = vmatprep.subr.mxu0 %v453
    %1048 = vmatpush1.msra.mxu0 %v452
    %1049 = vmatprep.subr.mxu0 %v457
    %1050 = vmatpush1.msra.mxu0 %v456
    %1051 = vmatprep.subr.mxu0 %v461
    %1052 = vmatpush1.msra.mxu0 %v460
    %1053 = vmatprep.subr.mxu0 %v465
    %1054 = vmatpush1.msra.mxu0 %v464
    %1055 = vmatprep.subr.mxu0 %v469
    %1056 = vmatpush1.msra.mxu0 %v468
    %1057 = vmatprep.subr.mxu0 %v473
    %1058 = vmatpush1.msra.mxu0 %v472
    %1059 = vmatprep.subr.mxu0 %v477
    %1060 = vmatpush1.msra.mxu0 %v476
    %1061 = vmatprep.subr.mxu0 %v481
    %1062 = vmatpush1.msra.mxu0 %v480
    %1063 = vmatprep.subr.mxu0 %v485
    %1064 = vmatpush1.msra.mxu0 %v484
    %1065 = vmatprep.subr.mxu0 %v489
    %1066 = vmatpush1.msra.mxu0 %v488
    %1067 = vmatprep.subr.mxu0 0.0
    %1068 = vmatpush1.msra.mxu0 0.0
    %1069 = vmatprep.subr.mxu0 0.0
    %1070 = vmatpush1.msra.mxu0 0.0
    %1071 = vmatprep.subr.mxu0 0.0
    %1072 = vmatpush1.msra.mxu0 0.0
    %1073 = vmatprep.subr.mxu0 0.0
    %1074 = vmatpush1.msra.mxu0 0.0
    %1075 = vmatprep.subr.mxu0 0.0
    %1076 = vmatpush1.msra.mxu0 0.0
    %1077 = vmatprep.subr.mxu0 0.0
    %1078 = vmatpush1.msra.mxu0 0.0
    %1079 = vmatprep.subr.mxu0 0.0
    %1080 = vmatpush1.msra.mxu0 0.0
    %1081 = vmatprep.subr.mxu0 0.0
    %1082 = vmatpush1.msra.mxu0 0.0
    %1083 = vmatprep.subr.mxu0 0.0
    %1084 = vmatpush1.msra.mxu0 0.0
    %1085 = vmatprep.subr.mxu0 0.0
    %1086 = vmatpush1.msra.mxu0 0.0
    %1087 = vmatprep.subr.mxu0 0.0
    %1088 = vmatpush1.msra.mxu0 0.0
    %1089 = vmatprep.subr.mxu0 0.0
    %1090 = vmatpush1.msra.mxu0 0.0
    %1091 = vmatprep.subr.mxu0 0.0
    %1092 = vmatpush1.msra.mxu0 0.0
    %1093 = vmatprep.subr.mxu0 0.0
    %1094 = vmatpush1.msra.mxu0 0.0
    %1095 = vmatprep.subr.mxu0 0.0
    %1096 = vmatpush1.msra.mxu0 0.0
    %1097 = vmatprep.subr.mxu0 0.0
    %1098 = vmatpush1.msra.mxu0 0.0
    %1099 = vmatprep.mubr.f32.mxu0 0.0
    %1100 = vmatmul.mubr.f32.gmra.mrb[0].mxu0 %v1025
    %v1101 = vpop.f32.mrb[0].mxu0
    %v1102 = vadd.f32 0.0, %v1101
    %v1103 = vpop.f32.mrb[0].mxu0
    %v1104 = vadd.f32 0.0, %v1103
    %1105 = vdwg.mxu0
    %1106 = vmatprep.subr.mxu0 %v431
    %1107 = vmatpush1.msra.mxu0 %v430
    %1108 = vmatprep.subr.mxu0 %v435
    %1109 = vmatpush1.msra.mxu0 %v434
    %1110 = vmatprep.subr.mxu0 %v439
    %1111 = vmatpush1.msra.mxu0 %v438
    %1112 = vmatprep.subr.mxu0 %v443
    %1113 = vmatpush1.msra.mxu0 %v442
    %1114 = vmatprep.subr.mxu0 %v447
    %1115 = vmatpush1.msra.mxu0 %v446
    %1116 = vmatprep.subr.mxu0 %v451
    %1117 = vmatpush1.msra.mxu0 %v450
    %1118 = vmatprep.subr.mxu0 %v455
    %1119 = vmatpush1.msra.mxu0 %v454
    %1120 = vmatprep.subr.mxu0 %v459
    %1121 = vmatpush1.msra.mxu0 %v458
    %1122 = vmatprep.subr.mxu0 %v463
    %1123 = vmatpush1.msra.mxu0 %v462
    %1124 = vmatprep.subr.mxu0 %v467
    %1125 = vmatpush1.msra.mxu0 %v466
    %1126 = vmatprep.subr.mxu0 %v471
    %1127 = vmatpush1.msra.mxu0 %v470
    %1128 = vmatprep.subr.mxu0 %v475
    %1129 = vmatpush1.msra.mxu0 %v474
    %1130 = vmatprep.subr.mxu0 %v479
    %1131 = vmatpush1.msra.mxu0 %v478
    %1132 = vmatprep.subr.mxu0 %v483
    %1133 = vmatpush1.msra.mxu0 %v482
    %1134 = vmatprep.subr.mxu0 %v487
    %1135 = vmatpush1.msra.mxu0 %v486
    %1136 = vmatprep.subr.mxu0 %v491
    %1137 = vmatpush1.msra.mxu0 %v490
    %1138 = vmatprep.subr.mxu0 0.0
    %1139 = vmatpush1.msra.mxu0 0.0
    %1140 = vmatprep.subr.mxu0 0.0
    %1141 = vmatpush1.msra.mxu0 0.0
    %1142 = vmatprep.subr.mxu0 0.0
    %1143 = vmatpush1.msra.mxu0 0.0
    %1144 = vmatprep.subr.mxu0 0.0
    %1145 = vmatpush1.msra.mxu0 0.0
    %1146 = vmatprep.subr.mxu0 0.0
    %1147 = vmatpush1.msra.mxu0 0.0
    %1148 = vmatprep.subr.mxu0 0.0
    %1149 = vmatpush1.msra.mxu0 0.0
    %1150 = vmatprep.subr.mxu0 0.0
    %1151 = vmatpush1.msra.mxu0 0.0
    %1152 = vmatprep.subr.mxu0 0.0
    %1153 = vmatpush1.msra.mxu0 0.0
    %1154 = vmatprep.subr.mxu0 0.0
    %1155 = vmatpush1.msra.mxu0 0.0
    %1156 = vmatprep.subr.mxu0 0.0
    %1157 = vmatpush1.msra.mxu0 0.0
    %1158 = vmatprep.subr.mxu0 0.0
    %1159 = vmatpush1.msra.mxu0 0.0
    %1160 = vmatprep.subr.mxu0 0.0
    %1161 = vmatpush1.msra.mxu0 0.0
    %1162 = vmatprep.subr.mxu0 0.0
    %1163 = vmatpush1.msra.mxu0 0.0
    %1164 = vmatprep.subr.mxu0 0.0
    %1165 = vmatpush1.msra.mxu0 0.0
    %1166 = vmatprep.subr.mxu0 0.0
    %1167 = vmatpush1.msra.mxu0 0.0
    %1168 = vmatprep.subr.mxu0 0.0
    %1169 = vmatpush1.msra.mxu0 0.0
    %1170 = vmatprep.mubr.f32.mxu0 0.0
    %1171 = vmatmul.mubr.f32.gmra.mrb[0].mxu0 %v1025
    %v1172 = vpop.f32.mrb[0].mxu0
    %v1173 = vadd.f32 0.0, %v1172
    %v1174 = vpop.f32.mrb[0].mxu0
    %v1175 = vadd.f32 0.0, %v1174
    %1176 = vdwg.mxu0
    %v1177 = vadd.f32 %v1031, %v1102
    %v1178 = vadd.f32 %v1032, %v1104
    %v1179 = vadd.f32 %v1033, %v1173
    %v1180 = vadd.f32 %v1034, %v1175
    %v1181 = vxor.u32 %v1177, 2147483648
    %v1182 = vmul.f32 %v1181, 1.442695
    %v1183 = vpow.pop %v1182
    %v1184 = vadd.f32 %v1183, 1.0
    %v1185 = vrcp.pop %v1184
    %v1186 = vmul.f32 1.0, %v1185
    %v1187 = vxor.u32 %v1178, 2147483648
    %v1188 = vmul.f32 %v1187, 1.442695
    %v1189 = vpow.pop %v1188
    %v1190 = vadd.f32 %v1189, 1.0
    %v1191 = vrcp.pop %v1190
    %v1192 = vmul.f32 1.0, %v1191
    %v1193 = vtanh.pop %v1179
    %v1194 = vxor.u32 %v1180, 2147483648
    %v1195 = vmul.f32 %v1194, 1.442695
    %v1196 = vpow.pop %v1195
    %v1197 = vadd.f32 %v1196, 1.0
    %v1198 = vrcp.pop %v1197
    %v1199 = vmul.f32 1.0, %v1198
    %v1200 = vmul.f32 %v1192, %v1023
    %v1201 = vmul.f32 %v1186, %v1193
    %v1202 = vadd.f32 %v1200, %v1201
    %v1203 = vtanh.pop %v1202
    %v1204 = vmul.f32 %v1199, %v1203
    %s1205 = scalar_lea.vmem [#allocation2], 24
    %1206 = vst [vmem:[%s1205] sm:$0xff] %v1204
    %s1207 = smul.u32 4, 4
    %s1208 = smul.addr %s1207, 8
    %s1209 = scalar_lea.vmem [#allocation3], %s1208
    %v1210 = vld [vmem:[%s1209] sm:$0xff]
    %v1211 = vld [vmem:[%s1209 + $0x8] sm:$0xff]
    %v1212 = vld [vmem:[%s1209 + $0x10] sm:$0xff]
    %v1213 = vld [vmem:[%s1209 + $0x18] sm:$0xff]
    %1214 = vmatprep.subr.mxu0 %v429
    %1215 = vmatpush1.msra.mxu0 %v428
    %1216 = vmatprep.subr.mxu0 %v433
    %1217 = vmatpush1.msra.mxu0 %v432
    %1218 = vmatprep.subr.mxu0 %v437
    %1219 = vmatpush1.msra.mxu0 %v436
    %1220 = vmatprep.subr.mxu0 %v441
    %1221 = vmatpush1.msra.mxu0 %v440
    %1222 = vmatprep.subr.mxu0 %v445
    %1223 = vmatpush1.msra.mxu0 %v444
    %1224 = vmatprep.subr.mxu0 %v449
    %1225 = vmatpush1.msra.mxu0 %v448
    %1226 = vmatprep.subr.mxu0 %v453
    %1227 = vmatpush1.msra.mxu0 %v452
    %1228 = vmatprep.subr.mxu0 %v457
    %1229 = vmatpush1.msra.mxu0 %v456
    %1230 = vmatprep.subr.mxu0 %v461
    %1231 = vmatpush1.msra.mxu0 %v460
    %1232 = vmatprep.subr.mxu0 %v465
    %1233 = vmatpush1.msra.mxu0 %v464
    %1234 = vmatprep.subr.mxu0 %v469
    %1235 = vmatpush1.msra.mxu0 %v468
    %1236 = vmatprep.subr.mxu0 %v473
    %1237 = vmatpush1.msra.mxu0 %v472
    %1238 = vmatprep.subr.mxu0 %v477
    %1239 = vmatpush1.msra.mxu0 %v476
    %1240 = vmatprep.subr.mxu0 %v481
    %1241 = vmatpush1.msra.mxu0 %v480
    %1242 = vmatprep.subr.mxu0 %v485
    %1243 = vmatpush1.msra.mxu0 %v484
    %1244 = vmatprep.subr.mxu0 %v489
    %1245 = vmatpush1.msra.mxu0 %v488
    %1246 = vmatprep.subr.mxu0 0.0
    %1247 = vmatpush1.msra.mxu0 0.0
    %1248 = vmatprep.subr.mxu0 0.0
    %1249 = vmatpush1.msra.mxu0 0.0
    %1250 = vmatprep.subr.mxu0 0.0
    %1251 = vmatpush1.msra.mxu0 0.0
    %1252 = vmatprep.subr.mxu0 0.0
    %1253 = vmatpush1.msra.mxu0 0.0
    %1254 = vmatprep.subr.mxu0 0.0
    %1255 = vmatpush1.msra.mxu0 0.0
    %1256 = vmatprep.subr.mxu0 0.0
    %1257 = vmatpush1.msra.mxu0 0.0
    %1258 = vmatprep.subr.mxu0 0.0
    %1259 = vmatpush1.msra.mxu0 0.0
    %1260 = vmatprep.subr.mxu0 0.0
    %1261 = vmatpush1.msra.mxu0 0.0
    %1262 = vmatprep.subr.mxu0 0.0
    %1263 = vmatpush1.msra.mxu0 0.0
    %1264 = vmatprep.subr.mxu0 0.0
    %1265 = vmatpush1.msra.mxu0 0.0
    %1266 = vmatprep.subr.mxu0 0.0
    %1267 = vmatpush1.msra.mxu0 0.0
    %1268 = vmatprep.subr.mxu0 0.0
    %1269 = vmatpush1.msra.mxu0 0.0
    %1270 = vmatprep.subr.mxu0 0.0
    %1271 = vmatpush1.msra.mxu0 0.0
    %1272 = vmatprep.subr.mxu0 0.0
    %1273 = vmatpush1.msra.mxu0 0.0
    %1274 = vmatprep.subr.mxu0 0.0
    %1275 = vmatpush1.msra.mxu0 0.0
    %1276 = vmatprep.subr.mxu0 0.0
    %1277 = vmatpush1.msra.mxu0 0.0
    %1278 = vmatprep.mubr.f32.mxu0 0.0
    %1279 = vmatmul.mubr.f32.gmra.mrb[0].mxu0 %v1204
    %v1280 = vpop.f32.mrb[0].mxu0
    %v1281 = vadd.f32 0.0, %v1280
    %v1282 = vpop.f32.mrb[0].mxu0
    %v1283 = vadd.f32 0.0, %v1282
    %1284 = vdwg.mxu0
    %1285 = vmatprep.subr.mxu0 %v431
    %1286 = vmatpush1.msra.mxu0 %v430
    %1287 = vmatprep.subr.mxu0 %v435
    %1288 = vmatpush1.msra.mxu0 %v434
    %1289 = vmatprep.subr.mxu0 %v439
    %1290 = vmatpush1.msra.mxu0 %v438
    %1291 = vmatprep.subr.mxu0 %v443
    %1292 = vmatpush1.msra.mxu0 %v442
    %1293 = vmatprep.subr.mxu0 %v447
    %1294 = vmatpush1.msra.mxu0 %v446
    %1295 = vmatprep.subr.mxu0 %v451
    %1296 = vmatpush1.msra.mxu0 %v450
    %1297 = vmatprep.subr.mxu0 %v455
    %1298 = vmatpush1.msra.mxu0 %v454
    %1299 = vmatprep.subr.mxu0 %v459
    %1300 = vmatpush1.msra.mxu0 %v458
    %1301 = vmatprep.subr.mxu0 %v463
    %1302 = vmatpush1.msra.mxu0 %v462
    %1303 = vmatprep.subr.mxu0 %v467
    %1304 = vmatpush1.msra.mxu0 %v466
    %1305 = vmatprep.subr.mxu0 %v471
    %1306 = vmatpush1.msra.mxu0 %v470
    %1307 = vmatprep.subr.mxu0 %v475
    %1308 = vmatpush1.msra.mxu0 %v474
    %1309 = vmatprep.subr.mxu0 %v479
    %1310 = vmatpush1.msra.mxu0 %v478
    %1311 = vmatprep.subr.mxu0 %v483
    %1312 = vmatpush1.msra.mxu0 %v482
    %1313 = vmatprep.subr.mxu0 %v487
    %1314 = vmatpush1.msra.mxu0 %v486
    %1315 = vmatprep.subr.mxu0 %v491
    %1316 = vmatpush1.msra.mxu0 %v490
    %1317 = vmatprep.subr.mxu0 0.0
    %1318 = vmatpush1.msra.mxu0 0.0
    %1319 = vmatprep.subr.mxu0 0.0
    %1320 = vmatpush1.msra.mxu0 0.0
    %1321 = vmatprep.subr.mxu0 0.0
    %1322 = vmatpush1.msra.mxu0 0.0
    %1323 = vmatprep.subr.mxu0 0.0
    %1324 = vmatpush1.msra.mxu0 0.0
    %1325 = vmatprep.subr.mxu0 0.0
    %1326 = vmatpush1.msra.mxu0 0.0
    %1327 = vmatprep.subr.mxu0 0.0
    %1328 = vmatpush1.msra.mxu0 0.0
    %1329 = vmatprep.subr.mxu0 0.0
    %1330 = vmatpush1.msra.mxu0 0.0
    %1331 = vmatprep.subr.mxu0 0.0
    %1332 = vmatpush1.msra.mxu0 0.0
    %1333 = vmatprep.subr.mxu0 0.0
    %1334 = vmatpush1.msra.mxu0 0.0
    %1335 = vmatprep.subr.mxu0 0.0
    %1336 = vmatpush1.msra.mxu0 0.0
    %1337 = vmatprep.subr.mxu0 0.0
    %1338 = vmatpush1.msra.mxu0 0.0
    %1339 = vmatprep.subr.mxu0 0.0
    %1340 = vmatpush1.msra.mxu0 0.0
    %1341 = vmatprep.subr.mxu0 0.0
    %1342 = vmatpush1.msra.mxu0 0.0
    %1343 = vmatprep.subr.mxu0 0.0
    %1344 = vmatpush1.msra.mxu0 0.0
    %1345 = vmatprep.subr.mxu0 0.0
    %1346 = vmatpush1.msra.mxu0 0.0
    %1347 = vmatprep.subr.mxu0 0.0
    %1348 = vmatpush1.msra.mxu0 0.0
    %1349 = vmatprep.mubr.f32.mxu0 0.0
    %1350 = vmatmul.mubr.f32.gmra.mrb[0].mxu0 %v1204
    %v1351 = vpop.f32.mrb[0].mxu0
    %v1352 = vadd.f32 0.0, %v1351
    %v1353 = vpop.f32.mrb[0].mxu0
    %v1354 = vadd.f32 0.0, %v1353
    %1355 = vdwg.mxu0
    %v1356 = vadd.f32 %v1210, %v1281
    %v1357 = vadd.f32 %v1211, %v1283
    %v1358 = vadd.f32 %v1212, %v1352
    %v1359 = vadd.f32 %v1213, %v1354
    %v1360 = vxor.u32 %v1356, 2147483648
    %v1361 = vmul.f32 %v1360, 1.442695
    %v1362 = vpow.pop %v1361
    %v1363 = vadd.f32 %v1362, 1.0
    %v1364 = vrcp.pop %v1363
    %v1365 = vmul.f32 1.0, %v1364
    %v1366 = vxor.u32 %v1357, 2147483648
    %v1367 = vmul.f32 %v1366, 1.442695
    %v1368 = vpow.pop %v1367
    %v1369 = vadd.f32 %v1368, 1.0
    %v1370 = vrcp.pop %v1369
    %v1371 = vmul.f32 1.0, %v1370
    %v1372 = vtanh.pop %v1358
    %v1373 = vxor.u32 %v1359, 2147483648
    %v1374 = vmul.f32 %v1373, 1.442695
    %v1375 = vpow.pop %v1374
    %v1376 = vadd.f32 %v1375, 1.0
    %v1377 = vrcp.pop %v1376
    %v1378 = vmul.f32 1.0, %v1377
    %v1379 = vmul.f32 %v1371, %v1202
    %v1380 = vmul.f32 %v1365, %v1372
    %v1381 = vadd.f32 %v1379, %v1380
    %v1382 = vtanh.pop %v1381
    %v1383 = vmul.f32 %v1378, %v1382
    %s1384 = scalar_lea.vmem [#allocation2], 32
    %1385 = vst [vmem:[%s1384] sm:$0xff] %v1383
    %s1386 = smul.u32 5, 4
    %s1387 = smul.addr %s1386, 8
    %s1388 = scalar_lea.vmem [#allocation3], %s1387
    %v1389 = vld [vmem:[%s1388] sm:$0xff]
    %v1390 = vld [vmem:[%s1388 + $0x8] sm:$0xff]
    %v1391 = vld [vmem:[%s1388 + $0x10] sm:$0xff]
    %v1392 = vld [vmem:[%s1388 + $0x18] sm:$0xff]
    %1393 = vmatprep.subr.mxu0 %v429
    %1394 = vmatpush1.msra.mxu0 %v428
    %1395 = vmatprep.subr.mxu0 %v433
    %1396 = vmatpush1.msra.mxu0 %v432
    %1397 = vmatprep.subr.mxu0 %v437
    %1398 = vmatpush1.msra.mxu0 %v436
    %1399 = vmatprep.subr.mxu0 %v441
    %1400 = vmatpush1.msra.mxu0 %v440
    %1401 = vmatprep.subr.mxu0 %v445
    %1402 = vmatpush1.msra.mxu0 %v444
    %1403 = vmatprep.subr.mxu0 %v449
    %1404 = vmatpush1.msra.mxu0 %v448
    %1405 = vmatprep.subr.mxu0 %v453
    %1406 = vmatpush1.msra.mxu0 %v452
    %1407 = vmatprep.subr.mxu0 %v457
    %1408 = vmatpush1.msra.mxu0 %v456
    %1409 = vmatprep.subr.mxu0 %v461
    %1410 = vmatpush1.msra.mxu0 %v460
    %1411 = vmatprep.subr.mxu0 %v465
    %1412 = vmatpush1.msra.mxu0 %v464
    %1413 = vmatprep.subr.mxu0 %v469
    %1414 = vmatpush1.msra.mxu0 %v468
    %1415 = vmatprep.subr.mxu0 %v473
    %1416 = vmatpush1.msra.mxu0 %v472
    %1417 = vmatprep.subr.mxu0 %v477
    %1418 = vmatpush1.msra.mxu0 %v476
    %1419 = vmatprep.subr.mxu0 %v481
    %1420 = vmatpush1.msra.mxu0 %v480
    %1421 = vmatprep.subr.mxu0 %v485
    %1422 = vmatpush1.msra.mxu0 %v484
    %1423 = vmatprep.subr.mxu0 %v489
    %1424 = vmatpush1.msra.mxu0 %v488
    %1425 = vmatprep.subr.mxu0 0.0
    %1426 = vmatpush1.msra.mxu0 0.0
    %1427 = vmatprep.subr.mxu0 0.0
    %1428 = vmatpush1.msra.mxu0 0.0
    %1429 = vmatprep.subr.mxu0 0.0
    %1430 = vmatpush1.msra.mxu0 0.0
    %1431 = vmatprep.subr.mxu0 0.0
    %1432 = vmatpush1.msra.mxu0 0.0
    %1433 = vmatprep.subr.mxu0 0.0
    %1434 = vmatpush1.msra.mxu0 0.0
    %1435 = vmatprep.subr.mxu0 0.0
    %1436 = vmatpush1.msra.mxu0 0.0
    %1437 = vmatprep.subr.mxu0 0.0
    %1438 = vmatpush1.msra.mxu0 0.0
    %1439 = vmatprep.subr.mxu0 0.0
    %1440 = vmatpush1.msra.mxu0 0.0
    %1441 = vmatprep.subr.mxu0 0.0
    %1442 = vmatpush1.msra.mxu0 0.0
    %1443 = vmatprep.subr.mxu0 0.0
    %1444 = vmatpush1.msra.mxu0 0.0
    %1445 = vmatprep.subr.mxu0 0.0
    %1446 = vmatpush1.msra.mxu0 0.0
    %1447 = vmatprep.subr.mxu0 0.0
    %1448 = vmatpush1.msra.mxu0 0.0
    %1449 = vmatprep.subr.mxu0 0.0
    %1450 = vmatpush1.msra.mxu0 0.0
    %1451 = vmatprep.subr.mxu0 0.0
    %1452 = vmatpush1.msra.mxu0 0.0
    %1453 = vmatprep.subr.mxu0 0.0
    %1454 = vmatpush1.msra.mxu0 0.0
    %1455 = vmatprep.subr.mxu0 0.0
    %1456 = vmatpush1.msra.mxu0 0.0
    %1457 = vmatprep.mubr.f32.mxu0 0.0
    %1458 = vmatmul.mubr.f32.gmra.mrb[0].mxu0 %v1383
    %v1459 = vpop.f32.mrb[0].mxu0
    %v1460 = vadd.f32 0.0, %v1459
    %v1461 = vpop.f32.mrb[0].mxu0
    %v1462 = vadd.f32 0.0, %v1461
    %1463 = vdwg.mxu0
    %1464 = vmatprep.subr.mxu0 %v431
    %1465 = vmatpush1.msra.mxu0 %v430
    %1466 = vmatprep.subr.mxu0 %v435
    %1467 = vmatpush1.msra.mxu0 %v434
    %1468 = vmatprep.subr.mxu0 %v439
    %1469 = vmatpush1.msra.mxu0 %v438
    %1470 = vmatprep.subr.mxu0 %v443
    %1471 = vmatpush1.msra.mxu0 %v442
    %1472 = vmatprep.subr.mxu0 %v447
    %1473 = vmatpush1.msra.mxu0 %v446
    %1474 = vmatprep.subr.mxu0 %v451
    %1475 = vmatpush1.msra.mxu0 %v450
    %1476 = vmatprep.subr.mxu0 %v455
    %1477 = vmatpush1.msra.mxu0 %v454
    %1478 = vmatprep.subr.mxu0 %v459
    %1479 = vmatpush1.msra.mxu0 %v458
    %1480 = vmatprep.subr.mxu0 %v463
    %1481 = vmatpush1.msra.mxu0 %v462
    %1482 = vmatprep.subr.mxu0 %v467
    %1483 = vmatpush1.msra.mxu0 %v466
    %1484 = vmatprep.subr.mxu0 %v471
    %1485 = vmatpush1.msra.mxu0 %v470
    %1486 = vmatprep.subr.mxu0 %v475
    %1487 = vmatpush1.msra.mxu0 %v474
    %1488 = vmatprep.subr.mxu0 %v479
    %1489 = vmatpush1.msra.mxu0 %v478
    %1490 = vmatprep.subr.mxu0 %v483
    %1491 = vmatpush1.msra.mxu0 %v482
    %1492 = vmatprep.subr.mxu0 %v487
    %1493 = vmatpush1.msra.mxu0 %v486
    %1494 = vmatprep.subr.mxu0 %v491
    %1495 = vmatpush1.msra.mxu0 %v490
    %1496 = vmatprep.subr.mxu0 0.0
    %1497 = vmatpush1.msra.mxu0 0.0
    %1498 = vmatprep.subr.mxu0 0.0
    %1499 = vmatpush1.msra.mxu0 0.0
    %1500 = vmatprep.subr.mxu0 0.0
    %1501 = vmatpush1.msra.mxu0 0.0
    %1502 = vmatprep.subr.mxu0 0.0
    %1503 = vmatpush1.msra.mxu0 0.0
    %1504 = vmatprep.subr.mxu0 0.0
    %1505 = vmatpush1.msra.mxu0 0.0
    %1506 = vmatprep.subr.mxu0 0.0
    %1507 = vmatpush1.msra.mxu0 0.0
    %1508 = vmatprep.subr.mxu0 0.0
    %1509 = vmatpush1.msra.mxu0 0.0
    %1510 = vmatprep.subr.mxu0 0.0
    %1511 = vmatpush1.msra.mxu0 0.0
    %1512 = vmatprep.subr.mxu0 0.0
    %1513 = vmatpush1.msra.mxu0 0.0
    %1514 = vmatprep.subr.mxu0 0.0
    %1515 = vmatpush1.msra.mxu0 0.0
    %1516 = vmatprep.subr.mxu0 0.0
    %1517 = vmatpush1.msra.mxu0 0.0
    %1518 = vmatprep.subr.mxu0 0.0
    %1519 = vmatpush1.msra.mxu0 0.0
    %1520 = vmatprep.subr.mxu0 0.0
    %1521 = vmatpush1.msra.mxu0 0.0
    %1522 = vmatprep.subr.mxu0 0.0
    %1523 = vmatpush1.msra.mxu0 0.0
    %1524 = vmatprep.subr.mxu0 0.0
    %1525 = vmatpush1.msra.mxu0 0.0
    %1526 = vmatprep.subr.mxu0 0.0
    %1527 = vmatpush1.msra.mxu0 0.0
    %1528 = vmatprep.mubr.f32.mxu0 0.0
    %1529 = vmatmul.mubr.f32.gmra.mrb[0].mxu0 %v1383
    %v1530 = vpop.f32.mrb[0].mxu0
    %v1531 = vadd.f32 0.0, %v1530
    %v1532 = vpop.f32.mrb[0].mxu0
    %v1533 = vadd.f32 0.0, %v1532
    %1534 = vdwg.mxu0
    %v1535 = vadd.f32 %v1389, %v1460
    %v1536 = vadd.f32 %v1390, %v1462
    %v1537 = vadd.f32 %v1391, %v1531
    %v1538 = vadd.f32 %v1392, %v1533
    %v1539 = vxor.u32 %v1535, 2147483648
    %v1540 = vmul.f32 %v1539, 1.442695
    %v1541 = vpow.pop %v1540
    %v1542 = vadd.f32 %v1541, 1.0
    %v1543 = vrcp.pop %v1542
    %v1544 = vmul.f32 1.0, %v1543
    %v1545 = vxor.u32 %v1536, 2147483648
    %v1546 = vmul.f32 %v1545, 1.442695
    %v1547 = vpow.pop %v1546
    %v1548 = vadd.f32 %v1547, 1.0
    %v1549 = vrcp.pop %v1548
    %v1550 = vmul.f32 1.0, %v1549
    %v1551 = vtanh.pop %v1537
    %v1552 = vxor.u32 %v1538, 2147483648
    %v1553 = vmul.f32 %v1552, 1.442695
    %v1554 = vpow.pop %v1553
    %v1555 = vadd.f32 %v1554, 1.0
    %v1556 = vrcp.pop %v1555
    %v1557 = vmul.f32 1.0, %v1556
    %v1558 = vmul.f32 %v1550, %v1381
    %v1559 = vmul.f32 %v1544, %v1551
    %v1560 = vadd.f32 %v1558, %v1559
    %v1561 = vtanh.pop %v1560
    %v1562 = vmul.f32 %v1557, %v1561
    %s1563 = scalar_lea.vmem [#allocation2], 40
    %1564 = vst [vmem:[%s1563] sm:$0xff] %v1562
    %s1565 = smul.u32 6, 4
    %s1566 = smul.addr %s1565, 8
    %s1567 = scalar_lea.vmem [#allocation3], %s1566
    %v1568 = vld [vmem:[%s1567] sm:$0xff]
    %v1569 = vld [vmem:[%s1567 + $0x8] sm:$0xff]
    %v1570 = vld [vmem:[%s1567 + $0x10] sm:$0xff]
    %v1571 = vld [vmem:[%s1567 + $0x18] sm:$0xff]
    %1572 = vmatprep.subr.mxu0 %v429
    %1573 = vmatpush1.msra.mxu0 %v428
    %1574 = vmatprep.subr.mxu0 %v433
    %1575 = vmatpush1.msra.mxu0 %v432
    %1576 = vmatprep.subr.mxu0 %v437
    %1577 = vmatpush1.msra.mxu0 %v436
    %1578 = vmatprep.subr.mxu0 %v441
    %1579 = vmatpush1.msra.mxu0 %v440
    %1580 = vmatprep.subr.mxu0 %v445
    %1581 = vmatpush1.msra.mxu0 %v444
    %1582 = vmatprep.subr.mxu0 %v449
    %1583 = vmatpush1.msra.mxu0 %v448
    %1584 = vmatprep.subr.mxu0 %v453
    %1585 = vmatpush1.msra.mxu0 %v452
    %1586 = vmatprep.subr.mxu0 %v457
    %1587 = vmatpush1.msra.mxu0 %v456
    %1588 = vmatprep.subr.mxu0 %v461
    %1589 = vmatpush1.msra.mxu0 %v460
    %1590 = vmatprep.subr.mxu0 %v465
    %1591 = vmatpush1.msra.mxu0 %v464
    %1592 = vmatprep.subr.mxu0 %v469
    %1593 = vmatpush1.msra.mxu0 %v468
    %1594 = vmatprep.subr.mxu0 %v473
    %1595 = vmatpush1.msra.mxu0 %v472
    %1596 = vmatprep.subr.mxu0 %v477
    %1597 = vmatpush1.msra.mxu0 %v476
    %1598 = vmatprep.subr.mxu0 %v481
    %1599 = vmatpush1.msra.mxu0 %v480
    %1600 = vmatprep.subr.mxu0 %v485
    %1601 = vmatpush1.msra.mxu0 %v484
    %1602 = vmatprep.subr.mxu0 %v489
    %1603 = vmatpush1.msra.mxu0 %v488
    %1604 = vmatprep.subr.mxu0 0.0
    %1605 = vmatpush1.msra.mxu0 0.0
    %1606 = vmatprep.subr.mxu0 0.0
    %1607 = vmatpush1.msra.mxu0 0.0
    %1608 = vmatprep.subr.mxu0 0.0
    %1609 = vmatpush1.msra.mxu0 0.0
    %1610 = vmatprep.subr.mxu0 0.0
    %1611 = vmatpush1.msra.mxu0 0.0
    %1612 = vmatprep.subr.mxu0 0.0
    %1613 = vmatpush1.msra.mxu0 0.0
    %1614 = vmatprep.subr.mxu0 0.0
    %1615 = vmatpush1.msra.mxu0 0.0
    %1616 = vmatprep.subr.mxu0 0.0
    %1617 = vmatpush1.msra.mxu0 0.0
    %1618 = vmatprep.subr.mxu0 0.0
    %1619 = vmatpush1.msra.mxu0 0.0
    %1620 = vmatprep.subr.mxu0 0.0
    %1621 = vmatpush1.msra.mxu0 0.0
    %1622 = vmatprep.subr.mxu0 0.0
    %1623 = vmatpush1.msra.mxu0 0.0
    %1624 = vmatprep.subr.mxu0 0.0
    %1625 = vmatpush1.msra.mxu0 0.0
    %1626 = vmatprep.subr.mxu0 0.0
    %1627 = vmatpush1.msra.mxu0 0.0
    %1628 = vmatprep.subr.mxu0 0.0
    %1629 = vmatpush1.msra.mxu0 0.0
    %1630 = vmatprep.subr.mxu0 0.0
    %1631 = vmatpush1.msra.mxu0 0.0
    %1632 = vmatprep.subr.mxu0 0.0
    %1633 = vmatpush1.msra.mxu0 0.0
    %1634 = vmatprep.subr.mxu0 0.0
    %1635 = vmatpush1.msra.mxu0 0.0
    %1636 = vmatprep.mubr.f32.mxu0 0.0
    %1637 = vmatmul.mubr.f32.gmra.mrb[0].mxu0 %v1562
    %v1638 = vpop.f32.mrb[0].mxu0
    %v1639 = vadd.f32 0.0, %v1638
    %v1640 = vpop.f32.mrb[0].mxu0
    %v1641 = vadd.f32 0.0, %v1640
    %1642 = vdwg.mxu0
    %1643 = vmatprep.subr.mxu0 %v431
    %1644 = vmatpush1.msra.mxu0 %v430
    %1645 = vmatprep.subr.mxu0 %v435
    %1646 = vmatpush1.msra.mxu0 %v434
    %1647 = vmatprep.subr.mxu0 %v439
    %1648 = vmatpush1.msra.mxu0 %v438
    %1649 = vmatprep.subr.mxu0 %v443
    %1650 = vmatpush1.msra.mxu0 %v442
    %1651 = vmatprep.subr.mxu0 %v447
    %1652 = vmatpush1.msra.mxu0 %v446
    %1653 = vmatprep.subr.mxu0 %v451
    %1654 = vmatpush1.msra.mxu0 %v450
    %1655 = vmatprep.subr.mxu0 %v455
    %1656 = vmatpush1.msra.mxu0 %v454
    %1657 = vmatprep.subr.mxu0 %v459
    %1658 = vmatpush1.msra.mxu0 %v458
    %1659 = vmatprep.subr.mxu0 %v463
    %1660 = vmatpush1.msra.mxu0 %v462
    %1661 = vmatprep.subr.mxu0 %v467
    %1662 = vmatpush1.msra.mxu0 %v466
    %1663 = vmatprep.subr.mxu0 %v471
    %1664 = vmatpush1.msra.mxu0 %v470
    %1665 = vmatprep.subr.mxu0 %v475
    %1666 = vmatpush1.msra.mxu0 %v474
    %1667 = vmatprep.subr.mxu0 %v479
    %1668 = vmatpush1.msra.mxu0 %v478
    %1669 = vmatprep.subr.mxu0 %v483
    %1670 = vmatpush1.msra.mxu0 %v482
    %1671 = vmatprep.subr.mxu0 %v487
    %1672 = vmatpush1.msra.mxu0 %v486
    %1673 = vmatprep.subr.mxu0 %v491
    %1674 = vmatpush1.msra.mxu0 %v490
    %1675 = vmatprep.subr.mxu0 0.0
    %1676 = vmatpush1.msra.mxu0 0.0
    %1677 = vmatprep.subr.mxu0 0.0
    %1678 = vmatpush1.msra.mxu0 0.0
    %1679 = vmatprep.subr.mxu0 0.0
    %1680 = vmatpush1.msra.mxu0 0.0
    %1681 = vmatprep.subr.mxu0 0.0
    %1682 = vmatpush1.msra.mxu0 0.0
    %1683 = vmatprep.subr.mxu0 0.0
    %1684 = vmatpush1.msra.mxu0 0.0
    %1685 = vmatprep.subr.mxu0 0.0
    %1686 = vmatpush1.msra.mxu0 0.0
    %1687 = vmatprep.subr.mxu0 0.0
    %1688 = vmatpush1.msra.mxu0 0.0
    %1689 = vmatprep.subr.mxu0 0.0
    %1690 = vmatpush1.msra.mxu0 0.0
    %1691 = vmatprep.subr.mxu0 0.0
    %1692 = vmatpush1.msra.mxu0 0.0
    %1693 = vmatprep.subr.mxu0 0.0
    %1694 = vmatpush1.msra.mxu0 0.0
    %1695 = vmatprep.subr.mxu0 0.0
    %1696 = vmatpush1.msra.mxu0 0.0
    %1697 = vmatprep.subr.mxu0 0.0
    %1698 = vmatpush1.msra.mxu0 0.0
    %1699 = vmatprep.subr.mxu0 0.0
    %1700 = vmatpush1.msra.mxu0 0.0
    %1701 = vmatprep.subr.mxu0 0.0
    %1702 = vmatpush1.msra.mxu0 0.0
    %1703 = vmatprep.subr.mxu0 0.0
    %1704 = vmatpush1.msra.mxu0 0.0
    %1705 = vmatprep.subr.mxu0 0.0
    %1706 = vmatpush1.msra.mxu0 0.0
    %1707 = vmatprep.mubr.f32.mxu0 0.0
    %1708 = vmatmul.mubr.f32.gmra.mrb[0].mxu0 %v1562
    %v1709 = vpop.f32.mrb[0].mxu0
    %v1710 = vadd.f32 0.0, %v1709
    %v1711 = vpop.f32.mrb[0].mxu0
    %v1712 = vadd.f32 0.0, %v1711
    %1713 = vdwg.mxu0
    %v1714 = vadd.f32 %v1568, %v1639
    %v1715 = vadd.f32 %v1569, %v1641
    %v1716 = vadd.f32 %v1570, %v1710
    %v1717 = vadd.f32 %v1571, %v1712
    %v1718 = vxor.u32 %v1714, 2147483648
    %v1719 = vmul.f32 %v1718, 1.442695
    %v1720 = vpow.pop %v1719
    %v1721 = vadd.f32 %v1720, 1.0
    %v1722 = vrcp.pop %v1721
    %v1723 = vmul.f32 1.0, %v1722
    %v1724 = vxor.u32 %v1715, 2147483648
    %v1725 = vmul.f32 %v1724, 1.442695
    %v1726 = vpow.pop %v1725
    %v1727 = vadd.f32 %v1726, 1.0
    %v1728 = vrcp.pop %v1727
    %v1729 = vmul.f32 1.0, %v1728
    %v1730 = vtanh.pop %v1716
    %v1731 = vxor.u32 %v1717, 2147483648
    %v1732 = vmul.f32 %v1731, 1.442695
    %v1733 = vpow.pop %v1732
    %v1734 = vadd.f32 %v1733, 1.0
    %v1735 = vrcp.pop %v1734
    %v1736 = vmul.f32 1.0, %v1735
    %v1737 = vmul.f32 %v1729, %v1560
    %v1738 = vmul.f32 %v1723, %v1730
    %v1739 = vadd.f32 %v1737, %v1738
    %v1740 = vtanh.pop %v1739
    %v1741 = vmul.f32 %v1736, %v1740
    %s1742 = scalar_lea.vmem [#allocation2], 48
    %1743 = vst [vmem:[%s1742] sm:$0xff] %v1741
    %s1744 = smul.u32 7, 4
    %s1745 = smul.addr %s1744, 8
    %s1746 = scalar_lea.vmem [#allocation3], %s1745
    %v1747 = vld [vmem:[%s1746] sm:$0xff]
    %v1748 = vld [vmem:[%s1746 + $0x8] sm:$0xff]
    %v1749 = vld [vmem:[%s1746 + $0x10] sm:$0xff]
    %v1750 = vld [vmem:[%s1746 + $0x18] sm:$0xff]
    %1751 = vmatprep.subr.mxu0 %v429
    %1752 = vmatpush1.msra.mxu0 %v428
    %1753 = vmatprep.subr.mxu0 %v433
    %1754 = vmatpush1.msra.mxu0 %v432
    %1755 = vmatprep.subr.mxu0 %v437
    %1756 = vmatpush1.msra.mxu0 %v436
    %1757 = vmatprep.subr.mxu0 %v441
    %1758 = vmatpush1.msra.mxu0 %v440
    %1759 = vmatprep.subr.mxu0 %v445
    %1760 = vmatpush1.msra.mxu0 %v444
    %1761 = vmatprep.subr.mxu0 %v449
    %1762 = vmatpush1.msra.mxu0 %v448
    %1763 = vmatprep.subr.mxu0 %v453
    %1764 = vmatpush1.msra.mxu0 %v452
    %1765 = vmatprep.subr.mxu0 %v457
    %1766 = vmatpush1.msra.mxu0 %v456
    %1767 = vmatprep.subr.mxu0 %v461
    %1768 = vmatpush1.msra.mxu0 %v460
    %1769 = vmatprep.subr.mxu0 %v465
    %1770 = vmatpush1.msra.mxu0 %v464
    %1771 = vmatprep.subr.mxu0 %v469
    %1772 = vmatpush1.msra.mxu0 %v468
    %1773 = vmatprep.subr.mxu0 %v473
    %1774 = vmatpush1.msra.mxu0 %v472
    %1775 = vmatprep.subr.mxu0 %v477
    %1776 = vmatpush1.msra.mxu0 %v476
    %1777 = vmatprep.subr.mxu0 %v481
    %1778 = vmatpush1.msra.mxu0 %v480
    %1779 = vmatprep.subr.mxu0 %v485
    %1780 = vmatpush1.msra.mxu0 %v484
    %1781 = vmatprep.subr.mxu0 %v489
    %1782 = vmatpush1.msra.mxu0 %v488
    %1783 = vmatprep.subr.mxu0 0.0
    %1784 = vmatpush1.msra.mxu0 0.0
    %1785 = vmatprep.subr.mxu0 0.0
    %1786 = vmatpush1.msra.mxu0 0.0
    %1787 = vmatprep.subr.mxu0 0.0
    %1788 = vmatpush1.msra.mxu0 0.0
    %1789 = vmatprep.subr.mxu0 0.0
    %1790 = vmatpush1.msra.mxu0 0.0
    %1791 = vmatprep.subr.mxu0 0.0
    %1792 = vmatpush1.msra.mxu0 0.0
    %1793 = vmatprep.subr.mxu0 0.0
    %1794 = vmatpush1.msra.mxu0 0.0
    %1795 = vmatprep.subr.mxu0 0.0
    %1796 = vmatpush1.msra.mxu0 0.0
    %1797 = vmatprep.subr.mxu0 0.0
    %1798 = vmatpush1.msra.mxu0 0.0
    %1799 = vmatprep.subr.mxu0 0.0
    %1800 = vmatpush1.msra.mxu0 0.0
    %1801 = vmatprep.subr.mxu0 0.0
    %1802 = vmatpush1.msra.mxu0 0.0
    %1803 = vmatprep.subr.mxu0 0.0
    %1804 = vmatpush1.msra.mxu0 0.0
    %1805 = vmatprep.subr.mxu0 0.0
    %1806 = vmatpush1.msra.mxu0 0.0
    %1807 = vmatprep.subr.mxu0 0.0
    %1808 = vmatpush1.msra.mxu0 0.0
    %1809 = vmatprep.subr.mxu0 0.0
    %1810 = vmatpush1.msra.mxu0 0.0
    %1811 = vmatprep.subr.mxu0 0.0
    %1812 = vmatpush1.msra.mxu0 0.0
    %1813 = vmatprep.subr.mxu0 0.0
    %1814 = vmatpush1.msra.mxu0 0.0
    %1815 = vmatprep.mubr.f32.mxu0 0.0
    %1816 = vmatmul.mubr.f32.gmra.mrb[0].mxu0 %v1741
    %v1817 = vpop.f32.mrb[0].mxu0
    %v1818 = vadd.f32 0.0, %v1817
    %v1819 = vpop.f32.mrb[0].mxu0
    %v1820 = vadd.f32 0.0, %v1819
    %1821 = vdwg.mxu0
    %1822 = vmatprep.subr.mxu0 %v431
    %1823 = vmatpush1.msra.mxu0 %v430
    %1824 = vmatprep.subr.mxu0 %v435
    %1825 = vmatpush1.msra.mxu0 %v434
    %1826 = vmatprep.subr.mxu0 %v439
    %1827 = vmatpush1.msra.mxu0 %v438
    %1828 = vmatprep.subr.mxu0 %v443
    %1829 = vmatpush1.msra.mxu0 %v442
    %1830 = vmatprep.subr.mxu0 %v447
    %1831 = vmatpush1.msra.mxu0 %v446
    %1832 = vmatprep.subr.mxu0 %v451
    %1833 = vmatpush1.msra.mxu0 %v450
    %1834 = vmatprep.subr.mxu0 %v455
    %1835 = vmatpush1.msra.mxu0 %v454
    %1836 = vmatprep.subr.mxu0 %v459
    %1837 = vmatpush1.msra.mxu0 %v458
    %1838 = vmatprep.subr.mxu0 %v463
    %1839 = vmatpush1.msra.mxu0 %v462
    %1840 = vmatprep.subr.mxu0 %v467
    %1841 = vmatpush1.msra.mxu0 %v466
    %1842 = vmatprep.subr.mxu0 %v471
    %1843 = vmatpush1.msra.mxu0 %v470
    %1844 = vmatprep.subr.mxu0 %v475
    %1845 = vmatpush1.msra.mxu0 %v474
    %1846 = vmatprep.subr.mxu0 %v479
    %1847 = vmatpush1.msra.mxu0 %v478
    %1848 = vmatprep.subr.mxu0 %v483
    %1849 = vmatpush1.msra.mxu0 %v482
    %1850 = vmatprep.subr.mxu0 %v487
    %1851 = vmatpush1.msra.mxu0 %v486
    %1852 = vmatprep.subr.mxu0 %v491
    %1853 = vmatpush1.msra.mxu0 %v490
    %1854 = vmatprep.subr.mxu0 0.0
    %1855 = vmatpush1.msra.mxu0 0.0
    %1856 = vmatprep.subr.mxu0 0.0
    %1857 = vmatpush1.msra.mxu0 0.0
    %1858 = vmatprep.subr.mxu0 0.0
    %1859 = vmatpush1.msra.mxu0 0.0
    %1860 = vmatprep.subr.mxu0 0.0
    %1861 = vmatpush1.msra.mxu0 0.0
    %1862 = vmatprep.subr.mxu0 0.0
    %1863 = vmatpush1.msra.mxu0 0.0
    %1864 = vmatprep.subr.mxu0 0.0
    %1865 = vmatpush1.msra.mxu0 0.0
    %1866 = vmatprep.subr.mxu0 0.0
    %1867 = vmatpush1.msra.mxu0 0.0
    %1868 = vmatprep.subr.mxu0 0.0
    %1869 = vmatpush1.msra.mxu0 0.0
    %1870 = vmatprep.subr.mxu0 0.0
    %1871 = vmatpush1.msra.mxu0 0.0
    %1872 = vmatprep.subr.mxu0 0.0
    %1873 = vmatpush1.msra.mxu0 0.0
    %1874 = vmatprep.subr.mxu0 0.0
    %1875 = vmatpush1.msra.mxu0 0.0
    %1876 = vmatprep.subr.mxu0 0.0
    %1877 = vmatpush1.msra.mxu0 0.0
    %1878 = vmatprep.subr.mxu0 0.0
    %1879 = vmatpush1.msra.mxu0 0.0
    %1880 = vmatprep.subr.mxu0 0.0
    %1881 = vmatpush1.msra.mxu0 0.0
    %1882 = vmatprep.subr.mxu0 0.0
    %1883 = vmatpush1.msra.mxu0 0.0
    %1884 = vmatprep.subr.mxu0 0.0
    %1885 = vmatpush1.msra.mxu0 0.0
    %1886 = vmatprep.mubr.f32.mxu0 0.0
    %1887 = vmatmul.mubr.f32.gmra.mrb[0].mxu0 %v1741
    %v1888 = vpop.f32.mrb[0].mxu0
    %v1889 = vadd.f32 0.0, %v1888
    %v1890 = vpop.f32.mrb[0].mxu0
    %v1891 = vadd.f32 0.0, %v1890
    %1892 = vdwg.mxu0
    %v1893 = vadd.f32 %v1747, %v1818
    %v1894 = vadd.f32 %v1748, %v1820
    %v1895 = vadd.f32 %v1749, %v1889
    %v1896 = vadd.f32 %v1750, %v1891
    %v1897 = vxor.u32 %v1893, 2147483648
    %v1898 = vmul.f32 %v1897, 1.442695
    %v1899 = vpow.pop %v1898
    %v1900 = vadd.f32 %v1899, 1.0
    %v1901 = vrcp.pop %v1900
    %v1902 = vmul.f32 1.0, %v1901
    %v1903 = vxor.u32 %v1894, 2147483648
    %v1904 = vmul.f32 %v1903, 1.442695
    %v1905 = vpow.pop %v1904
    %v1906 = vadd.f32 %v1905, 1.0
    %v1907 = vrcp.pop %v1906
    %v1908 = vmul.f32 1.0, %v1907
    %v1909 = vtanh.pop %v1895
    %v1910 = vxor.u32 %v1896, 2147483648
    %v1911 = vmul.f32 %v1910, 1.442695
    %v1912 = vpow.pop %v1911
    %v1913 = vadd.f32 %v1912, 1.0
    %v1914 = vrcp.pop %v1913
    %v1915 = vmul.f32 1.0, %v1914
    %v1916 = vmul.f32 %v1908, %v1739
    %v1917 = vmul.f32 %v1902, %v1909
    %v1918 = vadd.f32 %v1916, %v1917
    %v1919 = vtanh.pop %v1918
    %v1920 = vmul.f32 %v1915, %v1919
    %s1921 = scalar_lea.vmem [#allocation2], 56
    %1922 = vst [vmem:[%s1921] sm:$0xff] %v1920
    %s1923 = smul.u32 8, 4
    %s1924 = smul.addr %s1923, 8
    %s1925 = scalar_lea.vmem [#allocation3], %s1924
    %v1926 = vld [vmem:[%s1925] sm:$0xff]
    %v1927 = vld [vmem:[%s1925 + $0x8] sm:$0xff]
    %v1928 = vld [vmem:[%s1925 + $0x10] sm:$0xff]
    %v1929 = vld [vmem:[%s1925 + $0x18] sm:$0xff]
    %1930 = vmatprep.subr.mxu0 %v429
    %1931 = vmatpush1.msra.mxu0 %v428
    %1932 = vmatprep.subr.mxu0 %v433
    %1933 = vmatpush1.msra.mxu0 %v432
    %1934 = vmatprep.subr.mxu0 %v437
    %1935 = vmatpush1.msra.mxu0 %v436
    %1936 = vmatprep.subr.mxu0 %v441
    %1937 = vmatpush1.msra.mxu0 %v440
    %1938 = vmatprep.subr.mxu0 %v445
    %1939 = vmatpush1.msra.mxu0 %v444
    %1940 = vmatprep.subr.mxu0 %v449
    %1941 = vmatpush1.msra.mxu0 %v448
    %1942 = vmatprep.subr.mxu0 %v453
    %1943 = vmatpush1.msra.mxu0 %v452
    %1944 = vmatprep.subr.mxu0 %v457
    %1945 = vmatpush1.msra.mxu0 %v456
    %1946 = vmatprep.subr.mxu0 %v461
    %1947 = vmatpush1.msra.mxu0 %v460
    %1948 = vmatprep.subr.mxu0 %v465
    %1949 = vmatpush1.msra.mxu0 %v464
    %1950 = vmatprep.subr.mxu0 %v469
    %1951 = vmatpush1.msra.mxu0 %v468
    %1952 = vmatprep.subr.mxu0 %v473
    %1953 = vmatpush1.msra.mxu0 %v472
    %1954 = vmatprep.subr.mxu0 %v477
    %1955 = vmatpush1.msra.mxu0 %v476
    %1956 = vmatprep.subr.mxu0 %v481
    %1957 = vmatpush1.msra.mxu0 %v480
    %1958 = vmatprep.subr.mxu0 %v485
    %1959 = vmatpush1.msra.mxu0 %v484
    %1960 = vmatprep.subr.mxu0 %v489
    %1961 = vmatpush1.msra.mxu0 %v488
    %1962 = vmatprep.subr.mxu0 0.0
    %1963 = vmatpush1.msra.mxu0 0.0
    %1964 = vmatprep.subr.mxu0 0.0
    %1965 = vmatpush1.msra.mxu0 0.0
    %1966 = vmatprep.subr.mxu0 0.0
    %1967 = vmatpush1.msra.mxu0 0.0
    %1968 = vmatprep.subr.mxu0 0.0
    %1969 = vmatpush1.msra.mxu0 0.0
    %1970 = vmatprep.subr.mxu0 0.0
    %1971 = vmatpush1.msra.mxu0 0.0
    %1972 = vmatprep.subr.mxu0 0.0
    %1973 = vmatpush1.msra.mxu0 0.0
    %1974 = vmatprep.subr.mxu0 0.0
    %1975 = vmatpush1.msra.mxu0 0.0
    %1976 = vmatprep.subr.mxu0 0.0
    %1977 = vmatpush1.msra.mxu0 0.0
    %1978 = vmatprep.subr.mxu0 0.0
    %1979 = vmatpush1.msra.mxu0 0.0
    %1980 = vmatprep.subr.mxu0 0.0
    %1981 = vmatpush1.msra.mxu0 0.0
    %1982 = vmatprep.subr.mxu0 0.0
    %1983 = vmatpush1.msra.mxu0 0.0
    %1984 = vmatprep.subr.mxu0 0.0
    %1985 = vmatpush1.msra.mxu0 0.0
    %1986 = vmatprep.subr.mxu0 0.0
    %1987 = vmatpush1.msra.mxu0 0.0
    %1988 = vmatprep.subr.mxu0 0.0
    %1989 = vmatpush1.msra.mxu0 0.0
    %1990 = vmatprep.subr.mxu0 0.0
    %1991 = vmatpush1.msra.mxu0 0.0
    %1992 = vmatprep.subr.mxu0 0.0
    %1993 = vmatpush1.msra.mxu0 0.0
    %1994 = vmatprep.mubr.f32.mxu0 0.0
    %1995 = vmatmul.mubr.f32.gmra.mrb[0].mxu0 %v1920
    %v1996 = vpop.f32.mrb[0].mxu0
    %v1997 = vadd.f32 0.0, %v1996
    %v1998 = vpop.f32.mrb[0].mxu0
    %v1999 = vadd.f32 0.0, %v1998
    %2000 = vdwg.mxu0
    %2001 = vmatprep.subr.mxu0 %v431
    %2002 = vmatpush1.msra.mxu0 %v430
    %2003 = vmatprep.subr.mxu0 %v435
    %2004 = vmatpush1.msra.mxu0 %v434
    %2005 = vmatprep.subr.mxu0 %v439
    %2006 = vmatpush1.msra.mxu0 %v438
    %2007 = vmatprep.subr.mxu0 %v443
    %2008 = vmatpush1.msra.mxu0 %v442
    %2009 = vmatprep.subr.mxu0 %v447
    %2010 = vmatpush1.msra.mxu0 %v446
    %2011 = vmatprep.subr.mxu0 %v451
    %2012 = vmatpush1.msra.mxu0 %v450
    %2013 = vmatprep.subr.mxu0 %v455
    %2014 = vmatpush1.msra.mxu0 %v454
    %2015 = vmatprep.subr.mxu0 %v459
    %2016 = vmatpush1.msra.mxu0 %v458
    %2017 = vmatprep.subr.mxu0 %v463
    %2018 = vmatpush1.msra.mxu0 %v462
    %2019 = vmatprep.subr.mxu0 %v467
    %2020 = vmatpush1.msra.mxu0 %v466
    %2021 = vmatprep.subr.mxu0 %v471
    %2022 = vmatpush1.msra.mxu0 %v470
    %2023 = vmatprep.subr.mxu0 %v475
    %2024 = vmatpush1.msra.mxu0 %v474
    %2025 = vmatprep.subr.mxu0 %v479
    %2026 = vmatpush1.msra.mxu0 %v478
    %2027 = vmatprep.subr.mxu0 %v483
    %2028 = vmatpush1.msra.mxu0 %v482
    %2029 = vmatprep.subr.mxu0 %v487
    %2030 = vmatpush1.msra.mxu0 %v486
    %2031 = vmatprep.subr.mxu0 %v491
    %2032 = vmatpush1.msra.mxu0 %v490
    %2033 = vmatprep.subr.mxu0 0.0
    %2034 = vmatpush1.msra.mxu0 0.0
    %2035 = vmatprep.subr.mxu0 0.0
    %2036 = vmatpush1.msra.mxu0 0.0
    %2037 = vmatprep.subr.mxu0 0.0
    %2038 = vmatpush1.msra.mxu0 0.0
    %2039 = vmatprep.subr.mxu0 0.0
    %2040 = vmatpush1.msra.mxu0 0.0
    %2041 = vmatprep.subr.mxu0 0.0
    %2042 = vmatpush1.msra.mxu0 0.0
    %2043 = vmatprep.subr.mxu0 0.0
    %2044 = vmatpush1.msra.mxu0 0.0
    %2045 = vmatprep.subr.mxu0 0.0
    %2046 = vmatpush1.msra.mxu0 0.0
    %2047 = vmatprep.subr.mxu0 0.0
    %2048 = vmatpush1.msra.mxu0 0.0
    %2049 = vmatprep.subr.mxu0 0.0
    %2050 = vmatpush1.msra.mxu0 0.0
    %2051 = vmatprep.subr.mxu0 0.0
    %2052 = vmatpush1.msra.mxu0 0.0
    %2053 = vmatprep.subr.mxu0 0.0
    %2054 = vmatpush1.msra.mxu0 0.0
    %2055 = vmatprep.subr.mxu0 0.0
    %2056 = vmatpush1.msra.mxu0 0.0
    %2057 = vmatprep.subr.mxu0 0.0
    %2058 = vmatpush1.msra.mxu0 0.0
    %2059 = vmatprep.subr.mxu0 0.0
    %2060 = vmatpush1.msra.mxu0 0.0
    %2061 = vmatprep.subr.mxu0 0.0
    %2062 = vmatpush1.msra.mxu0 0.0
    %2063 = vmatprep.subr.mxu0 0.0
    %2064 = vmatpush1.msra.mxu0 0.0
    %2065 = vmatprep.mubr.f32.mxu0 0.0
    %2066 = vmatmul.mubr.f32.gmra.mrb[0].mxu0 %v1920
    %v2067 = vpop.f32.mrb[0].mxu0
    %v2068 = vadd.f32 0.0, %v2067
    %v2069 = vpop.f32.mrb[0].mxu0
    %v2070 = vadd.f32 0.0, %v2069
    %2071 = vdwg.mxu0
    %v2072 = vadd.f32 %v1926, %v1997
    %v2073 = vadd.f32 %v1927, %v1999
    %v2074 = vadd.f32 %v1928, %v2068
    %v2075 = vadd.f32 %v1929, %v2070
    %v2076 = vxor.u32 %v2072, 2147483648
    %v2077 = vmul.f32 %v2076, 1.442695
    %v2078 = vpow.pop %v2077
    %v2079 = vadd.f32 %v2078, 1.0
    %v2080 = vrcp.pop %v2079
    %v2081 = vmul.f32 1.0, %v2080
    %v2082 = vxor.u32 %v2073, 2147483648
    %v2083 = vmul.f32 %v2082, 1.442695
    %v2084 = vpow.pop %v2083
    %v2085 = vadd.f32 %v2084, 1.0
    %v2086 = vrcp.pop %v2085
    %v2087 = vmul.f32 1.0, %v2086
    %v2088 = vtanh.pop %v2074
    %v2089 = vxor.u32 %v2075, 2147483648
    %v2090 = vmul.f32 %v2089, 1.442695
    %v2091 = vpow.pop %v2090
    %v2092 = vadd.f32 %v2091, 1.0
    %v2093 = vrcp.pop %v2092
    %v2094 = vmul.f32 1.0, %v2093
    %v2095 = vmul.f32 %v2087, %v1918
    %v2096 = vmul.f32 %v2081, %v2088
    %v2097 = vadd.f32 %v2095, %v2096
    %v2098 = vtanh.pop %v2097
    %v2099 = vmul.f32 %v2094, %v2098
    %s2100 = scalar_lea.vmem [#allocation2], 64
    %2101 = vst [vmem:[%s2100] sm:$0xff] %v2099
    %v2102 = vld [vmem:[#allocation2] sm:$0xff]
    %v2103 = vld [vmem:[#allocation2 + $0x8] sm:$0xff]
    %v2104 = vld [vmem:[#allocation2 + $0x10] sm:$0xff]
    %v2105 = vld [vmem:[#allocation2 + $0x18] sm:$0xff]
    %v2106 = vld [vmem:[#allocation2 + $0x20] sm:$0xff]
    %v2107 = vld [vmem:[#allocation2 + $0x28] sm:$0xff]
    %v2108 = vld [vmem:[#allocation2 + $0x30] sm:$0xff]
    %v2109 = vld [vmem:[#allocation2 + $0x38] sm:$0xff]
    %v2110 = vld [vmem:[#allocation2 + $0x40] sm:$0xff]
    %s2111 = scalar_lea.vmem [#allocation7], 512
    %v2112 = vld [vmem:[%s2111] sm:$0xff]
    %v2113 = vld [vmem:[%s2111 + $0x8] sm:$0xff]
    %v2114 = vld [vmem:[%s2111 + $0x10] sm:$0xff]
    %v2115 = vld [vmem:[%s2111 + $0x18] sm:$0xff]
    %v2116 = vld [vmem:[%s2111 + $0x20] sm:$0xff]
    %v2117 = vld [vmem:[%s2111 + $0x28] sm:$0xff]
    %v2118 = vld [vmem:[%s2111 + $0x30] sm:$0xff]
    %v2119 = vld [vmem:[%s2111 + $0x38] sm:$0xff]
    %v2120 = vld [vmem:[%s2111 + $0x40] sm:$0xff]
    %v2121 = vld [vmem:[%s2111 + $0x48] sm:$0xff]
    %v2122 = vld [vmem:[%s2111 + $0x50] sm:$0xff]
    %v2123 = vld [vmem:[%s2111 + $0x58] sm:$0xff]
    %v2124 = vld [vmem:[%s2111 + $0x60] sm:$0xff]
    %v2125 = vld [vmem:[%s2111 + $0x68] sm:$0xff]
    %v2126 = vld [vmem:[%s2111 + $0x70] sm:$0xff]
    %v2127 = vld [vmem:[%s2111 + $0x78] sm:$0xff]
    %v2128 = vld [vmem:[%s2111 + $0x80] sm:$0xff]
    %v2129 = vld [vmem:[%s2111 + $0x88] sm:$0xff]
    %v2130 = vld [vmem:[%s2111 + $0x90] sm:$0xff]
    %v2131 = vld [vmem:[%s2111 + $0x98] sm:$0xff]
    %v2132 = vld [vmem:[%s2111 + $0xa0] sm:$0xff]
    %v2133 = vld [vmem:[%s2111 + $0xa8] sm:$0xff]
    %v2134 = vld [vmem:[%s2111 + $0xb0] sm:$0xff]
    %v2135 = vld [vmem:[%s2111 + $0xb8] sm:$0xff]
    %v2136 = vld [vmem:[%s2111 + $0xc0] sm:$0xff]
    %v2137 = vld [vmem:[%s2111 + $0xc8] sm:$0xff]
    %v2138 = vld [vmem:[%s2111 + $0xd0] sm:$0xff]
    %v2139 = vld [vmem:[%s2111 + $0xd8] sm:$0xff]
    %v2140 = vld [vmem:[%s2111 + $0xe0] sm:$0xff]
    %v2141 = vld [vmem:[%s2111 + $0xe8] sm:$0xff]
    %v2142 = vld [vmem:[%s2111 + $0xf0] sm:$0xff]
    %v2143 = vld [vmem:[%s2111 + $0xf8] sm:$0xff]
    %v2144 = vld [vmem:[%s2111 + $0x100] sm:$0xff]
    %v2145 = vld [vmem:[%s2111 + $0x108] sm:$0xff]
    %v2146 = vld [vmem:[%s2111 + $0x110] sm:$0xff]
    %v2147 = vld [vmem:[%s2111 + $0x118] sm:$0xff]
    %v2148 = vld [vmem:[%s2111 + $0x120] sm:$0xff]
    %v2149 = vld [vmem:[%s2111 + $0x128] sm:$0xff]
    %v2150 = vld [vmem:[%s2111 + $0x130] sm:$0xff]
    %v2151 = vld [vmem:[%s2111 + $0x138] sm:$0xff]
    %v2152 = vld [vmem:[%s2111 + $0x140] sm:$0xff]
    %v2153 = vld [vmem:[%s2111 + $0x148] sm:$0xff]
    %v2154 = vld [vmem:[%s2111 + $0x150] sm:$0xff]
    %v2155 = vld [vmem:[%s2111 + $0x158] sm:$0xff]
    %v2156 = vld [vmem:[%s2111 + $0x160] sm:$0xff]
    %v2157 = vld [vmem:[%s2111 + $0x168] sm:$0xff]
    %v2158 = vld [vmem:[%s2111 + $0x170] sm:$0xff]
    %v2159 = vld [vmem:[%s2111 + $0x178] sm:$0xff]
    %v2160 = vld [vmem:[%s2111 + $0x180] sm:$0xff]
    %v2161 = vld [vmem:[%s2111 + $0x188] sm:$0xff]
    %v2162 = vld [vmem:[%s2111 + $0x190] sm:$0xff]
    %v2163 = vld [vmem:[%s2111 + $0x198] sm:$0xff]
    %v2164 = vld [vmem:[%s2111 + $0x1a0] sm:$0xff]
    %v2165 = vld [vmem:[%s2111 + $0x1a8] sm:$0xff]
    %v2166 = vld [vmem:[%s2111 + $0x1b0] sm:$0xff]
    %v2167 = vld [vmem:[%s2111 + $0x1b8] sm:$0xff]
    %v2168 = vld [vmem:[%s2111 + $0x1c0] sm:$0xff]
    %v2169 = vld [vmem:[%s2111 + $0x1c8] sm:$0xff]
    %v2170 = vld [vmem:[%s2111 + $0x1d0] sm:$0xff]
    %v2171 = vld [vmem:[%s2111 + $0x1d8] sm:$0xff]
    %v2172 = vld [vmem:[%s2111 + $0x1e0] sm:$0xff]
    %v2173 = vld [vmem:[%s2111 + $0x1e8] sm:$0xff]
    %v2174 = vld [vmem:[%s2111 + $0x1f0] sm:$0xff]
    %v2175 = vld [vmem:[%s2111 + $0x1f8] sm:$0xff]
    %s2176 = scalar_lea.vmem %s3, 4
    %v2177 = vld [vmem:[%s2176] sm:$0xf]
    %v2179 = vlaneseq
    %v2180 = vshrl.u32 %v2179, 7
    %v2181 = vsub.s32 0, %v2180
    %v2182 = vrot.slane %v2177, %v2181
    %v2183 = vlaneseq
    %v2184 = vshrl.u32 %v2183, 7
    %v2185 = vsub.s32 1, %v2184
    %v2186 = vrot.slane %v2177, %v2185
    %v2187 = vlaneseq
    %v2188 = vshrl.u32 %v2187, 7
    %v2189 = vsub.s32 2, %v2188
    %v2190 = vrot.slane %v2177, %v2189
    %v2191 = vlaneseq
    %v2192 = vshrl.u32 %v2191, 7
    %v2193 = vsub.s32 3, %v2192
    %v2194 = vrot.slane %v2177, %v2193
    %2199 = vmatprep.subr.mxu0 %v2113
    %2200 = vmatpush1.msra.mxu0 %v2112
    %2201 = vmatprep.subr.mxu0 %v2117
    %2202 = vmatpush1.msra.mxu0 %v2116
    %2203 = vmatprep.subr.mxu0 %v2121
    %2204 = vmatpush1.msra.mxu0 %v2120
    %2205 = vmatprep.subr.mxu0 %v2125
    %2206 = vmatpush1.msra.mxu0 %v2124
    %2207 = vmatprep.subr.mxu0 %v2129
    %2208 = vmatpush1.msra.mxu0 %v2128
    %2209 = vmatprep.subr.mxu0 %v2133
    %2210 = vmatpush1.msra.mxu0 %v2132
    %2211 = vmatprep.subr.mxu0 %v2137
    %2212 = vmatpush1.msra.mxu0 %v2136
    %2213 = vmatprep.subr.mxu0 %v2141
    %2214 = vmatpush1.msra.mxu0 %v2140
    %2215 = vmatprep.subr.mxu0 %v2145
    %2216 = vmatpush1.msra.mxu0 %v2144
    %2217 = vmatprep.subr.mxu0 %v2149
    %2218 = vmatpush1.msra.mxu0 %v2148
    %2219 = vmatprep.subr.mxu0 %v2153
    %2220 = vmatpush1.msra.mxu0 %v2152
    %2221 = vmatprep.subr.mxu0 %v2157
    %2222 = vmatpush1.msra.mxu0 %v2156
    %2223 = vmatprep.subr.mxu0 %v2161
    %2224 = vmatpush1.msra.mxu0 %v2160
    %2225 = vmatprep.subr.mxu0 %v2165
    %2226 = vmatpush1.msra.mxu0 %v2164
    %2227 = vmatprep.subr.mxu0 %v2169
    %2228 = vmatpush1.msra.mxu0 %v2168
    %2229 = vmatprep.subr.mxu0 %v2173
    %2230 = vmatpush1.msra.mxu0 %v2172
    %2231 = vmatprep.subr.mxu0 0.0
    %2232 = vmatpush1.msra.mxu0 0.0
    %2233 = vmatprep.subr.mxu0 0.0
    %2234 = vmatpush1.msra.mxu0 0.0
    %2235 = vmatprep.subr.mxu0 0.0
    %2236 = vmatpush1.msra.mxu0 0.0
    %2237 = vmatprep.subr.mxu0 0.0
    %2238 = vmatpush1.msra.mxu0 0.0
    %2239 = vmatprep.subr.mxu0 0.0
    %2240 = vmatpush1.msra.mxu0 0.0
    %2241 = vmatprep.subr.mxu0 0.0
    %2242 = vmatpush1.msra.mxu0 0.0
    %2243 = vmatprep.subr.mxu0 0.0
    %2244 = vmatpush1.msra.mxu0 0.0
    %2245 = vmatprep.subr.mxu0 0.0
    %2246 = vmatpush1.msra.mxu0 0.0
    %2247 = vmatprep.subr.mxu0 0.0
    %2248 = vmatpush1.msra.mxu0 0.0
    %2249 = vmatprep.subr.mxu0 0.0
    %2250 = vmatpush1.msra.mxu0 0.0
    %2251 = vmatprep.subr.mxu0 0.0
    %2252 = vmatpush1.msra.mxu0 0.0
    %2253 = vmatprep.subr.mxu0 0.0
    %2254 = vmatpush1.msra.mxu0 0.0
    %2255 = vmatprep.subr.mxu0 0.0
    %2256 = vmatpush1.msra.mxu0 0.0
    %2257 = vmatprep.subr.mxu0 0.0
    %2258 = vmatpush1.msra.mxu0 0.0
    %2259 = vmatprep.subr.mxu0 0.0
    %2260 = vmatpush1.msra.mxu0 0.0
    %2261 = vmatprep.subr.mxu0 0.0
    %2262 = vmatpush1.msra.mxu0 0.0
    %2263 = vmatprep.mubr.f32.mxu0 0.0
    %2264 = vmatmul.mubr.f32.gmra.mrb[0].mxu0 %v2102
    %v2265 = vpop.f32.mrb[0].mxu0
    %v2266 = vadd.f32 %v2182, %v2265
    %v2267 = vpop.f32.mrb[0].mxu0
    %v2268 = vadd.f32 %v2186, %v2267
    %2269 = vmatprep.mubr.f32.mxu0 0.0
    %2270 = vmatmul.mubr.f32.gmra.mrb[0].mxu0 %v2103
    %v2271 = vpop.f32.mrb[0].mxu0
    %v2272 = vadd.f32 %v2182, %v2271
    %v2273 = vpop.f32.mrb[0].mxu0
    %v2274 = vadd.f32 %v2186, %v2273
    %2275 = vmatprep.mubr.f32.mxu0 0.0
    %2276 = vmatmul.mubr.f32.gmra.mrb[0].mxu0 %v2104
    %v2277 = vpop.f32.mrb[0].mxu0
    %v2278 = vadd.f32 %v2182, %v2277
    %v2279 = vpop.f32.mrb[0].mxu0
    %v2280 = vadd.f32 %v2186, %v2279
    %2281 = vmatprep.mubr.f32.mxu0 0.0
    %2282 = vmatmul.mubr.f32.gmra.mrb[0].mxu0 %v2105
    %v2283 = vpop.f32.mrb[0].mxu0
    %v2284 = vadd.f32 %v2182, %v2283
    %v2285 = vpop.f32.mrb[0].mxu0
    %v2286 = vadd.f32 %v2186, %v2285
    %2287 = vmatprep.mubr.f32.mxu0 0.0
    %2288 = vmatmul.mubr.f32.gmra.mrb[0].mxu0 %v2106
    %v2289 = vpop.f32.mrb[0].mxu0
    %v2290 = vadd.f32 %v2182, %v2289
    %v2291 = vpop.f32.mrb[0].mxu0
    %v2292 = vadd.f32 %v2186, %v2291
    %2293 = vmatprep.mubr.f32.mxu0 0.0
    %2294 = vmatmul.mubr.f32.gmra.mrb[0].mxu0 %v2107
    %v2295 = vpop.f32.mrb[0].mxu0
    %v2296 = vadd.f32 %v2182, %v2295
    %v2297 = vpop.f32.mrb[0].mxu0
    %v2298 = vadd.f32 %v2186, %v2297
    %2299 = vmatprep.mubr.f32.mxu0 0.0
    %2300 = vmatmul.mubr.f32.gmra.mrb[0].mxu0 %v2108
    %v2301 = vpop.f32.mrb[0].mxu0
    %v2302 = vadd.f32 %v2182, %v2301
    %v2303 = vpop.f32.mrb[0].mxu0
    %v2304 = vadd.f32 %v2186, %v2303
    %2305 = vmatprep.mubr.f32.mxu0 0.0
    %2306 = vmatmul.mubr.f32.gmra.mrb[0].mxu0 %v2109
    %v2307 = vpop.f32.mrb[0].mxu0
    %v2308 = vadd.f32 %v2182, %v2307
    %v2309 = vpop.f32.mrb[0].mxu0
    %v2310 = vadd.f32 %v2186, %v2309
    %2311 = vmatprep.mubr.f32.mxu0 0.0
    %2312 = vmatmul.mubr.f32.gmra.mrb[0].mxu0 %v2110
    %v2313 = vpop.f32.mrb[0].mxu0
    %v2314 = vadd.f32 %v2182, %v2313
    %v2315 = vpop.f32.mrb[0].mxu0
    %v2316 = vadd.f32 %v2186, %v2315
    %2317 = vdwg.mxu0
    %2318 = vmatprep.subr.mxu0 %v2115
    %2319 = vmatpush1.msra.mxu0 %v2114
    %2320 = vmatprep.subr.mxu0 %v2119
    %2321 = vmatpush1.msra.mxu0 %v2118
    %2322 = vmatprep.subr.mxu0 %v2123
    %2323 = vmatpush1.msra.mxu0 %v2122
    %2324 = vmatprep.subr.mxu0 %v2127
    %2325 = vmatpush1.msra.mxu0 %v2126
    %2326 = vmatprep.subr.mxu0 %v2131
    %2327 = vmatpush1.msra.mxu0 %v2130
    %2328 = vmatprep.subr.mxu0 %v2135
    %2329 = vmatpush1.msra.mxu0 %v2134
    %2330 = vmatprep.subr.mxu0 %v2139
    %2331 = vmatpush1.msra.mxu0 %v2138
    %2332 = vmatprep.subr.mxu0 %v2143
    %2333 = vmatpush1.msra.mxu0 %v2142
    %2334 = vmatprep.subr.mxu0 %v2147
    %2335 = vmatpush1.msra.mxu0 %v2146
    %2336 = vmatprep.subr.mxu0 %v2151
    %2337 = vmatpush1.msra.mxu0 %v2150
    %2338 = vmatprep.subr.mxu0 %v2155
    %2339 = vmatpush1.msra.mxu0 %v2154
    %2340 = vmatprep.subr.mxu0 %v2159
    %2341 = vmatpush1.msra.mxu0 %v2158
    %2342 = vmatprep.subr.mxu0 %v2163
    %2343 = vmatpush1.msra.mxu0 %v2162
    %2344 = vmatprep.subr.mxu0 %v2167
    %2345 = vmatpush1.msra.mxu0 %v2166
    %2346 = vmatprep.subr.mxu0 %v2171
    %2347 = vmatpush1.msra.mxu0 %v2170
    %2348 = vmatprep.subr.mxu0 %v2175
    %2349 = vmatpush1.msra.mxu0 %v2174
    %2350 = vmatprep.subr.mxu0 0.0
    %2351 = vmatpush1.msra.mxu0 0.0
    %2352 = vmatprep.subr.mxu0 0.0
    %2353 = vmatpush1.msra.mxu0 0.0
    %2354 = vmatprep.subr.mxu0 0.0
    %2355 = vmatpush1.msra.mxu0 0.0
    %2356 = vmatprep.subr.mxu0 0.0
    %2357 = vmatpush1.msra.mxu0 0.0
    %2358 = vmatprep.subr.mxu0 0.0
    %2359 = vmatpush1.msra.mxu0 0.0
    %2360 = vmatprep.subr.mxu0 0.0
    %2361 = vmatpush1.msra.mxu0 0.0
    %2362 = vmatprep.subr.mxu0 0.0
    %2363 = vmatpush1.msra.mxu0 0.0
    %2364 = vmatprep.subr.mxu0 0.0
    %2365 = vmatpush1.msra.mxu0 0.0
    %2366 = vmatprep.subr.mxu0 0.0
    %2367 = vmatpush1.msra.mxu0 0.0
    %2368 = vmatprep.subr.mxu0 0.0
    %2369 = vmatpush1.msra.mxu0 0.0
    %2370 = vmatprep.subr.mxu0 0.0
    %2371 = vmatpush1.msra.mxu0 0.0
    %2372 = vmatprep.subr.mxu0 0.0
    %2373 = vmatpush1.msra.mxu0 0.0
    %2374 = vmatprep.subr.mxu0 0.0
    %2375 = vmatpush1.msra.mxu0 0.0
    %2376 = vmatprep.subr.mxu0 0.0
    %2377 = vmatpush1.msra.mxu0 0.0
    %2378 = vmatprep.subr.mxu0 0.0
    %2379 = vmatpush1.msra.mxu0 0.0
    %2380 = vmatprep.subr.mxu0 0.0
    %2381 = vmatpush1.msra.mxu0 0.0
    %2382 = vmatprep.mubr.f32.mxu0 0.0
    %2383 = vmatmul.mubr.f32.gmra.mrb[0].mxu0 %v2102
    %v2384 = vpop.f32.mrb[0].mxu0
    %v2385 = vadd.f32 %v2190, %v2384
    %v2386 = vpop.f32.mrb[0].mxu0
    %v2387 = vadd.f32 %v2194, %v2386
    %2388 = vmatprep.mubr.f32.mxu0 0.0
    %2389 = vmatmul.mubr.f32.gmra.mrb[0].mxu0 %v2103
    %v2390 = vpop.f32.mrb[0].mxu0
    %v2391 = vadd.f32 %v2190, %v2390
    %v2392 = vpop.f32.mrb[0].mxu0
    %v2393 = vadd.f32 %v2194, %v2392
    %2394 = vmatprep.mubr.f32.mxu0 0.0
    %2395 = vmatmul.mubr.f32.gmra.mrb[0].mxu0 %v2104
    %v2396 = vpop.f32.mrb[0].mxu0
    %v2397 = vadd.f32 %v2190, %v2396
    %v2398 = vpop.f32.mrb[0].mxu0
    %v2399 = vadd.f32 %v2194, %v2398
    %2400 = vmatprep.mubr.f32.mxu0 0.0
    %2401 = vmatmul.mubr.f32.gmra.mrb[0].mxu0 %v2105
    %v2402 = vpop.f32.mrb[0].mxu0
    %v2403 = vadd.f32 %v2190, %v2402
    %v2404 = vpop.f32.mrb[0].mxu0
    %v2405 = vadd.f32 %v2194, %v2404
    %2406 = vmatprep.mubr.f32.mxu0 0.0
    %2407 = vmatmul.mubr.f32.gmra.mrb[0].mxu0 %v2106
    %v2408 = vpop.f32.mrb[0].mxu0
    %v2409 = vadd.f32 %v2190, %v2408
    %v2410 = vpop.f32.mrb[0].mxu0
    %v2411 = vadd.f32 %v2194, %v2410
    %2412 = vmatprep.mubr.f32.mxu0 0.0
    %2413 = vmatmul.mubr.f32.gmra.mrb[0].mxu0 %v2107
    %v2414 = vpop.f32.mrb[0].mxu0
    %v2415 = vadd.f32 %v2190, %v2414
    %v2416 = vpop.f32.mrb[0].mxu0
    %v2417 = vadd.f32 %v2194, %v2416
    %2418 = vmatprep.mubr.f32.mxu0 0.0
    %2419 = vmatmul.mubr.f32.gmra.mrb[0].mxu0 %v2108
    %v2420 = vpop.f32.mrb[0].mxu0
    %v2421 = vadd.f32 %v2190, %v2420
    %v2422 = vpop.f32.mrb[0].mxu0
    %v2423 = vadd.f32 %v2194, %v2422
    %2424 = vmatprep.mubr.f32.mxu0 0.0
    %2425 = vmatmul.mubr.f32.gmra.mrb[0].mxu0 %v2109
    %v2426 = vpop.f32.mrb[0].mxu0
    %v2427 = vadd.f32 %v2190, %v2426
    %v2428 = vpop.f32.mrb[0].mxu0
    %v2429 = vadd.f32 %v2194, %v2428
    %2430 = vmatprep.mubr.f32.mxu0 0.0
    %2431 = vmatmul.mubr.f32.gmra.mrb[0].mxu0 %v2110
    %v2432 = vpop.f32.mrb[0].mxu0
    %v2433 = vadd.f32 %v2190, %v2432
    %v2434 = vpop.f32.mrb[0].mxu0
    %v2435 = vadd.f32 %v2194, %v2434
    %2436 = vdwg.mxu0
    %2437 = vst [vmem:[#allocation3] sm:$0xff] %v2266
    %2438 = vst [vmem:[#allocation3 + $0x8] sm:$0xff] %v2268
    %2439 = vst [vmem:[#allocation3 + $0x10] sm:$0xff] %v2385
    %2440 = vst [vmem:[#allocation3 + $0x18] sm:$0xff] %v2387
    %2441 = vst [vmem:[#allocation3 + $0x20] sm:$0xff] %v2272
    %2442 = vst [vmem:[#allocation3 + $0x28] sm:$0xff] %v2274
    %2443 = vst [vmem:[#allocation3 + $0x30] sm:$0xff] %v2391
    %2444 = vst [vmem:[#allocation3 + $0x38] sm:$0xff] %v2393
    %2445 = vst [vmem:[#allocation3 + $0x40] sm:$0xff] %v2278
    %2446 = vst [vmem:[#allocation3 + $0x48] sm:$0xff] %v2280
    %2447 = vst [vmem:[#allocation3 + $0x50] sm:$0xff] %v2397
    %2448 = vst [vmem:[#allocation3 + $0x58] sm:$0xff] %v2399
    %2449 = vst [vmem:[#allocation3 + $0x60] sm:$0xff] %v2284
    %2450 = vst [vmem:[#allocation3 + $0x68] sm:$0xff] %v2286
    %2451 = vst [vmem:[#allocation3 + $0x70] sm:$0xff] %v2403
    %2452 = vst [vmem:[#allocation3 + $0x78] sm:$0xff] %v2405
    %2453 = vst [vmem:[#allocation3 + $0x80] sm:$0xff] %v2290
    %2454 = vst [vmem:[#allocation3 + $0x88] sm:$0xff] %v2292
    %2455 = vst [vmem:[#allocation3 + $0x90] sm:$0xff] %v2409
    %2456 = vst [vmem:[#allocation3 + $0x98] sm:$0xff] %v2411
    %2457 = vst [vmem:[#allocation3 + $0xa0] sm:$0xff] %v2296
    %2458 = vst [vmem:[#allocation3 + $0xa8] sm:$0xff] %v2298
    %2459 = vst [vmem:[#allocation3 + $0xb0] sm:$0xff] %v2415
    %2460 = vst [vmem:[#allocation3 + $0xb8] sm:$0xff] %v2417
    %2461 = vst [vmem:[#allocation3 + $0xc0] sm:$0xff] %v2302
    %2462 = vst [vmem:[#allocation3 + $0xc8] sm:$0xff] %v2304
    %2463 = vst [vmem:[#allocation3 + $0xd0] sm:$0xff] %v2421
    %2464 = vst [vmem:[#allocation3 + $0xd8] sm:$0xff] %v2423
    %2465 = vst [vmem:[#allocation3 + $0xe0] sm:$0xff] %v2308
    %2466 = vst [vmem:[#allocation3 + $0xe8] sm:$0xff] %v2310
    %2467 = vst [vmem:[#allocation3 + $0xf0] sm:$0xff] %v2427
    %2468 = vst [vmem:[#allocation3 + $0xf8] sm:$0xff] %v2429
    %2469 = vst [vmem:[#allocation3 + $0x100] sm:$0xff] %v2314
    %2470 = vst [vmem:[#allocation3 + $0x108] sm:$0xff] %v2316
    %2471 = vst [vmem:[#allocation3 + $0x110] sm:$0xff] %v2433
    %2472 = vst [vmem:[#allocation3 + $0x118] sm:$0xff] %v2435
    %s2473 = scalar_lea.vmem [#allocation9], 512
    %v2474 = vld [vmem:[%s2473] sm:$0xff]
    %v2475 = vld [vmem:[%s2473 + $0x8] sm:$0xff]
    %v2476 = vld [vmem:[%s2473 + $0x10] sm:$0xff]
    %v2477 = vld [vmem:[%s2473 + $0x18] sm:$0xff]
    %v2478 = vld [vmem:[%s2473 + $0x20] sm:$0xff]
    %v2479 = vld [vmem:[%s2473 + $0x28] sm:$0xff]
    %v2480 = vld [vmem:[%s2473 + $0x30] sm:$0xff]
    %v2481 = vld [vmem:[%s2473 + $0x38] sm:$0xff]
    %v2482 = vld [vmem:[%s2473 + $0x40] sm:$0xff]
    %v2483 = vld [vmem:[%s2473 + $0x48] sm:$0xff]
    %v2484 = vld [vmem:[%s2473 + $0x50] sm:$0xff]
    %v2485 = vld [vmem:[%s2473 + $0x58] sm:$0xff]
    %v2486 = vld [vmem:[%s2473 + $0x60] sm:$0xff]
    %v2487 = vld [vmem:[%s2473 + $0x68] sm:$0xff]
    %v2488 = vld [vmem:[%s2473 + $0x70] sm:$0xff]
    %v2489 = vld [vmem:[%s2473 + $0x78] sm:$0xff]
    %v2490 = vld [vmem:[%s2473 + $0x80] sm:$0xff]
    %v2491 = vld [vmem:[%s2473 + $0x88] sm:$0xff]
    %v2492 = vld [vmem:[%s2473 + $0x90] sm:$0xff]
    %v2493 = vld [vmem:[%s2473 + $0x98] sm:$0xff]
    %v2494 = vld [vmem:[%s2473 + $0xa0] sm:$0xff]
    %v2495 = vld [vmem:[%s2473 + $0xa8] sm:$0xff]
    %v2496 = vld [vmem:[%s2473 + $0xb0] sm:$0xff]
    %v2497 = vld [vmem:[%s2473 + $0xb8] sm:$0xff]
    %v2498 = vld [vmem:[%s2473 + $0xc0] sm:$0xff]
    %v2499 = vld [vmem:[%s2473 + $0xc8] sm:$0xff]
    %v2500 = vld [vmem:[%s2473 + $0xd0] sm:$0xff]
    %v2501 = vld [vmem:[%s2473 + $0xd8] sm:$0xff]
    %v2502 = vld [vmem:[%s2473 + $0xe0] sm:$0xff]
    %v2503 = vld [vmem:[%s2473 + $0xe8] sm:$0xff]
    %v2504 = vld [vmem:[%s2473 + $0xf0] sm:$0xff]
    %v2505 = vld [vmem:[%s2473 + $0xf8] sm:$0xff]
    %v2506 = vld [vmem:[%s2473 + $0x100] sm:$0xff]
    %v2507 = vld [vmem:[%s2473 + $0x108] sm:$0xff]
    %v2508 = vld [vmem:[%s2473 + $0x110] sm:$0xff]
    %v2509 = vld [vmem:[%s2473 + $0x118] sm:$0xff]
    %v2510 = vld [vmem:[%s2473 + $0x120] sm:$0xff]
    %v2511 = vld [vmem:[%s2473 + $0x128] sm:$0xff]
    %v2512 = vld [vmem:[%s2473 + $0x130] sm:$0xff]
    %v2513 = vld [vmem:[%s2473 + $0x138] sm:$0xff]
    %v2514 = vld [vmem:[%s2473 + $0x140] sm:$0xff]
    %v2515 = vld [vmem:[%s2473 + $0x148] sm:$0xff]
    %v2516 = vld [vmem:[%s2473 + $0x150] sm:$0xff]
    %v2517 = vld [vmem:[%s2473 + $0x158] sm:$0xff]
    %v2518 = vld [vmem:[%s2473 + $0x160] sm:$0xff]
    %v2519 = vld [vmem:[%s2473 + $0x168] sm:$0xff]
    %v2520 = vld [vmem:[%s2473 + $0x170] sm:$0xff]
    %v2521 = vld [vmem:[%s2473 + $0x178] sm:$0xff]
    %v2522 = vld [vmem:[%s2473 + $0x180] sm:$0xff]
    %v2523 = vld [vmem:[%s2473 + $0x188] sm:$0xff]
    %v2524 = vld [vmem:[%s2473 + $0x190] sm:$0xff]
    %v2525 = vld [vmem:[%s2473 + $0x198] sm:$0xff]
    %v2526 = vld [vmem:[%s2473 + $0x1a0] sm:$0xff]
    %v2527 = vld [vmem:[%s2473 + $0x1a8] sm:$0xff]
    %v2528 = vld [vmem:[%s2473 + $0x1b0] sm:$0xff]
    %v2529 = vld [vmem:[%s2473 + $0x1b8] sm:$0xff]
    %v2530 = vld [vmem:[%s2473 + $0x1c0] sm:$0xff]
    %v2531 = vld [vmem:[%s2473 + $0x1c8] sm:$0xff]
    %v2532 = vld [vmem:[%s2473 + $0x1d0] sm:$0xff]
    %v2533 = vld [vmem:[%s2473 + $0x1d8] sm:$0xff]
    %v2534 = vld [vmem:[%s2473 + $0x1e0] sm:$0xff]
    %v2535 = vld [vmem:[%s2473 + $0x1e8] sm:$0xff]
    %v2536 = vld [vmem:[%s2473 + $0x1f0] sm:$0xff]
    %v2537 = vld [vmem:[%s2473 + $0x1f8] sm:$0xff]
    %v2538 = vld [vmem:[%s494] sm:$0xff]
    %v2539 = vld [vmem:[%s494 + $0x8] sm:$0xff]
    %v2540 = vld [vmem:[%s494 + $0x10] sm:$0xff]
    %v2541 = vld [vmem:[%s494 + $0x18] sm:$0xff]
    %2542 = vmatprep.subr.mxu0 %v2475
    %2543 = vmatpush1.msra.mxu0 %v2474
    %2544 = vmatprep.subr.mxu0 %v2479
    %2545 = vmatpush1.msra.mxu0 %v2478
    %2546 = vmatprep.subr.mxu0 %v2483
    %2547 = vmatpush1.msra.mxu0 %v2482
    %2548 = vmatprep.subr.mxu0 %v2487
    %2549 = vmatpush1.msra.mxu0 %v2486
    %2550 = vmatprep.subr.mxu0 %v2491
    %2551 = vmatpush1.msra.mxu0 %v2490
    %2552 = vmatprep.subr.mxu0 %v2495
    %2553 = vmatpush1.msra.mxu0 %v2494
    %2554 = vmatprep.subr.mxu0 %v2499
    %2555 = vmatpush1.msra.mxu0 %v2498
    %2556 = vmatprep.subr.mxu0 %v2503
    %2557 = vmatpush1.msra.mxu0 %v2502
    %2558 = vmatprep.subr.mxu0 %v2507
    %2559 = vmatpush1.msra.mxu0 %v2506
    %2560 = vmatprep.subr.mxu0 %v2511
    %2561 = vmatpush1.msra.mxu0 %v2510
    %2562 = vmatprep.subr.mxu0 %v2515
    %2563 = vmatpush1.msra.mxu0 %v2514
    %2564 = vmatprep.subr.mxu0 %v2519
    %2565 = vmatpush1.msra.mxu0 %v2518
    %2566 = vmatprep.subr.mxu0 %v2523
    %2567 = vmatpush1.msra.mxu0 %v2522
    %2568 = vmatprep.subr.mxu0 %v2527
    %2569 = vmatpush1.msra.mxu0 %v2526
    %2570 = vmatprep.subr.mxu0 %v2531
    %2571 = vmatpush1.msra.mxu0 %v2530
    %2572 = vmatprep.subr.mxu0 %v2535
    %2573 = vmatpush1.msra.mxu0 %v2534
    %2574 = vmatprep.subr.mxu0 0.0
    %2575 = vmatpush1.msra.mxu0 0.0
    %2576 = vmatprep.subr.mxu0 0.0
    %2577 = vmatpush1.msra.mxu0 0.0
    %2578 = vmatprep.subr.mxu0 0.0
    %2579 = vmatpush1.msra.mxu0 0.0
    %2580 = vmatprep.subr.mxu0 0.0
    %2581 = vmatpush1.msra.mxu0 0.0
    %2582 = vmatprep.subr.mxu0 0.0
    %2583 = vmatpush1.msra.mxu0 0.0
    %2584 = vmatprep.subr.mxu0 0.0
    %2585 = vmatpush1.msra.mxu0 0.0
    %2586 = vmatprep.subr.mxu0 0.0
    %2587 = vmatpush1.msra.mxu0 0.0
    %2588 = vmatprep.subr.mxu0 0.0
    %2589 = vmatpush1.msra.mxu0 0.0
    %2590 = vmatprep.subr.mxu0 0.0
    %2591 = vmatpush1.msra.mxu0 0.0
    %2592 = vmatprep.subr.mxu0 0.0
    %2593 = vmatpush1.msra.mxu0 0.0
    %2594 = vmatprep.subr.mxu0 0.0
    %2595 = vmatpush1.msra.mxu0 0.0
    %2596 = vmatprep.subr.mxu0 0.0
    %2597 = vmatpush1.msra.mxu0 0.0
    %2598 = vmatprep.subr.mxu0 0.0
    %2599 = vmatpush1.msra.mxu0 0.0
    %2600 = vmatprep.subr.mxu0 0.0
    %2601 = vmatpush1.msra.mxu0 0.0
    %2602 = vmatprep.subr.mxu0 0.0
    %2603 = vmatpush1.msra.mxu0 0.0
    %2604 = vmatprep.subr.mxu0 0.0
    %2605 = vmatpush1.msra.mxu0 0.0
    %2606 = vmatprep.mubr.f32.mxu0 0.0
    %2607 = vmatmul.mubr.f32.gmra.mrb[0].mxu0 0.0
    %v2608 = vpop.f32.mrb[0].mxu0
    %v2609 = vadd.f32 0.0, %v2608
    %v2610 = vpop.f32.mrb[0].mxu0
    %v2611 = vadd.f32 0.0, %v2610
    %2612 = vdwg.mxu0
    %2613 = vmatprep.subr.mxu0 %v2477
    %2614 = vmatpush1.msra.mxu0 %v2476
    %2615 = vmatprep.subr.mxu0 %v2481
    %2616 = vmatpush1.msra.mxu0 %v2480
    %2617 = vmatprep.subr.mxu0 %v2485
    %2618 = vmatpush1.msra.mxu0 %v2484
    %2619 = vmatprep.subr.mxu0 %v2489
    %2620 = vmatpush1.msra.mxu0 %v2488
    %2621 = vmatprep.subr.mxu0 %v2493
    %2622 = vmatpush1.msra.mxu0 %v2492
    %2623 = vmatprep.subr.mxu0 %v2497
    %2624 = vmatpush1.msra.mxu0 %v2496
    %2625 = vmatprep.subr.mxu0 %v2501
    %2626 = vmatpush1.msra.mxu0 %v2500
    %2627 = vmatprep.subr.mxu0 %v2505
    %2628 = vmatpush1.msra.mxu0 %v2504
    %2629 = vmatprep.subr.mxu0 %v2509
    %2630 = vmatpush1.msra.mxu0 %v2508
    %2631 = vmatprep.subr.mxu0 %v2513
    %2632 = vmatpush1.msra.mxu0 %v2512
    %2633 = vmatprep.subr.mxu0 %v2517
    %2634 = vmatpush1.msra.mxu0 %v2516
    %2635 = vmatprep.subr.mxu0 %v2521
    %2636 = vmatpush1.msra.mxu0 %v2520
    %2637 = vmatprep.subr.mxu0 %v2525
    %2638 = vmatpush1.msra.mxu0 %v2524
    %2639 = vmatprep.subr.mxu0 %v2529
    %2640 = vmatpush1.msra.mxu0 %v2528
    %2641 = vmatprep.subr.mxu0 %v2533
    %2642 = vmatpush1.msra.mxu0 %v2532
    %2643 = vmatprep.subr.mxu0 %v2537
    %2644 = vmatpush1.msra.mxu0 %v2536
    %2645 = vmatprep.subr.mxu0 0.0
    %2646 = vmatpush1.msra.mxu0 0.0
    %2647 = vmatprep.subr.mxu0 0.0
    %2648 = vmatpush1.msra.mxu0 0.0
    %2649 = vmatprep.subr.mxu0 0.0
    %2650 = vmatpush1.msra.mxu0 0.0
    %2651 = vmatprep.subr.mxu0 0.0
    %2652 = vmatpush1.msra.mxu0 0.0
    %2653 = vmatprep.subr.mxu0 0.0
    %2654 = vmatpush1.msra.mxu0 0.0
    %2655 = vmatprep.subr.mxu0 0.0
    %2656 = vmatpush1.msra.mxu0 0.0
    %2657 = vmatprep.subr.mxu0 0.0
    %2658 = vmatpush1.msra.mxu0 0.0
    %2659 = vmatprep.subr.mxu0 0.0
    %2660 = vmatpush1.msra.mxu0 0.0
    %2661 = vmatprep.subr.mxu0 0.0
    %2662 = vmatpush1.msra.mxu0 0.0
    %2663 = vmatprep.subr.mxu0 0.0
    %2664 = vmatpush1.msra.mxu0 0.0
    %2665 = vmatprep.subr.mxu0 0.0
    %2666 = vmatpush1.msra.mxu0 0.0
    %2667 = vmatprep.subr.mxu0 0.0
    %2668 = vmatpush1.msra.mxu0 0.0
    %2669 = vmatprep.subr.mxu0 0.0
    %2670 = vmatpush1.msra.mxu0 0.0
    %2671 = vmatprep.subr.mxu0 0.0
    %2672 = vmatpush1.msra.mxu0 0.0
    %2673 = vmatprep.subr.mxu0 0.0
    %2674 = vmatpush1.msra.mxu0 0.0
    %2675 = vmatprep.subr.mxu0 0.0
    %2676 = vmatpush1.msra.mxu0 0.0
    %2677 = vmatprep.mubr.f32.mxu0 0.0
    %2678 = vmatmul.mubr.f32.gmra.mrb[0].mxu0 0.0
    %v2679 = vpop.f32.mrb[0].mxu0
    %v2680 = vadd.f32 0.0, %v2679
    %v2681 = vpop.f32.mrb[0].mxu0
    %v2682 = vadd.f32 0.0, %v2681
    %2683 = vdwg.mxu0
    %v2684 = vadd.f32 %v2538, %v2609
    %v2685 = vadd.f32 %v2539, %v2611
    %v2686 = vadd.f32 %v2540, %v2680
    %v2687 = vadd.f32 %v2541, %v2682
    %v2688 = vxor.u32 %v2684, 2147483648
    %v2689 = vmul.f32 %v2688, 1.442695
    %v2690 = vpow.pop %v2689
    %v2691 = vadd.f32 %v2690, 1.0
    %v2692 = vrcp.pop %v2691
    %v2693 = vmul.f32 1.0, %v2692
    %v2694 = vxor.u32 %v2685, 2147483648
    %v2695 = vmul.f32 %v2694, 1.442695
    %v2696 = vpow.pop %v2695
    %v2697 = vadd.f32 %v2696, 1.0
    %v2698 = vrcp.pop %v2697
    %v2699 = vmul.f32 1.0, %v2698
    %v2700 = vtanh.pop %v2686
    %v2701 = vxor.u32 %v2687, 2147483648
    %v2702 = vmul.f32 %v2701, 1.442695
    %v2703 = vpow.pop %v2702
    %v2704 = vadd.f32 %v2703, 1.0
    %v2705 = vrcp.pop %v2704
    %v2706 = vmul.f32 1.0, %v2705
    %v2707 = vmul.f32 %v2699, 0.0
    %v2708 = vmul.f32 %v2693, %v2700
    %v2709 = vadd.f32 %v2707, %v2708
    %v2710 = vtanh.pop %v2709
    %v2711 = vmul.f32 %v2706, %v2710
    %2712 = vst [vmem:[#allocation10] sm:$0xff] %v2711
    %v2713 = vld [vmem:[%s672] sm:$0xff]
    %v2714 = vld [vmem:[%s672 + $0x8] sm:$0xff]
    %v2715 = vld [vmem:[%s672 + $0x10] sm:$0xff]
    %v2716 = vld [vmem:[%s672 + $0x18] sm:$0xff]
    %2717 = vmatprep.subr.mxu0 %v2475
    %2718 = vmatpush1.msra.mxu0 %v2474
    %2719 = vmatprep.subr.mxu0 %v2479
    %2720 = vmatpush1.msra.mxu0 %v2478
    %2721 = vmatprep.subr.mxu0 %v2483
    %2722 = vmatpush1.msra.mxu0 %v2482
    %2723 = vmatprep.subr.mxu0 %v2487
    %2724 = vmatpush1.msra.mxu0 %v2486
    %2725 = vmatprep.subr.mxu0 %v2491
    %2726 = vmatpush1.msra.mxu0 %v2490
    %2727 = vmatprep.subr.mxu0 %v2495
    %2728 = vmatpush1.msra.mxu0 %v2494
    %2729 = vmatprep.subr.mxu0 %v2499
    %2730 = vmatpush1.msra.mxu0 %v2498
    %2731 = vmatprep.subr.mxu0 %v2503
    %2732 = vmatpush1.msra.mxu0 %v2502
    %2733 = vmatprep.subr.mxu0 %v2507
    %2734 = vmatpush1.msra.mxu0 %v2506
    %2735 = vmatprep.subr.mxu0 %v2511
    %2736 = vmatpush1.msra.mxu0 %v2510
    %2737 = vmatprep.subr.mxu0 %v2515
    %2738 = vmatpush1.msra.mxu0 %v2514
    %2739 = vmatprep.subr.mxu0 %v2519
    %2740 = vmatpush1.msra.mxu0 %v2518
    %2741 = vmatprep.subr.mxu0 %v2523
    %2742 = vmatpush1.msra.mxu0 %v2522
    %2743 = vmatprep.subr.mxu0 %v2527
    %2744 = vmatpush1.msra.mxu0 %v2526
    %2745 = vmatprep.subr.mxu0 %v2531
    %2746 = vmatpush1.msra.mxu0 %v2530
    %2747 = vmatprep.subr.mxu0 %v2535
    %2748 = vmatpush1.msra.mxu0 %v2534
    %2749 = vmatprep.subr.mxu0 0.0
    %2750 = vmatpush1.msra.mxu0 0.0
    %2751 = vmatprep.subr.mxu0 0.0
    %2752 = vmatpush1.msra.mxu0 0.0
    %2753 = vmatprep.subr.mxu0 0.0
    %2754 = vmatpush1.msra.mxu0 0.0
    %2755 = vmatprep.subr.mxu0 0.0
    %2756 = vmatpush1.msra.mxu0 0.0
    %2757 = vmatprep.subr.mxu0 0.0
    %2758 = vmatpush1.msra.mxu0 0.0
    %2759 = vmatprep.subr.mxu0 0.0
    %2760 = vmatpush1.msra.mxu0 0.0
    %2761 = vmatprep.subr.mxu0 0.0
    %2762 = vmatpush1.msra.mxu0 0.0
    %2763 = vmatprep.subr.mxu0 0.0
    %2764 = vmatpush1.msra.mxu0 0.0
    %2765 = vmatprep.subr.mxu0 0.0
    %2766 = vmatpush1.msra.mxu0 0.0
    %2767 = vmatprep.subr.mxu0 0.0
    %2768 = vmatpush1.msra.mxu0 0.0
    %2769 = vmatprep.subr.mxu0 0.0
    %2770 = vmatpush1.msra.mxu0 0.0
    %2771 = vmatprep.subr.mxu0 0.0
    %2772 = vmatpush1.msra.mxu0 0.0
    %2773 = vmatprep.subr.mxu0 0.0
    %2774 = vmatpush1.msra.mxu0 0.0
    %2775 = vmatprep.subr.mxu0 0.0
    %2776 = vmatpush1.msra.mxu0 0.0
    %2777 = vmatprep.subr.mxu0 0.0
    %2778 = vmatpush1.msra.mxu0 0.0
    %2779 = vmatprep.subr.mxu0 0.0
    %2780 = vmatpush1.msra.mxu0 0.0
    %2781 = vmatprep.mubr.f32.mxu0 0.0
    %2782 = vmatmul.mubr.f32.gmra.mrb[0].mxu0 %v2711
    %v2783 = vpop.f32.mrb[0].mxu0
    %v2784 = vadd.f32 0.0, %v2783
    %v2785 = vpop.f32.mrb[0].mxu0
    %v2786 = vadd.f32 0.0, %v2785
    %2787 = vdwg.mxu0
    %2788 = vmatprep.subr.mxu0 %v2477
    %2789 = vmatpush1.msra.mxu0 %v2476
    %2790 = vmatprep.subr.mxu0 %v2481
    %2791 = vmatpush1.msra.mxu0 %v2480
    %2792 = vmatprep.subr.mxu0 %v2485
    %2793 = vmatpush1.msra.mxu0 %v2484
    %2794 = vmatprep.subr.mxu0 %v2489
    %2795 = vmatpush1.msra.mxu0 %v2488
    %2796 = vmatprep.subr.mxu0 %v2493
    %2797 = vmatpush1.msra.mxu0 %v2492
    %2798 = vmatprep.subr.mxu0 %v2497
    %2799 = vmatpush1.msra.mxu0 %v2496
    %2800 = vmatprep.subr.mxu0 %v2501
    %2801 = vmatpush1.msra.mxu0 %v2500
    %2802 = vmatprep.subr.mxu0 %v2505
    %2803 = vmatpush1.msra.mxu0 %v2504
    %2804 = vmatprep.subr.mxu0 %v2509
    %2805 = vmatpush1.msra.mxu0 %v2508
    %2806 = vmatprep.subr.mxu0 %v2513
    %2807 = vmatpush1.msra.mxu0 %v2512
    %2808 = vmatprep.subr.mxu0 %v2517
    %2809 = vmatpush1.msra.mxu0 %v2516
    %2810 = vmatprep.subr.mxu0 %v2521
    %2811 = vmatpush1.msra.mxu0 %v2520
    %2812 = vmatprep.subr.mxu0 %v2525
    %2813 = vmatpush1.msra.mxu0 %v2524
    %2814 = vmatprep.subr.mxu0 %v2529
    %2815 = vmatpush1.msra.mxu0 %v2528
    %2816 = vmatprep.subr.mxu0 %v2533
    %2817 = vmatpush1.msra.mxu0 %v2532
    %2818 = vmatprep.subr.mxu0 %v2537
    %2819 = vmatpush1.msra.mxu0 %v2536
    %2820 = vmatprep.subr.mxu0 0.0
    %2821 = vmatpush1.msra.mxu0 0.0
    %2822 = vmatprep.subr.mxu0 0.0
    %2823 = vmatpush1.msra.mxu0 0.0
    %2824 = vmatprep.subr.mxu0 0.0
    %2825 = vmatpush1.msra.mxu0 0.0
    %2826 = vmatprep.subr.mxu0 0.0
    %2827 = vmatpush1.msra.mxu0 0.0
    %2828 = vmatprep.subr.mxu0 0.0
    %2829 = vmatpush1.msra.mxu0 0.0
    %2830 = vmatprep.subr.mxu0 0.0
    %2831 = vmatpush1.msra.mxu0 0.0
    %2832 = vmatprep.subr.mxu0 0.0
    %2833 = vmatpush1.msra.mxu0 0.0
    %2834 = vmatprep.subr.mxu0 0.0
    %2835 = vmatpush1.msra.mxu0 0.0
    %2836 = vmatprep.subr.mxu0 0.0
    %2837 = vmatpush1.msra.mxu0 0.0
    %2838 = vmatprep.subr.mxu0 0.0
    %2839 = vmatpush1.msra.mxu0 0.0
    %2840 = vmatprep.subr.mxu0 0.0
    %2841 = vmatpush1.msra.mxu0 0.0
    %2842 = vmatprep.subr.mxu0 0.0
    %2843 = vmatpush1.msra.mxu0 0.0
    %2844 = vmatprep.subr.mxu0 0.0
    %2845 = vmatpush1.msra.mxu0 0.0
    %2846 = vmatprep.subr.mxu0 0.0
    %2847 = vmatpush1.msra.mxu0 0.0
    %2848 = vmatprep.subr.mxu0 0.0
    %2849 = vmatpush1.msra.mxu0 0.0
    %2850 = vmatprep.subr.mxu0 0.0
    %2851 = vmatpush1.msra.mxu0 0.0
    %2852 = vmatprep.mubr.f32.mxu0 0.0
    %2853 = vmatmul.mubr.f32.gmra.mrb[0].mxu0 %v2711
    %v2854 = vpop.f32.mrb[0].mxu0
    %v2855 = vadd.f32 0.0, %v2854
    %v2856 = vpop.f32.mrb[0].mxu0
    %v2857 = vadd.f32 0.0, %v2856
    %2858 = vdwg.mxu0
    %v2859 = vadd.f32 %v2713, %v2784
    %v2860 = vadd.f32 %v2714, %v2786
    %v2861 = vadd.f32 %v2715, %v2855
    %v2862 = vadd.f32 %v2716, %v2857
    %v2863 = vxor.u32 %v2859, 2147483648
    %v2864 = vmul.f32 %v2863, 1.442695
    %v2865 = vpow.pop %v2864
    %v2866 = vadd.f32 %v2865, 1.0
    %v2867 = vrcp.pop %v2866
    %v2868 = vmul.f32 1.0, %v2867
    %v2869 = vxor.u32 %v2860, 2147483648
    %v2870 = vmul.f32 %v2869, 1.442695
    %v2871 = vpow.pop %v2870
    %v2872 = vadd.f32 %v2871, 1.0
    %v2873 = vrcp.pop %v2872
    %v2874 = vmul.f32 1.0, %v2873
    %v2875 = vtanh.pop %v2861
    %v2876 = vxor.u32 %v2862, 2147483648
    %v2877 = vmul.f32 %v2876, 1.442695
    %v2878 = vpow.pop %v2877
    %v2879 = vadd.f32 %v2878, 1.0
    %v2880 = vrcp.pop %v2879
    %v2881 = vmul.f32 1.0, %v2880
    %v2882 = vmul.f32 %v2874, %v2709
    %v2883 = vmul.f32 %v2868, %v2875
    %v2884 = vadd.f32 %v2882, %v2883
    %v2885 = vtanh.pop %v2884
    %v2886 = vmul.f32 %v2881, %v2885
    %s2887 = scalar_lea.vmem [#allocation10], 8
    %2888 = vst [vmem:[%s2887] sm:$0xff] %v2886
    %v2889 = vld [vmem:[%s851] sm:$0xff]
    %v2890 = vld [vmem:[%s851 + $0x8] sm:$0xff]
    %v2891 = vld [vmem:[%s851 + $0x10] sm:$0xff]
    %v2892 = vld [vmem:[%s851 + $0x18] sm:$0xff]
    %2893 = vmatprep.subr.mxu0 %v2475
    %2894 = vmatpush1.msra.mxu0 %v2474
    %2895 = vmatprep.subr.mxu0 %v2479
    %2896 = vmatpush1.msra.mxu0 %v2478
    %2897 = vmatprep.subr.mxu0 %v2483
    %2898 = vmatpush1.msra.mxu0 %v2482
    %2899 = vmatprep.subr.mxu0 %v2487
    %2900 = vmatpush1.msra.mxu0 %v2486
    %2901 = vmatprep.subr.mxu0 %v2491
    %2902 = vmatpush1.msra.mxu0 %v2490
    %2903 = vmatprep.subr.mxu0 %v2495
    %2904 = vmatpush1.msra.mxu0 %v2494
    %2905 = vmatprep.subr.mxu0 %v2499
    %2906 = vmatpush1.msra.mxu0 %v2498
    %2907 = vmatprep.subr.mxu0 %v2503
    %2908 = vmatpush1.msra.mxu0 %v2502
    %2909 = vmatprep.subr.mxu0 %v2507
    %2910 = vmatpush1.msra.mxu0 %v2506
    %2911 = vmatprep.subr.mxu0 %v2511
    %2912 = vmatpush1.msra.mxu0 %v2510
    %2913 = vmatprep.subr.mxu0 %v2515
    %2914 = vmatpush1.msra.mxu0 %v2514
    %2915 = vmatprep.subr.mxu0 %v2519
    %2916 = vmatpush1.msra.mxu0 %v2518
    %2917 = vmatprep.subr.mxu0 %v2523
    %2918 = vmatpush1.msra.mxu0 %v2522
    %2919 = vmatprep.subr.mxu0 %v2527
    %2920 = vmatpush1.msra.mxu0 %v2526
    %2921 = vmatprep.subr.mxu0 %v2531
    %2922 = vmatpush1.msra.mxu0 %v2530
    %2923 = vmatprep.subr.mxu0 %v2535
    %2924 = vmatpush1.msra.mxu0 %v2534
    %2925 = vmatprep.subr.mxu0 0.0
    %2926 = vmatpush1.msra.mxu0 0.0
    %2927 = vmatprep.subr.mxu0 0.0
    %2928 = vmatpush1.msra.mxu0 0.0
    %2929 = vmatprep.subr.mxu0 0.0
    %2930 = vmatpush1.msra.mxu0 0.0
    %2931 = vmatprep.subr.mxu0 0.0
    %2932 = vmatpush1.msra.mxu0 0.0
    %2933 = vmatprep.subr.mxu0 0.0
    %2934 = vmatpush1.msra.mxu0 0.0
    %2935 = vmatprep.subr.mxu0 0.0
    %2936 = vmatpush1.msra.mxu0 0.0
    %2937 = vmatprep.subr.mxu0 0.0
    %2938 = vmatpush1.msra.mxu0 0.0
    %2939 = vmatprep.subr.mxu0 0.0
    %2940 = vmatpush1.msra.mxu0 0.0
    %2941 = vmatprep.subr.mxu0 0.0
    %2942 = vmatpush1.msra.mxu0 0.0
    %2943 = vmatprep.subr.mxu0 0.0
    %2944 = vmatpush1.msra.mxu0 0.0
    %2945 = vmatprep.subr.mxu0 0.0
    %2946 = vmatpush1.msra.mxu0 0.0
    %2947 = vmatprep.subr.mxu0 0.0
    %2948 = vmatpush1.msra.mxu0 0.0
    %2949 = vmatprep.subr.mxu0 0.0
    %2950 = vmatpush1.msra.mxu0 0.0
    %2951 = vmatprep.subr.mxu0 0.0
    %2952 = vmatpush1.msra.mxu0 0.0
    %2953 = vmatprep.subr.mxu0 0.0
    %2954 = vmatpush1.msra.mxu0 0.0
    %2955 = vmatprep.subr.mxu0 0.0
    %2956 = vmatpush1.msra.mxu0 0.0
    %2957 = vmatprep.mubr.f32.mxu0 0.0
    %2958 = vmatmul.mubr.f32.gmra.mrb[0].mxu0 %v2886
    %v2959 = vpop.f32.mrb[0].mxu0
    %v2960 = vadd.f32 0.0, %v2959
    %v2961 = vpop.f32.mrb[0].mxu0
    %v2962 = vadd.f32 0.0, %v2961
    %2963 = vdwg.mxu0
    %2964 = vmatprep.subr.mxu0 %v2477
    %2965 = vmatpush1.msra.mxu0 %v2476
    %2966 = vmatprep.subr.mxu0 %v2481
    %2967 = vmatpush1.msra.mxu0 %v2480
    %2968 = vmatprep.subr.mxu0 %v2485
    %2969 = vmatpush1.msra.mxu0 %v2484
    %2970 = vmatprep.subr.mxu0 %v2489
    %2971 = vmatpush1.msra.mxu0 %v2488
    %2972 = vmatprep.subr.mxu0 %v2493
    %2973 = vmatpush1.msra.mxu0 %v2492
    %2974 = vmatprep.subr.mxu0 %v2497
    %2975 = vmatpush1.msra.mxu0 %v2496
    %2976 = vmatprep.subr.mxu0 %v2501
    %2977 = vmatpush1.msra.mxu0 %v2500
    %2978 = vmatprep.subr.mxu0 %v2505
    %2979 = vmatpush1.msra.mxu0 %v2504
    %2980 = vmatprep.subr.mxu0 %v2509
    %2981 = vmatpush1.msra.mxu0 %v2508
    %2982 = vmatprep.subr.mxu0 %v2513
    %2983 = vmatpush1.msra.mxu0 %v2512
    %2984 = vmatprep.subr.mxu0 %v2517
    %2985 = vmatpush1.msra.mxu0 %v2516
    %2986 = vmatprep.subr.mxu0 %v2521
    %2987 = vmatpush1.msra.mxu0 %v2520
    %2988 = vmatprep.subr.mxu0 %v2525
    %2989 = vmatpush1.msra.mxu0 %v2524
    %2990 = vmatprep.subr.mxu0 %v2529
    %2991 = vmatpush1.msra.mxu0 %v2528
    %2992 = vmatprep.subr.mxu0 %v2533
    %2993 = vmatpush1.msra.mxu0 %v2532
    %2994 = vmatprep.subr.mxu0 %v2537
    %2995 = vmatpush1.msra.mxu0 %v2536
    %2996 = vmatprep.subr.mxu0 0.0
    %2997 = vmatpush1.msra.mxu0 0.0
    %2998 = vmatprep.subr.mxu0 0.0
    %2999 = vmatpush1.msra.mxu0 0.0
    %3000 = vmatprep.subr.mxu0 0.0
    %3001 = vmatpush1.msra.mxu0 0.0
    %3002 = vmatprep.subr.mxu0 0.0
    %3003 = vmatpush1.msra.mxu0 0.0
    %3004 = vmatprep.subr.mxu0 0.0
    %3005 = vmatpush1.msra.mxu0 0.0
    %3006 = vmatprep.subr.mxu0 0.0
    %3007 = vmatpush1.msra.mxu0 0.0
    %3008 = vmatprep.subr.mxu0 0.0
    %3009 = vmatpush1.msra.mxu0 0.0
    %3010 = vmatprep.subr.mxu0 0.0
    %3011 = vmatpush1.msra.mxu0 0.0
    %3012 = vmatprep.subr.mxu0 0.0
    %3013 = vmatpush1.msra.mxu0 0.0
    %3014 = vmatprep.subr.mxu0 0.0
    %3015 = vmatpush1.msra.mxu0 0.0
    %3016 = vmatprep.subr.mxu0 0.0
    %3017 = vmatpush1.msra.mxu0 0.0
    %3018 = vmatprep.subr.mxu0 0.0
    %3019 = vmatpush1.msra.mxu0 0.0
    %3020 = vmatprep.subr.mxu0 0.0
    %3021 = vmatpush1.msra.mxu0 0.0
    %3022 = vmatprep.subr.mxu0 0.0
    %3023 = vmatpush1.msra.mxu0 0.0
    %3024 = vmatprep.subr.mxu0 0.0
    %3025 = vmatpush1.msra.mxu0 0.0
    %3026 = vmatprep.subr.mxu0 0.0
    %3027 = vmatpush1.msra.mxu0 0.0
    %3028 = vmatprep.mubr.f32.mxu0 0.0
    %3029 = vmatmul.mubr.f32.gmra.mrb[0].mxu0 %v2886
    %v3030 = vpop.f32.mrb[0].mxu0
    %v3031 = vadd.f32 0.0, %v3030
    %v3032 = vpop.f32.mrb[0].mxu0
    %v3033 = vadd.f32 0.0, %v3032
    %3034 = vdwg.mxu0
    %v3035 = vadd.f32 %v2889, %v2960
    %v3036 = vadd.f32 %v2890, %v2962
    %v3037 = vadd.f32 %v2891, %v3031
    %v3038 = vadd.f32 %v2892, %v3033
    %v3039 = vxor.u32 %v3035, 2147483648
    %v3040 = vmul.f32 %v3039, 1.442695
    %v3041 = vpow.pop %v3040
    %v3042 = vadd.f32 %v3041, 1.0
    %v3043 = vrcp.pop %v3042
    %v3044 = vmul.f32 1.0, %v3043
    %v3045 = vxor.u32 %v3036, 2147483648
    %v3046 = vmul.f32 %v3045, 1.442695
    %v3047 = vpow.pop %v3046
    %v3048 = vadd.f32 %v3047, 1.0
    %v3049 = vrcp.pop %v3048
    %v3050 = vmul.f32 1.0, %v3049
    %v3051 = vtanh.pop %v3037
    %v3052 = vxor.u32 %v3038, 2147483648
    %v3053 = vmul.f32 %v3052, 1.442695
    %v3054 = vpow.pop %v3053
    %v3055 = vadd.f32 %v3054, 1.0
    %v3056 = vrcp.pop %v3055
    %v3057 = vmul.f32 1.0, %v3056
    %v3058 = vmul.f32 %v3050, %v2884
    %v3059 = vmul.f32 %v3044, %v3051
    %v3060 = vadd.f32 %v3058, %v3059
    %v3061 = vtanh.pop %v3060
    %v3062 = vmul.f32 %v3057, %v3061
    %s3063 = scalar_lea.vmem [#allocation10], 16
    %3064 = vst [vmem:[%s3063] sm:$0xff] %v3062
    %v3065 = vld [vmem:[%s1030] sm:$0xff]
    %v3066 = vld [vmem:[%s1030 + $0x8] sm:$0xff]
    %v3067 = vld [vmem:[%s1030 + $0x10] sm:$0xff]
    %v3068 = vld [vmem:[%s1030 + $0x18] sm:$0xff]
    %3069 = vmatprep.subr.mxu0 %v2475
    %3070 = vmatpush1.msra.mxu0 %v2474
    %3071 = vmatprep.subr.mxu0 %v2479
    %3072 = vmatpush1.msra.mxu0 %v2478
    %3073 = vmatprep.subr.mxu0 %v2483
    %3074 = vmatpush1.msra.mxu0 %v2482
    %3075 = vmatprep.subr.mxu0 %v2487
    %3076 = vmatpush1.msra.mxu0 %v2486
    %3077 = vmatprep.subr.mxu0 %v2491
    %3078 = vmatpush1.msra.mxu0 %v2490
    %3079 = vmatprep.subr.mxu0 %v2495
    %3080 = vmatpush1.msra.mxu0 %v2494
    %3081 = vmatprep.subr.mxu0 %v2499
    %3082 = vmatpush1.msra.mxu0 %v2498
    %3083 = vmatprep.subr.mxu0 %v2503
    %3084 = vmatpush1.msra.mxu0 %v2502
    %3085 = vmatprep.subr.mxu0 %v2507
    %3086 = vmatpush1.msra.mxu0 %v2506
    %3087 = vmatprep.subr.mxu0 %v2511
    %3088 = vmatpush1.msra.mxu0 %v2510
    %3089 = vmatprep.subr.mxu0 %v2515
    %3090 = vmatpush1.msra.mxu0 %v2514
    %3091 = vmatprep.subr.mxu0 %v2519
    %3092 = vmatpush1.msra.mxu0 %v2518
    %3093 = vmatprep.subr.mxu0 %v2523
    %3094 = vmatpush1.msra.mxu0 %v2522
    %3095 = vmatprep.subr.mxu0 %v2527
    %3096 = vmatpush1.msra.mxu0 %v2526
    %3097 = vmatprep.subr.mxu0 %v2531
    %3098 = vmatpush1.msra.mxu0 %v2530
    %3099 = vmatprep.subr.mxu0 %v2535
    %3100 = vmatpush1.msra.mxu0 %v2534
    %3101 = vmatprep.subr.mxu0 0.0
    %3102 = vmatpush1.msra.mxu0 0.0
    %3103 = vmatprep.subr.mxu0 0.0
    %3104 = vmatpush1.msra.mxu0 0.0
    %3105 = vmatprep.subr.mxu0 0.0
    %3106 = vmatpush1.msra.mxu0 0.0
    %3107 = vmatprep.subr.mxu0 0.0
    %3108 = vmatpush1.msra.mxu0 0.0
    %3109 = vmatprep.subr.mxu0 0.0
    %3110 = vmatpush1.msra.mxu0 0.0
    %3111 = vmatprep.subr.mxu0 0.0
    %3112 = vmatpush1.msra.mxu0 0.0
    %3113 = vmatprep.subr.mxu0 0.0
    %3114 = vmatpush1.msra.mxu0 0.0
    %3115 = vmatprep.subr.mxu0 0.0
    %3116 = vmatpush1.msra.mxu0 0.0
    %3117 = vmatprep.subr.mxu0 0.0
    %3118 = vmatpush1.msra.mxu0 0.0
    %3119 = vmatprep.subr.mxu0 0.0
    %3120 = vmatpush1.msra.mxu0 0.0
    %3121 = vmatprep.subr.mxu0 0.0
    %3122 = vmatpush1.msra.mxu0 0.0
    %3123 = vmatprep.subr.mxu0 0.0
    %3124 = vmatpush1.msra.mxu0 0.0
    %3125 = vmatprep.subr.mxu0 0.0
    %3126 = vmatpush1.msra.mxu0 0.0
    %3127 = vmatprep.subr.mxu0 0.0
    %3128 = vmatpush1.msra.mxu0 0.0
    %3129 = vmatprep.subr.mxu0 0.0
    %3130 = vmatpush1.msra.mxu0 0.0
    %3131 = vmatprep.subr.mxu0 0.0
    %3132 = vmatpush1.msra.mxu0 0.0
    %3133 = vmatprep.mubr.f32.mxu0 0.0
    %3134 = vmatmul.mubr.f32.gmra.mrb[0].mxu0 %v3062
    %v3135 = vpop.f32.mrb[0].mxu0
    %v3136 = vadd.f32 0.0, %v3135
    %v3137 = vpop.f32.mrb[0].mxu0
    %v3138 = vadd.f32 0.0, %v3137
    %3139 = vdwg.mxu0
    %3140 = vmatprep.subr.mxu0 %v2477
    %3141 = vmatpush1.msra.mxu0 %v2476
    %3142 = vmatprep.subr.mxu0 %v2481
    %3143 = vmatpush1.msra.mxu0 %v2480
    %3144 = vmatprep.subr.mxu0 %v2485
    %3145 = vmatpush1.msra.mxu0 %v2484
    %3146 = vmatprep.subr.mxu0 %v2489
    %3147 = vmatpush1.msra.mxu0 %v2488
    %3148 = vmatprep.subr.mxu0 %v2493
    %3149 = vmatpush1.msra.mxu0 %v2492
    %3150 = vmatprep.subr.mxu0 %v2497
    %3151 = vmatpush1.msra.mxu0 %v2496
    %3152 = vmatprep.subr.mxu0 %v2501
    %3153 = vmatpush1.msra.mxu0 %v2500
    %3154 = vmatprep.subr.mxu0 %v2505
    %3155 = vmatpush1.msra.mxu0 %v2504
    %3156 = vmatprep.subr.mxu0 %v2509
    %3157 = vmatpush1.msra.mxu0 %v2508
    %3158 = vmatprep.subr.mxu0 %v2513
    %3159 = vmatpush1.msra.mxu0 %v2512
    %3160 = vmatprep.subr.mxu0 %v2517
    %3161 = vmatpush1.msra.mxu0 %v2516
    %3162 = vmatprep.subr.mxu0 %v2521
    %3163 = vmatpush1.msra.mxu0 %v2520
    %3164 = vmatprep.subr.mxu0 %v2525
    %3165 = vmatpush1.msra.mxu0 %v2524
    %3166 = vmatprep.subr.mxu0 %v2529
    %3167 = vmatpush1.msra.mxu0 %v2528
    %3168 = vmatprep.subr.mxu0 %v2533
    %3169 = vmatpush1.msra.mxu0 %v2532
    %3170 = vmatprep.subr.mxu0 %v2537
    %3171 = vmatpush1.msra.mxu0 %v2536
    %3172 = vmatprep.subr.mxu0 0.0
    %3173 = vmatpush1.msra.mxu0 0.0
    %3174 = vmatprep.subr.mxu0 0.0
    %3175 = vmatpush1.msra.mxu0 0.0
    %3176 = vmatprep.subr.mxu0 0.0
    %3177 = vmatpush1.msra.mxu0 0.0
    %3178 = vmatprep.subr.mxu0 0.0
    %3179 = vmatpush1.msra.mxu0 0.0
    %3180 = vmatprep.subr.mxu0 0.0
    %3181 = vmatpush1.msra.mxu0 0.0
    %3182 = vmatprep.subr.mxu0 0.0
    %3183 = vmatpush1.msra.mxu0 0.0
    %3184 = vmatprep.subr.mxu0 0.0
    %3185 = vmatpush1.msra.mxu0 0.0
    %3186 = vmatprep.subr.mxu0 0.0
    %3187 = vmatpush1.msra.mxu0 0.0
    %3188 = vmatprep.subr.mxu0 0.0
    %3189 = vmatpush1.msra.mxu0 0.0
    %3190 = vmatprep.subr.mxu0 0.0
    %3191 = vmatpush1.msra.mxu0 0.0
    %3192 = vmatprep.subr.mxu0 0.0
    %3193 = vmatpush1.msra.mxu0 0.0
    %3194 = vmatprep.subr.mxu0 0.0
    %3195 = vmatpush1.msra.mxu0 0.0
    %3196 = vmatprep.subr.mxu0 0.0
    %3197 = vmatpush1.msra.mxu0 0.0
    %3198 = vmatprep.subr.mxu0 0.0
    %3199 = vmatpush1.msra.mxu0 0.0
    %3200 = vmatprep.subr.mxu0 0.0
    %3201 = vmatpush1.msra.mxu0 0.0
    %3202 = vmatprep.subr.mxu0 0.0
    %3203 = vmatpush1.msra.mxu0 0.0
    %3204 = vmatprep.mubr.f32.mxu0 0.0
    %3205 = vmatmul.mubr.f32.gmra.mrb[0].mxu0 %v3062
    %v3206 = vpop.f32.mrb[0].mxu0
    %v3207 = vadd.f32 0.0, %v3206
    %v3208 = vpop.f32.mrb[0].mxu0
    %v3209 = vadd.f32 0.0, %v3208
    %3210 = vdwg.mxu0
    %v3211 = vadd.f32 %v3065, %v3136
    %v3212 = vadd.f32 %v3066, %v3138
    %v3213 = vadd.f32 %v3067, %v3207
    %v3214 = vadd.f32 %v3068, %v3209
    %v3215 = vxor.u32 %v3211, 2147483648
    %v3216 = vmul.f32 %v3215, 1.442695
    %v3217 = vpow.pop %v3216
    %v3218 = vadd.f32 %v3217, 1.0
    %v3219 = vrcp.pop %v3218
    %v3220 = vmul.f32 1.0, %v3219
    %v3221 = vxor.u32 %v3212, 2147483648
    %v3222 = vmul.f32 %v3221, 1.442695
    %v3223 = vpow.pop %v3222
    %v3224 = vadd.f32 %v3223, 1.0
    %v3225 = vrcp.pop %v3224
    %v3226 = vmul.f32 1.0, %v3225
    %v3227 = vtanh.pop %v3213
    %v3228 = vxor.u32 %v3214, 2147483648
    %v3229 = vmul.f32 %v3228, 1.442695
    %v3230 = vpow.pop %v3229
    %v3231 = vadd.f32 %v3230, 1.0
    %v3232 = vrcp.pop %v3231
    %v3233 = vmul.f32 1.0, %v3232
    %v3234 = vmul.f32 %v3226, %v3060
    %v3235 = vmul.f32 %v3220, %v3227
    %v3236 = vadd.f32 %v3234, %v3235
    %v3237 = vtanh.pop %v3236
    %v3238 = vmul.f32 %v3233, %v3237
    %s3239 = scalar_lea.vmem [#allocation10], 24
    %3240 = vst [vmem:[%s3239] sm:$0xff] %v3238
    %v3241 = vld [vmem:[%s1209] sm:$0xff]
    %v3242 = vld [vmem:[%s1209 + $0x8] sm:$0xff]
    %v3243 = vld [vmem:[%s1209 + $0x10] sm:$0xff]
    %v3244 = vld [vmem:[%s1209 + $0x18] sm:$0xff]
    %3245 = vmatprep.subr.mxu0 %v2475
    %3246 = vmatpush1.msra.mxu0 %v2474
    %3247 = vmatprep.subr.mxu0 %v2479
    %3248 = vmatpush1.msra.mxu0 %v2478
    %3249 = vmatprep.subr.mxu0 %v2483
    %3250 = vmatpush1.msra.mxu0 %v2482
    %3251 = vmatprep.subr.mxu0 %v2487
    %3252 = vmatpush1.msra.mxu0 %v2486
    %3253 = vmatprep.subr.mxu0 %v2491
    %3254 = vmatpush1.msra.mxu0 %v2490
    %3255 = vmatprep.subr.mxu0 %v2495
    %3256 = vmatpush1.msra.mxu0 %v2494
    %3257 = vmatprep.subr.mxu0 %v2499
    %3258 = vmatpush1.msra.mxu0 %v2498
    %3259 = vmatprep.subr.mxu0 %v2503
    %3260 = vmatpush1.msra.mxu0 %v2502
    %3261 = vmatprep.subr.mxu0 %v2507
    %3262 = vmatpush1.msra.mxu0 %v2506
    %3263 = vmatprep.subr.mxu0 %v2511
    %3264 = vmatpush1.msra.mxu0 %v2510
    %3265 = vmatprep.subr.mxu0 %v2515
    %3266 = vmatpush1.msra.mxu0 %v2514
    %3267 = vmatprep.subr.mxu0 %v2519
    %3268 = vmatpush1.msra.mxu0 %v2518
    %3269 = vmatprep.subr.mxu0 %v2523
    %3270 = vmatpush1.msra.mxu0 %v2522
    %3271 = vmatprep.subr.mxu0 %v2527
    %3272 = vmatpush1.msra.mxu0 %v2526
    %3273 = vmatprep.subr.mxu0 %v2531
    %3274 = vmatpush1.msra.mxu0 %v2530
    %3275 = vmatprep.subr.mxu0 %v2535
    %3276 = vmatpush1.msra.mxu0 %v2534
    %3277 = vmatprep.subr.mxu0 0.0
    %3278 = vmatpush1.msra.mxu0 0.0
    %3279 = vmatprep.subr.mxu0 0.0
    %3280 = vmatpush1.msra.mxu0 0.0
    %3281 = vmatprep.subr.mxu0 0.0
    %3282 = vmatpush1.msra.mxu0 0.0
    %3283 = vmatprep.subr.mxu0 0.0
    %3284 = vmatpush1.msra.mxu0 0.0
    %3285 = vmatprep.subr.mxu0 0.0
    %3286 = vmatpush1.msra.mxu0 0.0
    %3287 = vmatprep.subr.mxu0 0.0
    %3288 = vmatpush1.msra.mxu0 0.0
    %3289 = vmatprep.subr.mxu0 0.0
    %3290 = vmatpush1.msra.mxu0 0.0
    %3291 = vmatprep.subr.mxu0 0.0
    %3292 = vmatpush1.msra.mxu0 0.0
    %3293 = vmatprep.subr.mxu0 0.0
    %3294 = vmatpush1.msra.mxu0 0.0
    %3295 = vmatprep.subr.mxu0 0.0
    %3296 = vmatpush1.msra.mxu0 0.0
    %3297 = vmatprep.subr.mxu0 0.0
    %3298 = vmatpush1.msra.mxu0 0.0
    %3299 = vmatprep.subr.mxu0 0.0
    %3300 = vmatpush1.msra.mxu0 0.0
    %3301 = vmatprep.subr.mxu0 0.0
    %3302 = vmatpush1.msra.mxu0 0.0
    %3303 = vmatprep.subr.mxu0 0.0
    %3304 = vmatpush1.msra.mxu0 0.0
    %3305 = vmatprep.subr.mxu0 0.0
    %3306 = vmatpush1.msra.mxu0 0.0
    %3307 = vmatprep.subr.mxu0 0.0
    %3308 = vmatpush1.msra.mxu0 0.0
    %3309 = vmatprep.mubr.f32.mxu0 0.0
    %3310 = vmatmul.mubr.f32.gmra.mrb[0].mxu0 %v3238
    %v3311 = vpop.f32.mrb[0].mxu0
    %v3312 = vadd.f32 0.0, %v3311
    %v3313 = vpop.f32.mrb[0].mxu0
    %v3314 = vadd.f32 0.0, %v3313
    %3315 = vdwg.mxu0
    %3316 = vmatprep.subr.mxu0 %v2477
    %3317 = vmatpush1.msra.mxu0 %v2476
    %3318 = vmatprep.subr.mxu0 %v2481
    %3319 = vmatpush1.msra.mxu0 %v2480
    %3320 = vmatprep.subr.mxu0 %v2485
    %3321 = vmatpush1.msra.mxu0 %v2484
    %3322 = vmatprep.subr.mxu0 %v2489
    %3323 = vmatpush1.msra.mxu0 %v2488
    %3324 = vmatprep.subr.mxu0 %v2493
    %3325 = vmatpush1.msra.mxu0 %v2492
    %3326 = vmatprep.subr.mxu0 %v2497
    %3327 = vmatpush1.msra.mxu0 %v2496
    %3328 = vmatprep.subr.mxu0 %v2501
    %3329 = vmatpush1.msra.mxu0 %v2500
    %3330 = vmatprep.subr.mxu0 %v2505
    %3331 = vmatpush1.msra.mxu0 %v2504
    %3332 = vmatprep.subr.mxu0 %v2509
    %3333 = vmatpush1.msra.mxu0 %v2508
    %3334 = vmatprep.subr.mxu0 %v2513
    %3335 = vmatpush1.msra.mxu0 %v2512
    %3336 = vmatprep.subr.mxu0 %v2517
    %3337 = vmatpush1.msra.mxu0 %v2516
    %3338 = vmatprep.subr.mxu0 %v2521
    %3339 = vmatpush1.msra.mxu0 %v2520
    %3340 = vmatprep.subr.mxu0 %v2525
    %3341 = vmatpush1.msra.mxu0 %v2524
    %3342 = vmatprep.subr.mxu0 %v2529
    %3343 = vmatpush1.msra.mxu0 %v2528
    %3344 = vmatprep.subr.mxu0 %v2533
    %3345 = vmatpush1.msra.mxu0 %v2532
    %3346 = vmatprep.subr.mxu0 %v2537
    %3347 = vmatpush1.msra.mxu0 %v2536
    %3348 = vmatprep.subr.mxu0 0.0
    %3349 = vmatpush1.msra.mxu0 0.0
    %3350 = vmatprep.subr.mxu0 0.0
    %3351 = vmatpush1.msra.mxu0 0.0
    %3352 = vmatprep.subr.mxu0 0.0
    %3353 = vmatpush1.msra.mxu0 0.0
    %3354 = vmatprep.subr.mxu0 0.0
    %3355 = vmatpush1.msra.mxu0 0.0
    %3356 = vmatprep.subr.mxu0 0.0
    %3357 = vmatpush1.msra.mxu0 0.0
    %3358 = vmatprep.subr.mxu0 0.0
    %3359 = vmatpush1.msra.mxu0 0.0
    %3360 = vmatprep.subr.mxu0 0.0
    %3361 = vmatpush1.msra.mxu0 0.0
    %3362 = vmatprep.subr.mxu0 0.0
    %3363 = vmatpush1.msra.mxu0 0.0
    %3364 = vmatprep.subr.mxu0 0.0
    %3365 = vmatpush1.msra.mxu0 0.0
    %3366 = vmatprep.subr.mxu0 0.0
    %3367 = vmatpush1.msra.mxu0 0.0
    %3368 = vmatprep.subr.mxu0 0.0
    %3369 = vmatpush1.msra.mxu0 0.0
    %3370 = vmatprep.subr.mxu0 0.0
    %3371 = vmatpush1.msra.mxu0 0.0
    %3372 = vmatprep.subr.mxu0 0.0
    %3373 = vmatpush1.msra.mxu0 0.0
    %3374 = vmatprep.subr.mxu0 0.0
    %3375 = vmatpush1.msra.mxu0 0.0
    %3376 = vmatprep.subr.mxu0 0.0
    %3377 = vmatpush1.msra.mxu0 0.0
    %3378 = vmatprep.subr.mxu0 0.0
    %3379 = vmatpush1.msra.mxu0 0.0
    %3380 = vmatprep.mubr.f32.mxu0 0.0
    %3381 = vmatmul.mubr.f32.gmra.mrb[0].mxu0 %v3238
    %v3382 = vpop.f32.mrb[0].mxu0
    %v3383 = vadd.f32 0.0, %v3382
    %v3384 = vpop.f32.mrb[0].mxu0
    %v3385 = vadd.f32 0.0, %v3384
    %3386 = vdwg.mxu0
    %v3387 = vadd.f32 %v3241, %v3312
    %v3388 = vadd.f32 %v3242, %v3314
    %v3389 = vadd.f32 %v3243, %v3383
    %v3390 = vadd.f32 %v3244, %v3385
    %v3391 = vxor.u32 %v3387, 2147483648
    %v3392 = vmul.f32 %v3391, 1.442695
    %v3393 = vpow.pop %v3392
    %v3394 = vadd.f32 %v3393, 1.0
    %v3395 = vrcp.pop %v3394
    %v3396 = vmul.f32 1.0, %v3395
    %v3397 = vxor.u32 %v3388, 2147483648
    %v3398 = vmul.f32 %v3397, 1.442695
    %v3399 = vpow.pop %v3398
    %v3400 = vadd.f32 %v3399, 1.0
    %v3401 = vrcp.pop %v3400
    %v3402 = vmul.f32 1.0, %v3401
    %v3403 = vtanh.pop %v3389
    %v3404 = vxor.u32 %v3390, 2147483648
    %v3405 = vmul.f32 %v3404, 1.442695
    %v3406 = vpow.pop %v3405
    %v3407 = vadd.f32 %v3406, 1.0
    %v3408 = vrcp.pop %v3407
    %v3409 = vmul.f32 1.0, %v3408
    %v3410 = vmul.f32 %v3402, %v3236
    %v3411 = vmul.f32 %v3396, %v3403
    %v3412 = vadd.f32 %v3410, %v3411
    %v3413 = vtanh.pop %v3412
    %v3414 = vmul.f32 %v3409, %v3413
    %s3415 = scalar_lea.vmem [#allocation10], 32
    %3416 = vst [vmem:[%s3415] sm:$0xff] %v3414
    %v3417 = vld [vmem:[%s1388] sm:$0xff]
    %v3418 = vld [vmem:[%s1388 + $0x8] sm:$0xff]
    %v3419 = vld [vmem:[%s1388 + $0x10] sm:$0xff]
    %v3420 = vld [vmem:[%s1388 + $0x18] sm:$0xff]
    %3421 = vmatprep.subr.mxu0 %v2475
    %3422 = vmatpush1.msra.mxu0 %v2474
    %3423 = vmatprep.subr.mxu0 %v2479
    %3424 = vmatpush1.msra.mxu0 %v2478
    %3425 = vmatprep.subr.mxu0 %v2483
    %3426 = vmatpush1.msra.mxu0 %v2482
    %3427 = vmatprep.subr.mxu0 %v2487
    %3428 = vmatpush1.msra.mxu0 %v2486
    %3429 = vmatprep.subr.mxu0 %v2491
    %3430 = vmatpush1.msra.mxu0 %v2490
    %3431 = vmatprep.subr.mxu0 %v2495
    %3432 = vmatpush1.msra.mxu0 %v2494
    %3433 = vmatprep.subr.mxu0 %v2499
    %3434 = vmatpush1.msra.mxu0 %v2498
    %3435 = vmatprep.subr.mxu0 %v2503
    %3436 = vmatpush1.msra.mxu0 %v2502
    %3437 = vmatprep.subr.mxu0 %v2507
    %3438 = vmatpush1.msra.mxu0 %v2506
    %3439 = vmatprep.subr.mxu0 %v2511
    %3440 = vmatpush1.msra.mxu0 %v2510
    %3441 = vmatprep.subr.mxu0 %v2515
    %3442 = vmatpush1.msra.mxu0 %v2514
    %3443 = vmatprep.subr.mxu0 %v2519
    %3444 = vmatpush1.msra.mxu0 %v2518
    %3445 = vmatprep.subr.mxu0 %v2523
    %3446 = vmatpush1.msra.mxu0 %v2522
    %3447 = vmatprep.subr.mxu0 %v2527
    %3448 = vmatpush1.msra.mxu0 %v2526
    %3449 = vmatprep.subr.mxu0 %v2531
    %3450 = vmatpush1.msra.mxu0 %v2530
    %3451 = vmatprep.subr.mxu0 %v2535
    %3452 = vmatpush1.msra.mxu0 %v2534
    %3453 = vmatprep.subr.mxu0 0.0
    %3454 = vmatpush1.msra.mxu0 0.0
    %3455 = vmatprep.subr.mxu0 0.0
    %3456 = vmatpush1.msra.mxu0 0.0
    %3457 = vmatprep.subr.mxu0 0.0
    %3458 = vmatpush1.msra.mxu0 0.0
    %3459 = vmatprep.subr.mxu0 0.0
    %3460 = vmatpush1.msra.mxu0 0.0
    %3461 = vmatprep.subr.mxu0 0.0
    %3462 = vmatpush1.msra.mxu0 0.0
    %3463 = vmatprep.subr.mxu0 0.0
    %3464 = vmatpush1.msra.mxu0 0.0
    %3465 = vmatprep.subr.mxu0 0.0
    %3466 = vmatpush1.msra.mxu0 0.0
    %3467 = vmatprep.subr.mxu0 0.0
    %3468 = vmatpush1.msra.mxu0 0.0
    %3469 = vmatprep.subr.mxu0 0.0
    %3470 = vmatpush1.msra.mxu0 0.0
    %3471 = vmatprep.subr.mxu0 0.0
    %3472 = vmatpush1.msra.mxu0 0.0
    %3473 = vmatprep.subr.mxu0 0.0
    %3474 = vmatpush1.msra.mxu0 0.0
    %3475 = vmatprep.subr.mxu0 0.0
    %3476 = vmatpush1.msra.mxu0 0.0
    %3477 = vmatprep.subr.mxu0 0.0
    %3478 = vmatpush1.msra.mxu0 0.0
    %3479 = vmatprep.subr.mxu0 0.0
    %3480 = vmatpush1.msra.mxu0 0.0
    %3481 = vmatprep.subr.mxu0 0.0
    %3482 = vmatpush1.msra.mxu0 0.0
    %3483 = vmatprep.subr.mxu0 0.0
    %3484 = vmatpush1.msra.mxu0 0.0
    %3485 = vmatprep.mubr.f32.mxu0 0.0
    %3486 = vmatmul.mubr.f32.gmra.mrb[0].mxu0 %v3414
    %v3487 = vpop.f32.mrb[0].mxu0
    %v3488 = vadd.f32 0.0, %v3487
    %v3489 = vpop.f32.mrb[0].mxu0
    %v3490 = vadd.f32 0.0, %v3489
    %3491 = vdwg.mxu0
    %3492 = vmatprep.subr.mxu0 %v2477
    %3493 = vmatpush1.msra.mxu0 %v2476
    %3494 = vmatprep.subr.mxu0 %v2481
    %3495 = vmatpush1.msra.mxu0 %v2480
    %3496 = vmatprep.subr.mxu0 %v2485
    %3497 = vmatpush1.msra.mxu0 %v2484
    %3498 = vmatprep.subr.mxu0 %v2489
    %3499 = vmatpush1.msra.mxu0 %v2488
    %3500 = vmatprep.subr.mxu0 %v2493
    %3501 = vmatpush1.msra.mxu0 %v2492
    %3502 = vmatprep.subr.mxu0 %v2497
    %3503 = vmatpush1.msra.mxu0 %v2496
    %3504 = vmatprep.subr.mxu0 %v2501
    %3505 = vmatpush1.msra.mxu0 %v2500
    %3506 = vmatprep.subr.mxu0 %v2505
    %3507 = vmatpush1.msra.mxu0 %v2504
    %3508 = vmatprep.subr.mxu0 %v2509
    %3509 = vmatpush1.msra.mxu0 %v2508
    %3510 = vmatprep.subr.mxu0 %v2513
    %3511 = vmatpush1.msra.mxu0 %v2512
    %3512 = vmatprep.subr.mxu0 %v2517
    %3513 = vmatpush1.msra.mxu0 %v2516
    %3514 = vmatprep.subr.mxu0 %v2521
    %3515 = vmatpush1.msra.mxu0 %v2520
    %3516 = vmatprep.subr.mxu0 %v2525
    %3517 = vmatpush1.msra.mxu0 %v2524
    %3518 = vmatprep.subr.mxu0 %v2529
    %3519 = vmatpush1.msra.mxu0 %v2528
    %3520 = vmatprep.subr.mxu0 %v2533
    %3521 = vmatpush1.msra.mxu0 %v2532
    %3522 = vmatprep.subr.mxu0 %v2537
    %3523 = vmatpush1.msra.mxu0 %v2536
    %3524 = vmatprep.subr.mxu0 0.0
    %3525 = vmatpush1.msra.mxu0 0.0
    %3526 = vmatprep.subr.mxu0 0.0
    %3527 = vmatpush1.msra.mxu0 0.0
    %3528 = vmatprep.subr.mxu0 0.0
    %3529 = vmatpush1.msra.mxu0 0.0
    %3530 = vmatprep.subr.mxu0 0.0
    %3531 = vmatpush1.msra.mxu0 0.0
    %3532 = vmatprep.subr.mxu0 0.0
    %3533 = vmatpush1.msra.mxu0 0.0
    %3534 = vmatprep.subr.mxu0 0.0
    %3535 = vmatpush1.msra.mxu0 0.0
    %3536 = vmatprep.subr.mxu0 0.0
    %3537 = vmatpush1.msra.mxu0 0.0
    %3538 = vmatprep.subr.mxu0 0.0
    %3539 = vmatpush1.msra.mxu0 0.0
    %3540 = vmatprep.subr.mxu0 0.0
    %3541 = vmatpush1.msra.mxu0 0.0
    %3542 = vmatprep.subr.mxu0 0.0
    %3543 = vmatpush1.msra.mxu0 0.0
    %3544 = vmatprep.subr.mxu0 0.0
    %3545 = vmatpush1.msra.mxu0 0.0
    %3546 = vmatprep.subr.mxu0 0.0
    %3547 = vmatpush1.msra.mxu0 0.0
    %3548 = vmatprep.subr.mxu0 0.0
    %3549 = vmatpush1.msra.mxu0 0.0
    %3550 = vmatprep.subr.mxu0 0.0
    %3551 = vmatpush1.msra.mxu0 0.0
    %3552 = vmatprep.subr.mxu0 0.0
    %3553 = vmatpush1.msra.mxu0 0.0
    %3554 = vmatprep.subr.mxu0 0.0
    %3555 = vmatpush1.msra.mxu0 0.0
    %3556 = vmatprep.mubr.f32.mxu0 0.0
    %3557 = vmatmul.mubr.f32.gmra.mrb[0].mxu0 %v3414
    %v3558 = vpop.f32.mrb[0].mxu0
    %v3559 = vadd.f32 0.0, %v3558
    %v3560 = vpop.f32.mrb[0].mxu0
    %v3561 = vadd.f32 0.0, %v3560
    %3562 = vdwg.mxu0
    %v3563 = vadd.f32 %v3417, %v3488
    %v3564 = vadd.f32 %v3418, %v3490
    %v3565 = vadd.f32 %v3419, %v3559
    %v3566 = vadd.f32 %v3420, %v3561
    %v3567 = vxor.u32 %v3563, 2147483648
    %v3568 = vmul.f32 %v3567, 1.442695
    %v3569 = vpow.pop %v3568
    %v3570 = vadd.f32 %v3569, 1.0
    %v3571 = vrcp.pop %v3570
    %v3572 = vmul.f32 1.0, %v3571
    %v3573 = vxor.u32 %v3564, 2147483648
    %v3574 = vmul.f32 %v3573, 1.442695
    %v3575 = vpow.pop %v3574
    %v3576 = vadd.f32 %v3575, 1.0
    %v3577 = vrcp.pop %v3576
    %v3578 = vmul.f32 1.0, %v3577
    %v3579 = vtanh.pop %v3565
    %v3580 = vxor.u32 %v3566, 2147483648
    %v3581 = vmul.f32 %v3580, 1.442695
    %v3582 = vpow.pop %v3581
    %v3583 = vadd.f32 %v3582, 1.0
    %v3584 = vrcp.pop %v3583
    %v3585 = vmul.f32 1.0, %v3584
    %v3586 = vmul.f32 %v3578, %v3412
    %v3587 = vmul.f32 %v3572, %v3579
    %v3588 = vadd.f32 %v3586, %v3587
    %v3589 = vtanh.pop %v3588
    %v3590 = vmul.f32 %v3585, %v3589
    %s3591 = scalar_lea.vmem [#allocation10], 40
    %3592 = vst [vmem:[%s3591] sm:$0xff] %v3590
    %v3593 = vld [vmem:[%s1567] sm:$0xff]
    %v3594 = vld [vmem:[%s1567 + $0x8] sm:$0xff]
    %v3595 = vld [vmem:[%s1567 + $0x10] sm:$0xff]
    %v3596 = vld [vmem:[%s1567 + $0x18] sm:$0xff]
    %3597 = vmatprep.subr.mxu0 %v2475
    %3598 = vmatpush1.msra.mxu0 %v2474
    %3599 = vmatprep.subr.mxu0 %v2479
    %3600 = vmatpush1.msra.mxu0 %v2478
    %3601 = vmatprep.subr.mxu0 %v2483
    %3602 = vmatpush1.msra.mxu0 %v2482
    %3603 = vmatprep.subr.mxu0 %v2487
    %3604 = vmatpush1.msra.mxu0 %v2486
    %3605 = vmatprep.subr.mxu0 %v2491
    %3606 = vmatpush1.msra.mxu0 %v2490
    %3607 = vmatprep.subr.mxu0 %v2495
    %3608 = vmatpush1.msra.mxu0 %v2494
    %3609 = vmatprep.subr.mxu0 %v2499
    %3610 = vmatpush1.msra.mxu0 %v2498
    %3611 = vmatprep.subr.mxu0 %v2503
    %3612 = vmatpush1.msra.mxu0 %v2502
    %3613 = vmatprep.subr.mxu0 %v2507
    %3614 = vmatpush1.msra.mxu0 %v2506
    %3615 = vmatprep.subr.mxu0 %v2511
    %3616 = vmatpush1.msra.mxu0 %v2510
    %3617 = vmatprep.subr.mxu0 %v2515
    %3618 = vmatpush1.msra.mxu0 %v2514
    %3619 = vmatprep.subr.mxu0 %v2519
    %3620 = vmatpush1.msra.mxu0 %v2518
    %3621 = vmatprep.subr.mxu0 %v2523
    %3622 = vmatpush1.msra.mxu0 %v2522
    %3623 = vmatprep.subr.mxu0 %v2527
    %3624 = vmatpush1.msra.mxu0 %v2526
    %3625 = vmatprep.subr.mxu0 %v2531
    %3626 = vmatpush1.msra.mxu0 %v2530
    %3627 = vmatprep.subr.mxu0 %v2535
    %3628 = vmatpush1.msra.mxu0 %v2534
    %3629 = vmatprep.subr.mxu0 0.0
    %3630 = vmatpush1.msra.mxu0 0.0
    %3631 = vmatprep.subr.mxu0 0.0
    %3632 = vmatpush1.msra.mxu0 0.0
    %3633 = vmatprep.subr.mxu0 0.0
    %3634 = vmatpush1.msra.mxu0 0.0
    %3635 = vmatprep.subr.mxu0 0.0
    %3636 = vmatpush1.msra.mxu0 0.0
    %3637 = vmatprep.subr.mxu0 0.0
    %3638 = vmatpush1.msra.mxu0 0.0
    %3639 = vmatprep.subr.mxu0 0.0
    %3640 = vmatpush1.msra.mxu0 0.0
    %3641 = vmatprep.subr.mxu0 0.0
    %3642 = vmatpush1.msra.mxu0 0.0
    %3643 = vmatprep.subr.mxu0 0.0
    %3644 = vmatpush1.msra.mxu0 0.0
    %3645 = vmatprep.subr.mxu0 0.0
    %3646 = vmatpush1.msra.mxu0 0.0
    %3647 = vmatprep.subr.mxu0 0.0
    %3648 = vmatpush1.msra.mxu0 0.0
    %3649 = vmatprep.subr.mxu0 0.0
    %3650 = vmatpush1.msra.mxu0 0.0
    %3651 = vmatprep.subr.mxu0 0.0
    %3652 = vmatpush1.msra.mxu0 0.0
    %3653 = vmatprep.subr.mxu0 0.0
    %3654 = vmatpush1.msra.mxu0 0.0
    %3655 = vmatprep.subr.mxu0 0.0
    %3656 = vmatpush1.msra.mxu0 0.0
    %3657 = vmatprep.subr.mxu0 0.0
    %3658 = vmatpush1.msra.mxu0 0.0
    %3659 = vmatprep.subr.mxu0 0.0
    %3660 = vmatpush1.msra.mxu0 0.0
    %3661 = vmatprep.mubr.f32.mxu0 0.0
    %3662 = vmatmul.mubr.f32.gmra.mrb[0].mxu0 %v3590
    %v3663 = vpop.f32.mrb[0].mxu0
    %v3664 = vadd.f32 0.0, %v3663
    %v3665 = vpop.f32.mrb[0].mxu0
    %v3666 = vadd.f32 0.0, %v3665
    %3667 = vdwg.mxu0
    %3668 = vmatprep.subr.mxu0 %v2477
    %3669 = vmatpush1.msra.mxu0 %v2476
    %3670 = vmatprep.subr.mxu0 %v2481
    %3671 = vmatpush1.msra.mxu0 %v2480
    %3672 = vmatprep.subr.mxu0 %v2485
    %3673 = vmatpush1.msra.mxu0 %v2484
    %3674 = vmatprep.subr.mxu0 %v2489
    %3675 = vmatpush1.msra.mxu0 %v2488
    %3676 = vmatprep.subr.mxu0 %v2493
    %3677 = vmatpush1.msra.mxu0 %v2492
    %3678 = vmatprep.subr.mxu0 %v2497
    %3679 = vmatpush1.msra.mxu0 %v2496
    %3680 = vmatprep.subr.mxu0 %v2501
    %3681 = vmatpush1.msra.mxu0 %v2500
    %3682 = vmatprep.subr.mxu0 %v2505
    %3683 = vmatpush1.msra.mxu0 %v2504
    %3684 = vmatprep.subr.mxu0 %v2509
    %3685 = vmatpush1.msra.mxu0 %v2508
    %3686 = vmatprep.subr.mxu0 %v2513
    %3687 = vmatpush1.msra.mxu0 %v2512
    %3688 = vmatprep.subr.mxu0 %v2517
    %3689 = vmatpush1.msra.mxu0 %v2516
    %3690 = vmatprep.subr.mxu0 %v2521
    %3691 = vmatpush1.msra.mxu0 %v2520
    %3692 = vmatprep.subr.mxu0 %v2525
    %3693 = vmatpush1.msra.mxu0 %v2524
    %3694 = vmatprep.subr.mxu0 %v2529
    %3695 = vmatpush1.msra.mxu0 %v2528
    %3696 = vmatprep.subr.mxu0 %v2533
    %3697 = vmatpush1.msra.mxu0 %v2532
    %3698 = vmatprep.subr.mxu0 %v2537
    %3699 = vmatpush1.msra.mxu0 %v2536
    %3700 = vmatprep.subr.mxu0 0.0
    %3701 = vmatpush1.msra.mxu0 0.0
    %3702 = vmatprep.subr.mxu0 0.0
    %3703 = vmatpush1.msra.mxu0 0.0
    %3704 = vmatprep.subr.mxu0 0.0
    %3705 = vmatpush1.msra.mxu0 0.0
    %3706 = vmatprep.subr.mxu0 0.0
    %3707 = vmatpush1.msra.mxu0 0.0
    %3708 = vmatprep.subr.mxu0 0.0
    %3709 = vmatpush1.msra.mxu0 0.0
    %3710 = vmatprep.subr.mxu0 0.0
    %3711 = vmatpush1.msra.mxu0 0.0
    %3712 = vmatprep.subr.mxu0 0.0
    %3713 = vmatpush1.msra.mxu0 0.0
    %3714 = vmatprep.subr.mxu0 0.0
    %3715 = vmatpush1.msra.mxu0 0.0
    %3716 = vmatprep.subr.mxu0 0.0
    %3717 = vmatpush1.msra.mxu0 0.0
    %3718 = vmatprep.subr.mxu0 0.0
    %3719 = vmatpush1.msra.mxu0 0.0
    %3720 = vmatprep.subr.mxu0 0.0
    %3721 = vmatpush1.msra.mxu0 0.0
    %3722 = vmatprep.subr.mxu0 0.0
    %3723 = vmatpush1.msra.mxu0 0.0
    %3724 = vmatprep.subr.mxu0 0.0
    %3725 = vmatpush1.msra.mxu0 0.0
    %3726 = vmatprep.subr.mxu0 0.0
    %3727 = vmatpush1.msra.mxu0 0.0
    %3728 = vmatprep.subr.mxu0 0.0
    %3729 = vmatpush1.msra.mxu0 0.0
    %3730 = vmatprep.subr.mxu0 0.0
    %3731 = vmatpush1.msra.mxu0 0.0
    %3732 = vmatprep.mubr.f32.mxu0 0.0
    %3733 = vmatmul.mubr.f32.gmra.mrb[0].mxu0 %v3590
    %v3734 = vpop.f32.mrb[0].mxu0
    %v3735 = vadd.f32 0.0, %v3734
    %v3736 = vpop.f32.mrb[0].mxu0
    %v3737 = vadd.f32 0.0, %v3736
    %3738 = vdwg.mxu0
    %v3739 = vadd.f32 %v3593, %v3664
    %v3740 = vadd.f32 %v3594, %v3666
    %v3741 = vadd.f32 %v3595, %v3735
    %v3742 = vadd.f32 %v3596, %v3737
    %v3743 = vxor.u32 %v3739, 2147483648
    %v3744 = vmul.f32 %v3743, 1.442695
    %v3745 = vpow.pop %v3744
    %v3746 = vadd.f32 %v3745, 1.0
    %v3747 = vrcp.pop %v3746
    %v3748 = vmul.f32 1.0, %v3747
    %v3749 = vxor.u32 %v3740, 2147483648
    %v3750 = vmul.f32 %v3749, 1.442695
    %v3751 = vpow.pop %v3750
    %v3752 = vadd.f32 %v3751, 1.0
    %v3753 = vrcp.pop %v3752
    %v3754 = vmul.f32 1.0, %v3753
    %v3755 = vtanh.pop %v3741
    %v3756 = vxor.u32 %v3742, 2147483648
    %v3757 = vmul.f32 %v3756, 1.442695
    %v3758 = vpow.pop %v3757
    %v3759 = vadd.f32 %v3758, 1.0
    %v3760 = vrcp.pop %v3759
    %v3761 = vmul.f32 1.0, %v3760
    %v3762 = vmul.f32 %v3754, %v3588
    %v3763 = vmul.f32 %v3748, %v3755
    %v3764 = vadd.f32 %v3762, %v3763
    %v3765 = vtanh.pop %v3764
    %v3766 = vmul.f32 %v3761, %v3765
    %s3767 = scalar_lea.vmem [#allocation10], 48
    %3768 = vst [vmem:[%s3767] sm:$0xff] %v3766
    %v3769 = vld [vmem:[%s1746] sm:$0xff]
    %v3770 = vld [vmem:[%s1746 + $0x8] sm:$0xff]
    %v3771 = vld [vmem:[%s1746 + $0x10] sm:$0xff]
    %v3772 = vld [vmem:[%s1746 + $0x18] sm:$0xff]
    %3773 = vmatprep.subr.mxu0 %v2475
    %3774 = vmatpush1.msra.mxu0 %v2474
    %3775 = vmatprep.subr.mxu0 %v2479
    %3776 = vmatpush1.msra.mxu0 %v2478
    %3777 = vmatprep.subr.mxu0 %v2483
    %3778 = vmatpush1.msra.mxu0 %v2482
    %3779 = vmatprep.subr.mxu0 %v2487
    %3780 = vmatpush1.msra.mxu0 %v2486
    %3781 = vmatprep.subr.mxu0 %v2491
    %3782 = vmatpush1.msra.mxu0 %v2490
    %3783 = vmatprep.subr.mxu0 %v2495
    %3784 = vmatpush1.msra.mxu0 %v2494
    %3785 = vmatprep.subr.mxu0 %v2499
    %3786 = vmatpush1.msra.mxu0 %v2498
    %3787 = vmatprep.subr.mxu0 %v2503
    %3788 = vmatpush1.msra.mxu0 %v2502
    %3789 = vmatprep.subr.mxu0 %v2507
    %3790 = vmatpush1.msra.mxu0 %v2506
    %3791 = vmatprep.subr.mxu0 %v2511
    %3792 = vmatpush1.msra.mxu0 %v2510
    %3793 = vmatprep.subr.mxu0 %v2515
    %3794 = vmatpush1.msra.mxu0 %v2514
    %3795 = vmatprep.subr.mxu0 %v2519
    %3796 = vmatpush1.msra.mxu0 %v2518
    %3797 = vmatprep.subr.mxu0 %v2523
    %3798 = vmatpush1.msra.mxu0 %v2522
    %3799 = vmatprep.subr.mxu0 %v2527
    %3800 = vmatpush1.msra.mxu0 %v2526
    %3801 = vmatprep.subr.mxu0 %v2531
    %3802 = vmatpush1.msra.mxu0 %v2530
    %3803 = vmatprep.subr.mxu0 %v2535
    %3804 = vmatpush1.msra.mxu0 %v2534
    %3805 = vmatprep.subr.mxu0 0.0
    %3806 = vmatpush1.msra.mxu0 0.0
    %3807 = vmatprep.subr.mxu0 0.0
    %3808 = vmatpush1.msra.mxu0 0.0
    %3809 = vmatprep.subr.mxu0 0.0
    %3810 = vmatpush1.msra.mxu0 0.0
    %3811 = vmatprep.subr.mxu0 0.0
    %3812 = vmatpush1.msra.mxu0 0.0
    %3813 = vmatprep.subr.mxu0 0.0
    %3814 = vmatpush1.msra.mxu0 0.0
    %3815 = vmatprep.subr.mxu0 0.0
    %3816 = vmatpush1.msra.mxu0 0.0
    %3817 = vmatprep.subr.mxu0 0.0
    %3818 = vmatpush1.msra.mxu0 0.0
    %3819 = vmatprep.subr.mxu0 0.0
    %3820 = vmatpush1.msra.mxu0 0.0
    %3821 = vmatprep.subr.mxu0 0.0
    %3822 = vmatpush1.msra.mxu0 0.0
    %3823 = vmatprep.subr.mxu0 0.0
    %3824 = vmatpush1.msra.mxu0 0.0
    %3825 = vmatprep.subr.mxu0 0.0
    %3826 = vmatpush1.msra.mxu0 0.0
    %3827 = vmatprep.subr.mxu0 0.0
    %3828 = vmatpush1.msra.mxu0 0.0
    %3829 = vmatprep.subr.mxu0 0.0
    %3830 = vmatpush1.msra.mxu0 0.0
    %3831 = vmatprep.subr.mxu0 0.0
    %3832 = vmatpush1.msra.mxu0 0.0
    %3833 = vmatprep.subr.mxu0 0.0
    %3834 = vmatpush1.msra.mxu0 0.0
    %3835 = vmatprep.subr.mxu0 0.0
    %3836 = vmatpush1.msra.mxu0 0.0
    %3837 = vmatprep.mubr.f32.mxu0 0.0
    %3838 = vmatmul.mubr.f32.gmra.mrb[0].mxu0 %v3766
    %v3839 = vpop.f32.mrb[0].mxu0
    %v3840 = vadd.f32 0.0, %v3839
    %v3841 = vpop.f32.mrb[0].mxu0
    %v3842 = vadd.f32 0.0, %v3841
    %3843 = vdwg.mxu0
    %3844 = vmatprep.subr.mxu0 %v2477
    %3845 = vmatpush1.msra.mxu0 %v2476
    %3846 = vmatprep.subr.mxu0 %v2481
    %3847 = vmatpush1.msra.mxu0 %v2480
    %3848 = vmatprep.subr.mxu0 %v2485
    %3849 = vmatpush1.msra.mxu0 %v2484
    %3850 = vmatprep.subr.mxu0 %v2489
    %3851 = vmatpush1.msra.mxu0 %v2488
    %3852 = vmatprep.subr.mxu0 %v2493
    %3853 = vmatpush1.msra.mxu0 %v2492
    %3854 = vmatprep.subr.mxu0 %v2497
    %3855 = vmatpush1.msra.mxu0 %v2496
    %3856 = vmatprep.subr.mxu0 %v2501
    %3857 = vmatpush1.msra.mxu0 %v2500
    %3858 = vmatprep.subr.mxu0 %v2505
    %3859 = vmatpush1.msra.mxu0 %v2504
    %3860 = vmatprep.subr.mxu0 %v2509
    %3861 = vmatpush1.msra.mxu0 %v2508
    %3862 = vmatprep.subr.mxu0 %v2513
    %3863 = vmatpush1.msra.mxu0 %v2512
    %3864 = vmatprep.subr.mxu0 %v2517
    %3865 = vmatpush1.msra.mxu0 %v2516
    %3866 = vmatprep.subr.mxu0 %v2521
    %3867 = vmatpush1.msra.mxu0 %v2520
    %3868 = vmatprep.subr.mxu0 %v2525
    %3869 = vmatpush1.msra.mxu0 %v2524
    %3870 = vmatprep.subr.mxu0 %v2529
    %3871 = vmatpush1.msra.mxu0 %v2528
    %3872 = vmatprep.subr.mxu0 %v2533
    %3873 = vmatpush1.msra.mxu0 %v2532
    %3874 = vmatprep.subr.mxu0 %v2537
    %3875 = vmatpush1.msra.mxu0 %v2536
    %3876 = vmatprep.subr.mxu0 0.0
    %3877 = vmatpush1.msra.mxu0 0.0
    %3878 = vmatprep.subr.mxu0 0.0
    %3879 = vmatpush1.msra.mxu0 0.0
    %3880 = vmatprep.subr.mxu0 0.0
    %3881 = vmatpush1.msra.mxu0 0.0
    %3882 = vmatprep.subr.mxu0 0.0
    %3883 = vmatpush1.msra.mxu0 0.0
    %3884 = vmatprep.subr.mxu0 0.0
    %3885 = vmatpush1.msra.mxu0 0.0
    %3886 = vmatprep.subr.mxu0 0.0
    %3887 = vmatpush1.msra.mxu0 0.0
    %3888 = vmatprep.subr.mxu0 0.0
    %3889 = vmatpush1.msra.mxu0 0.0
    %3890 = vmatprep.subr.mxu0 0.0
    %3891 = vmatpush1.msra.mxu0 0.0
    %3892 = vmatprep.subr.mxu0 0.0
    %3893 = vmatpush1.msra.mxu0 0.0
    %3894 = vmatprep.subr.mxu0 0.0
    %3895 = vmatpush1.msra.mxu0 0.0
    %3896 = vmatprep.subr.mxu0 0.0
    %3897 = vmatpush1.msra.mxu0 0.0
    %3898 = vmatprep.subr.mxu0 0.0
    %3899 = vmatpush1.msra.mxu0 0.0
    %3900 = vmatprep.subr.mxu0 0.0
    %3901 = vmatpush1.msra.mxu0 0.0
    %3902 = vmatprep.subr.mxu0 0.0
    %3903 = vmatpush1.msra.mxu0 0.0
    %3904 = vmatprep.subr.mxu0 0.0
    %3905 = vmatpush1.msra.mxu0 0.0
    %3906 = vmatprep.subr.mxu0 0.0
    %3907 = vmatpush1.msra.mxu0 0.0
    %3908 = vmatprep.mubr.f32.mxu0 0.0
    %3909 = vmatmul.mubr.f32.gmra.mrb[0].mxu0 %v3766
    %v3910 = vpop.f32.mrb[0].mxu0
    %v3911 = vadd.f32 0.0, %v3910
    %v3912 = vpop.f32.mrb[0].mxu0
    %v3913 = vadd.f32 0.0, %v3912
    %3914 = vdwg.mxu0
    %v3915 = vadd.f32 %v3769, %v3840
    %v3916 = vadd.f32 %v3770, %v3842
    %v3917 = vadd.f32 %v3771, %v3911
    %v3918 = vadd.f32 %v3772, %v3913
    %v3919 = vxor.u32 %v3915, 2147483648
    %v3920 = vmul.f32 %v3919, 1.442695
    %v3921 = vpow.pop %v3920
    %v3922 = vadd.f32 %v3921, 1.0
    %v3923 = vrcp.pop %v3922
    %v3924 = vmul.f32 1.0, %v3923
    %v3925 = vxor.u32 %v3916, 2147483648
    %v3926 = vmul.f32 %v3925, 1.442695
    %v3927 = vpow.pop %v3926
    %v3928 = vadd.f32 %v3927, 1.0
    %v3929 = vrcp.pop %v3928
    %v3930 = vmul.f32 1.0, %v3929
    %v3931 = vtanh.pop %v3917
    %v3932 = vxor.u32 %v3918, 2147483648
    %v3933 = vmul.f32 %v3932, 1.442695
    %v3934 = vpow.pop %v3933
    %v3935 = vadd.f32 %v3934, 1.0
    %v3936 = vrcp.pop %v3935
    %v3937 = vmul.f32 1.0, %v3936
    %v3938 = vmul.f32 %v3930, %v3764
    %v3939 = vmul.f32 %v3924, %v3931
    %v3940 = vadd.f32 %v3938, %v3939
    %v3941 = vtanh.pop %v3940
    %v3942 = vmul.f32 %v3937, %v3941
    %s3943 = scalar_lea.vmem [#allocation10], 56
    %3944 = vst [vmem:[%s3943] sm:$0xff] %v3942
    %v3945 = vld [vmem:[%s1925] sm:$0xff]
    %v3946 = vld [vmem:[%s1925 + $0x8] sm:$0xff]
    %v3947 = vld [vmem:[%s1925 + $0x10] sm:$0xff]
    %v3948 = vld [vmem:[%s1925 + $0x18] sm:$0xff]
    %3949 = vmatprep.subr.mxu0 %v2475
    %3950 = vmatpush1.msra.mxu0 %v2474
    %3951 = vmatprep.subr.mxu0 %v2479
    %3952 = vmatpush1.msra.mxu0 %v2478
    %3953 = vmatprep.subr.mxu0 %v2483
    %3954 = vmatpush1.msra.mxu0 %v2482
    %3955 = vmatprep.subr.mxu0 %v2487
    %3956 = vmatpush1.msra.mxu0 %v2486
    %3957 = vmatprep.subr.mxu0 %v2491
    %3958 = vmatpush1.msra.mxu0 %v2490
    %3959 = vmatprep.subr.mxu0 %v2495
    %3960 = vmatpush1.msra.mxu0 %v2494
    %3961 = vmatprep.subr.mxu0 %v2499
    %3962 = vmatpush1.msra.mxu0 %v2498
    %3963 = vmatprep.subr.mxu0 %v2503
    %3964 = vmatpush1.msra.mxu0 %v2502
    %3965 = vmatprep.subr.mxu0 %v2507
    %3966 = vmatpush1.msra.mxu0 %v2506
    %3967 = vmatprep.subr.mxu0 %v2511
    %3968 = vmatpush1.msra.mxu0 %v2510
    %3969 = vmatprep.subr.mxu0 %v2515
    %3970 = vmatpush1.msra.mxu0 %v2514
    %3971 = vmatprep.subr.mxu0 %v2519
    %3972 = vmatpush1.msra.mxu0 %v2518
    %3973 = vmatprep.subr.mxu0 %v2523
    %3974 = vmatpush1.msra.mxu0 %v2522
    %3975 = vmatprep.subr.mxu0 %v2527
    %3976 = vmatpush1.msra.mxu0 %v2526
    %3977 = vmatprep.subr.mxu0 %v2531
    %3978 = vmatpush1.msra.mxu0 %v2530
    %3979 = vmatprep.subr.mxu0 %v2535
    %3980 = vmatpush1.msra.mxu0 %v2534
    %3981 = vmatprep.subr.mxu0 0.0
    %3982 = vmatpush1.msra.mxu0 0.0
    %3983 = vmatprep.subr.mxu0 0.0
    %3984 = vmatpush1.msra.mxu0 0.0
    %3985 = vmatprep.subr.mxu0 0.0
    %3986 = vmatpush1.msra.mxu0 0.0
    %3987 = vmatprep.subr.mxu0 0.0
    %3988 = vmatpush1.msra.mxu0 0.0
    %3989 = vmatprep.subr.mxu0 0.0
    %3990 = vmatpush1.msra.mxu0 0.0
    %3991 = vmatprep.subr.mxu0 0.0
    %3992 = vmatpush1.msra.mxu0 0.0
    %3993 = vmatprep.subr.mxu0 0.0
    %3994 = vmatpush1.msra.mxu0 0.0
    %3995 = vmatprep.subr.mxu0 0.0
    %3996 = vmatpush1.msra.mxu0 0.0
    %3997 = vmatprep.subr.mxu0 0.0
    %3998 = vmatpush1.msra.mxu0 0.0
    %3999 = vmatprep.subr.mxu0 0.0
    %4000 = vmatpush1.msra.mxu0 0.0
    %4001 = vmatprep.subr.mxu0 0.0
    %4002 = vmatpush1.msra.mxu0 0.0
    %4003 = vmatprep.subr.mxu0 0.0
    %4004 = vmatpush1.msra.mxu0 0.0
    %4005 = vmatprep.subr.mxu0 0.0
    %4006 = vmatpush1.msra.mxu0 0.0
    %4007 = vmatprep.subr.mxu0 0.0
    %4008 = vmatpush1.msra.mxu0 0.0
    %4009 = vmatprep.subr.mxu0 0.0
    %4010 = vmatpush1.msra.mxu0 0.0
    %4011 = vmatprep.subr.mxu0 0.0
    %4012 = vmatpush1.msra.mxu0 0.0
    %4013 = vmatprep.mubr.f32.mxu0 0.0
    %4014 = vmatmul.mubr.f32.gmra.mrb[0].mxu0 %v3942
    %v4015 = vpop.f32.mrb[0].mxu0
    %v4016 = vadd.f32 0.0, %v4015
    %v4017 = vpop.f32.mrb[0].mxu0
    %v4018 = vadd.f32 0.0, %v4017
    %4019 = vdwg.mxu0
    %4020 = vmatprep.subr.mxu0 %v2477
    %4021 = vmatpush1.msra.mxu0 %v2476
    %4022 = vmatprep.subr.mxu0 %v2481
    %4023 = vmatpush1.msra.mxu0 %v2480
    %4024 = vmatprep.subr.mxu0 %v2485
    %4025 = vmatpush1.msra.mxu0 %v2484
    %4026 = vmatprep.subr.mxu0 %v2489
    %4027 = vmatpush1.msra.mxu0 %v2488
    %4028 = vmatprep.subr.mxu0 %v2493
    %4029 = vmatpush1.msra.mxu0 %v2492
    %4030 = vmatprep.subr.mxu0 %v2497
    %4031 = vmatpush1.msra.mxu0 %v2496
    %4032 = vmatprep.subr.mxu0 %v2501
    %4033 = vmatpush1.msra.mxu0 %v2500
    %4034 = vmatprep.subr.mxu0 %v2505
    %4035 = vmatpush1.msra.mxu0 %v2504
    %4036 = vmatprep.subr.mxu0 %v2509
    %4037 = vmatpush1.msra.mxu0 %v2508
    %4038 = vmatprep.subr.mxu0 %v2513
    %4039 = vmatpush1.msra.mxu0 %v2512
    %4040 = vmatprep.subr.mxu0 %v2517
    %4041 = vmatpush1.msra.mxu0 %v2516
    %4042 = vmatprep.subr.mxu0 %v2521
    %4043 = vmatpush1.msra.mxu0 %v2520
    %4044 = vmatprep.subr.mxu0 %v2525
    %4045 = vmatpush1.msra.mxu0 %v2524
    %4046 = vmatprep.subr.mxu0 %v2529
    %4047 = vmatpush1.msra.mxu0 %v2528
    %4048 = vmatprep.subr.mxu0 %v2533
    %4049 = vmatpush1.msra.mxu0 %v2532
    %4050 = vmatprep.subr.mxu0 %v2537
    %4051 = vmatpush1.msra.mxu0 %v2536
    %4052 = vmatprep.subr.mxu0 0.0
    %4053 = vmatpush1.msra.mxu0 0.0
    %4054 = vmatprep.subr.mxu0 0.0
    %4055 = vmatpush1.msra.mxu0 0.0
    %4056 = vmatprep.subr.mxu0 0.0
    %4057 = vmatpush1.msra.mxu0 0.0
    %4058 = vmatprep.subr.mxu0 0.0
    %4059 = vmatpush1.msra.mxu0 0.0
    %4060 = vmatprep.subr.mxu0 0.0
    %4061 = vmatpush1.msra.mxu0 0.0
    %4062 = vmatprep.subr.mxu0 0.0
    %4063 = vmatpush1.msra.mxu0 0.0
    %4064 = vmatprep.subr.mxu0 0.0
    %4065 = vmatpush1.msra.mxu0 0.0
    %4066 = vmatprep.subr.mxu0 0.0
    %4067 = vmatpush1.msra.mxu0 0.0
    %4068 = vmatprep.subr.mxu0 0.0
    %4069 = vmatpush1.msra.mxu0 0.0
    %4070 = vmatprep.subr.mxu0 0.0
    %4071 = vmatpush1.msra.mxu0 0.0
    %4072 = vmatprep.subr.mxu0 0.0
    %4073 = vmatpush1.msra.mxu0 0.0
    %4074 = vmatprep.subr.mxu0 0.0
    %4075 = vmatpush1.msra.mxu0 0.0
    %4076 = vmatprep.subr.mxu0 0.0
    %4077 = vmatpush1.msra.mxu0 0.0
    %4078 = vmatprep.subr.mxu0 0.0
    %4079 = vmatpush1.msra.mxu0 0.0
    %4080 = vmatprep.subr.mxu0 0.0
    %4081 = vmatpush1.msra.mxu0 0.0
    %4082 = vmatprep.subr.mxu0 0.0
    %4083 = vmatpush1.msra.mxu0 0.0
    %4084 = vmatprep.mubr.f32.mxu0 0.0
    %4085 = vmatmul.mubr.f32.gmra.mrb[0].mxu0 %v3942
    %v4086 = vpop.f32.mrb[0].mxu0
    %v4087 = vadd.f32 0.0, %v4086
    %v4088 = vpop.f32.mrb[0].mxu0
    %v4089 = vadd.f32 0.0, %v4088
    %4090 = vdwg.mxu0
    %v4091 = vadd.f32 %v3945, %v4016
    %v4092 = vadd.f32 %v3946, %v4018
    %v4093 = vadd.f32 %v3947, %v4087
    %v4094 = vadd.f32 %v3948, %v4089
    %v4095 = vxor.u32 %v4091, 2147483648
    %v4096 = vmul.f32 %v4095, 1.442695
    %v4097 = vpow.pop %v4096
    %v4098 = vadd.f32 %v4097, 1.0
    %v4099 = vrcp.pop %v4098
    %v4100 = vmul.f32 1.0, %v4099
    %v4101 = vxor.u32 %v4092, 2147483648
    %v4102 = vmul.f32 %v4101, 1.442695
    %v4103 = vpow.pop %v4102
    %v4104 = vadd.f32 %v4103, 1.0
    %v4105 = vrcp.pop %v4104
    %v4106 = vmul.f32 1.0, %v4105
    %v4107 = vtanh.pop %v4093
    %v4108 = vxor.u32 %v4094, 2147483648
    %v4109 = vmul.f32 %v4108, 1.442695
    %v4110 = vpow.pop %v4109
    %v4111 = vadd.f32 %v4110, 1.0
    %v4112 = vrcp.pop %v4111
    %v4113 = vmul.f32 1.0, %v4112
    %v4114 = vmul.f32 %v4106, %v3940
    %v4115 = vmul.f32 %v4100, %v4107
    %v4116 = vadd.f32 %v4114, %v4115
    %v4117 = vtanh.pop %v4116
    %v4118 = vmul.f32 %v4113, %v4117
    %s4119 = scalar_lea.vmem [#allocation10], 64
    %4120 = vst [vmem:[%s4119] sm:$0xff] %v4118
    // Predicated region
    $region30: #{tpu_custom_call.1} parent=1 // pred_check
      _
    $region31: #{tpu_custom_call.1} parent=1 // pred_check_branch
      %4122 = sbr.rel (0) target = $region33
    $region32: #{tpu_custom_call.1} parent=1 // pred_region
      %s4124 = ssub.s32 1152, 1152
      %4125 = vsyncadd [#allocation6], %s4124
      %s4126 = sshll.u32 [#allocation10], 4
      %s4127 = int_to_ptr.vmem [resolvable:$true] %s4126
      %4132 = dma.vmem_to_hbm [thread:$0]  %s4127, 1152, %s4, [#allocation6], 128, 128, 8
    $region33: #{tpu_custom_call.1} parent=1 // pred_fallthru
      _
    // Predicated region
    $region34: #{tpu_custom_call.1} parent=1 // pred_check
      _
    $region35: #{tpu_custom_call.1} parent=1 // pred_check_branch
      %4134 = sbr.rel (0) target = $region37
    $region36: #{tpu_custom_call.1} parent=1 // pred_region
      %4135 = dma.done [#allocation6], 1152
    $region37: #{tpu_custom_call.1} parent=1 // pred_fallthru
      _
    %4136 = vsyncpa [#allocation5], 1
    %4137 = vsyncpa [#allocation8], 1
    %4138 = vsyncpa [#allocation6], 1

</llo_original>
